<compile_context>
chip_gen: v7x
topology: tpu7x:2x2x1
jax: 0.10.0
libtpu: 0.0.40
codegen_flags: <defaults>
</compile_context>

<pallas_src>
import functools
import math

import jax
import jax.numpy as jnp
from jax.experimental import pallas as pl
from jax.experimental.pallas import tpu as pltpu

LN_EPS = 1e-5  # torch.nn.LayerNorm default


def _gelu_tanh(x):
    # tanh-approx GELU (routes through the EUP tanh slot).  |exact-erf - tanh| <~ 3e-4
    # and the FFN branch is scaled by gamma_2 before reaching the output.
    c = math.sqrt(2.0 / math.pi)
    return 0.5 * x * (1.0 + jnp.tanh(c * (x + 0.044715 * (x * x * x))))


def _layernorm(z, w, b):
    # two-pass LN: matches the f32 reference and avoids E[x^2]-E[x]^2 cancellation.
    mu = jnp.mean(z, axis=-1, keepdims=True)
    zc = z - mu
    var = jnp.mean(zc * zc, axis=-1, keepdims=True)
    return zc * jax.lax.rsqrt(var + LN_EPS) * w + b


def _block_kernel(bt, n_pat, num_heads,
                  xcls_ref, x_ref,
                  ln1w_ref, ln1b_ref,
                  wq_ref, wkv_ref, wproj_ref, bproj_ref,
                  g1_ref,
                  ln2w_ref, ln2b_ref,
                  w1_ref, b1_ref, w2_ref, b2_ref,
                  g2_ref,
                  sel_ref, selt_ref,
                  out_ref):
    C = x_ref.shape[2]
    M = bt * n_pat
    bf16 = jnp.bfloat16
    f32 = jnp.float32

    x_cls3 = xcls_ref[...].astype(f32)               # (Bt, 1, C) class tokens
    x_cls = x_cls3.reshape(bt, C)                    # (Bt, C)
    x_flat = x_ref[...].astype(f32).reshape(M, C)    # (Bt*N, C) patch tokens

    # norm1(cat([x_cls, x])) is row-wise -> normalize the two pieces separately.
    ln1w = ln1w_ref[...]
    ln1b = ln1b_ref[...]
    u0 = _layernorm(x_cls, ln1w, ln1b)               # (Bt, C)  queries (cls tokens)
    up = _layernorm(x_flat, ln1w, ln1b)              # (M, C)   keys / values (patches)

    # --- Learned_Aggregation_Layer (qkv_bias=False) ---------------------------
    # q scale is folded into Wq on the host; K and V share one fused matmul.
    q = jnp.dot(u0.astype(bf16), wq_ref[...], preferred_element_type=f32)    # (Bt, C)
    kv = jnp.dot(up.astype(bf16), wkv_ref[...], preferred_element_type=f32)  # (M, 2C)
    k = kv[:, :C]                                     # clean 128-lane slice (C % 128 == 0)
    v = kv[:, C:]

    # broadcast each batch element's q over its N patch rows on the VPU (sublane
    # broadcast) — replaces the old rep one-hot matmul (K=bt) from the prior version.
    qk = (k.reshape(bt, n_pat, C) * q.reshape(bt, 1, C)).reshape(M, C)

    # per-head scores[m, h] = sum_{d in head h} q[b(m), d] * k[m, d]
    scores = jnp.dot(qk.astype(bf16), sel_ref[...],
                     preferred_element_type=f32)                             # (M, H)

    # segment softmax over the N patches of each batch element (exact normalizer:
    # the divide acts on a tiny (Bt, 1, H) slab, negligible next to the exp).
    s3 = scores.reshape(bt, n_pat, num_heads)
    m_b = jnp.max(s3, axis=1, keepdims=True)
    e = jnp.exp(s3 - m_b)
    denom = jnp.sum(e, axis=1, keepdims=True)
    attn = (e * (1.0 / denom)).reshape(M, num_heads)                         # (M, H)

    # broadcast each head's weight over its D channels; weight V elementwise
    attn_full = jnp.dot(attn.astype(bf16), selt_ref[...],
                        preferred_element_type=f32)                          # (M, C)
    weighted = attn_full * v
    attn_out = jnp.dot(weighted.astype(bf16), wproj_ref[...],
                       preferred_element_type=f32) + bproj_ref[...]          # (M, C)

    # x_cls = x_cls + gamma_1 * attn(...)   (drop_path = Identity at rate 0);
    # the (Bt, 1, C) class token broadcasts over the N patches.
    xc1_3 = x_cls3 + g1_ref[...] * attn_out.reshape(bt, n_pat, C)            # (Bt, N, C)
    xc1 = xc1_3.reshape(M, C)

    # --- FFN branch: LN2 -> fc1 -> GELU -> fc2, scaled by gamma_2 -------------
    h2 = _layernorm(xc1, ln2w_ref[...], ln2b_ref[...])
    hid = _gelu_tanh(jnp.dot(h2.astype(bf16), w1_ref[...],
                             preferred_element_type=f32) + b1_ref[...])
    ffn = jnp.dot(hid.astype(bf16), w2_ref[...],
                  preferred_element_type=f32) + b2_ref[...]

    out_ref[...] = (xc1 + g2_ref[...] * ffn).reshape(bt, n_pat, C).astype(out_ref.dtype)


def _estimate_vmem_bytes(bt, n_pat, C, hidden, num_heads, io_bytes):
    """Rough per-grid-step VMEM footprint (tiles + resident weights + live f32 slabs)."""
    M = bt * n_pat
    tiles = 2 * (M * C + bt * C) * io_bytes + 2 * M * C * io_bytes   # dbl-buffered x/x_cls + out
    weights = (4 * C * C + 2 * C * hidden + 2 * num_heads * C) * 2   # bf16, single-buffered
    vecs = (10 * C + 2 * hidden) * 4
    live = M * (8 * C + 2 * hidden) * 4                              # f32 intermediates
    return tiles + weights + vecs + live


def _pick_block_batch(batch, n_pat, C, hidden, num_heads, io_bytes,
                      target_m=512, min_grid=2, vmem_budget=48 << 20):
    """Largest batch tile that (a) keeps >= min_grid grid steps (v7x: 2 TCs need >= 2),
    (b) fits a conservative VMEM budget, (c) prefers the smallest bt with bt*N >= target_m
    (MXU row fill) so we don't over-grow tiles past the roofline knee."""
    cands = [bt for bt in range(batch, 0, -1)
             if batch % bt == 0 and batch // bt >= min_grid] or [1]
    fits = [bt for bt in cands
            if _estimate_vmem_bytes(bt, n_pat, C, hidden, num_heads, io_bytes) <= vmem_budget]
    cands = fits or [min(cands)]
    reaching = [bt for bt in cands if bt * n_pat >= target_m]
    return min(reaching) if reaching else max(cands)


def layer_scale_block_forward(x, x_cls, params, num_heads,
                              target_m=512, min_grid=2,
                              vmem_budget_bytes=48 << 20, x_buffers=2):
    B, N, C = x.shape
    hidden = params["w1_t"].shape[1]
    D = C // num_heads
    scale = D ** (-0.5)          # qk_scale=None -> head_dim ** -0.5
    io_bytes = jnp.dtype(x.dtype).itemsize

    bt = _pick_block_batch(B, N, C, hidden, num_heads, io_bytes,
                           target_m=target_m, min_grid=min_grid,
                           vmem_budget=vmem_budget_bytes)
    bf16 = jnp.bfloat16

    # host-side weight prep: fold q scale, fuse K|V, cast matmul weights to bf16
    wq = (params["wq_t"] * scale).astype(bf16)                                    # (C, C)
    wkv = jnp.concatenate([params["wk_t"], params["wv_t"]], axis=1).astype(bf16)  # (C, 2C)
    wproj = params["wproj_t"].astype(bf16)
    w1 = params["w1_t"].astype(bf16)
    w2 = params["w2_t"].astype(bf16)

    # constant one-hot channel<->head selectors (0/1 exact in bf16)
    head_of_ch = jnp.arange(C, dtype=jnp.int32) // D
    sel = (head_of_ch[:, None] == jnp.arange(num_heads)[None, :]).astype(bf16)    # (C, H)
    sel_t = jnp.transpose(sel)                                                    # (H, C)

    kernel = functools.partial(_block_kernel, bt, N, num_heads)

    def wspec(shape):
        # constant across the grid -> single-buffer to halve resident weight VMEM
        return pl.BlockSpec(shape, lambda b: (0,) * len(shape),
                            pipeline_mode=pl.Buffered(1))

    # bump x_buffers to 3 if xprof shows the x-tile DMA exposed after raising bt
    x_kwargs = {} if x_buffers == 2 else {"pipeline_mode": pl.Buffered(x_buffers)}

    in_specs = [
        pl.BlockSpec((bt, 1, C), lambda b: (b, 0, 0)),              # x_cls
        pl.BlockSpec((bt, N, C), lambda b: (b, 0, 0), **x_kwargs),  # x
        wspec((1, C)), wspec((1, C)),                               # ln1 w, b
        wspec((C, C)),                                              # Wq^T (pre-scaled)
        wspec((C, 2 * C)),                                          # [Wk^T | Wv^T] fused
        wspec((C, C)), wspec((1, C)),                               # Wproj^T, bproj
        wspec((1, C)),                                              # gamma_1
        wspec((1, C)), wspec((1, C)),                               # ln2 w, b
        wspec((C, hidden)), wspec((1, hidden)),                     # W1^T, b1
        wspec((hidden, C)), wspec((1, C)),                          # W2^T, b2
        wspec((1, C)),                                              # gamma_2
        wspec((C, num_heads)), wspec((num_heads, C)),               # sel, sel_t
    ]

    est = _estimate_vmem_bytes(bt, N, C, hidden, num_heads, io_bytes)
    vmem_limit = min(max(int(est * 1.5) + (4 << 20), 16 << 20), 96 << 20)

    fn = pl.pallas_call(
        kernel,
        out_shape=jax.ShapeDtypeStruct((B, N, C), x.dtype),
        grid_spec=pltpu.PrefetchScalarGridSpec(
            num_scalar_prefetch=0,
            grid=(B // bt,),
            in_specs=in_specs,
            out_specs=pl.BlockSpec((bt, N, C), lambda b: (b, 0, 0)),
        ),
        compiler_params=pltpu.CompilerParams(
            dimension_semantics=("parallel",),
            vmem_limit_bytes=vmem_limit,
        ),
    )
    return fn(x_cls, x,
              params["ln1_w"], params["ln1_b"],
              wq, wkv, wproj, params["bproj"],
              params["gamma1"],
              params["ln2_w"], params["ln2_b"],
              w1, params["b1"], w2, params["b2"],
              params["gamma2"],
              sel, sel_t)


def reference_forward(x, x_cls, p, num_heads):
    """Pure-JAX f32 mirror of the PyTorch forward (eval mode: all dropouts = identity)."""
    B, N, C = x.shape
    D = C // num_heads
    scale = D ** (-0.5)

    def ln(z, w, b):
        mu = z.mean(-1, keepdims=True)
        var = ((z - mu) ** 2).mean(-1, keepdims=True)
        return (z - mu) / jnp.sqrt(var + LN_EPS) * w + b

    u = jnp.concatenate([x_cls, x], axis=1)                      # (B, N+1, C)
    un = ln(u, p["ln1_w"][0], p["ln1_b"][0])

    q = un[:, 0] @ p["wq_t"]                                     # (B, C)
    k = un[:, 1:] @ p["wk_t"]                                    # (B, N, C)
    v = un[:, 1:] @ p["wv_t"]
    q = q.reshape(B, 1, num_heads, D).transpose(0, 2, 1, 3) * scale
    k = k.reshape(B, N, num_heads, D).transpose(0, 2, 1, 3)
    v = v.reshape(B, N, num_heads, D).transpose(0, 2, 1, 3)
    attn = jnp.einsum("bhqd,bhkd->bhqk", q, k)                   # (B, H, 1, N)
    attn = jax.nn.softmax(attn, axis=-1)
    attn = attn.transpose(0, 1, 3, 2)                            # (B, H, N, 1)
    out = (attn * v).transpose(0, 2, 1, 3).reshape(B, N, C)      # elementwise weighting
    out = out @ p["wproj_t"] + p["bproj"][0]

    xc1 = x_cls + p["gamma1"][0] * out
    h2 = ln(xc1, p["ln2_w"][0], p["ln2_b"][0])
    hid = jax.nn.gelu(h2 @ p["w1_t"] + p["b1"][0], approximate=False)
    ffn = hid @ p["w2_t"] + p["b2"][0]
    return xc1 + p["gamma2"][0] * ffn


def make_params(key, dim, hidden, init_values=1e-4):
    ks = jax.random.split(key, 10)
    n = lambda k, s, sc=0.02: sc * jax.random.normal(k, s, jnp.float32)
    return {
        "ln1_w": jnp.ones((1, dim), jnp.float32) + n(ks[0], (1, dim), 0.05),
        "ln1_b": n(ks[1], (1, dim), 0.05),
        "wq_t": n(ks[2], (dim, dim)),     # stored as W^T (in, out)
        "wk_t": n(ks[3], (dim, dim)),
        "wv_t": n(ks[4], (dim, dim)),
        "wproj_t": n(ks[5], (dim, dim)),
        "bproj": n(ks[6], (1, dim), 0.05),
        "gamma1": init_values * jnp.ones((1, dim), jnp.float32),
        "ln2_w": jnp.ones((1, dim), jnp.float32) + n(ks[7], (1, dim), 0.05),
        "ln2_b": n(ks[8], (1, dim), 0.05),
        "w1_t": n(ks[9], (dim, hidden)),
        "b1": jnp.zeros((1, hidden), jnp.float32),
        "w2_t": n(jax.random.fold_in(key, 99), (hidden, dim)),
        "b2": jnp.zeros((1, dim), jnp.float32),
        "gamma2": init_values * jnp.ones((1, dim), jnp.float32),
    }


if __name__ == "__main__":
    # C / hidden multiples of 128 (lane-dense), N multiple of 8 (free flatten reshape).
    # With B=8, N=64 the tiler picks bt=4 -> M = bt*N = 256 MXU rows and grid = 2
    # steps (both v7x TensorCores busy under "parallel" semantics).
    B, N, C, H = 8, 64, 128, 4        # batch, num_patches, dim, num_heads
    hidden = int(C * 4.0)             # mlp_ratio = 4.0

    key = jax.random.PRNGKey(0)
    kx, kc, kp = jax.random.split(key, 3)
    x_f32 = jax.random.normal(kx, (B, N, C), jnp.float32)        # patch tokens
    xcls_f32 = jax.random.normal(kc, (B, 1, C), jnp.float32)     # class token
    # module default init_values=1e-4 would make the attn/FFN branches numerically
    # invisible in the check; 0.1 keeps the test sensitive to their correctness.
    params = make_params(kp, C, hidden, init_values=0.1)

    # bf16 activations at the pallas_call boundary (kernel is memory-bound on all TPU
    # generations -> ~halves HBM traffic).  The reference is fed the identical
    # bf16-rounded inputs so the check isolates kernel math + the bf16 output store.
    x = x_f32.astype(jnp.bfloat16)
    x_cls = xcls_f32.astype(jnp.bfloat16)

    out = layer_scale_block_forward(x, x_cls, params, H)
    out = jax.block_until_ready(out)

    with jax.default_matmul_precision("highest"):
        ref = reference_forward(x.astype(jnp.float32), x_cls.astype(jnp.float32), params, H)

    out_f32 = out.astype(jnp.float32)
    max_err = float(jnp.max(jnp.abs(out_f32 - ref)))
    mean_err = float(jnp.mean(jnp.abs(out_f32 - ref)))
    assert out.shape == (B, N, C), out.shape
    # Error budget: bf16 output rounding (half-ulp of |out| ~< 4 => ~4e-3 max, ~2e-3
    # relative mean) dominates; bf16 weights + tanh-GELU internal path adds ~1e-3.
    assert max_err < 2e-2, f"max abs err {max_err}"
    assert mean_err < 4e-3, f"mean abs err {mean_err}"
    print("KERNEL_OK")
</pallas_src>

<mosaic_0001>
module attributes {stable_mosaic.version = 11 : i64} {
  func.func @_block_kernel(%arg0: i32, %arg1: memref<4x1x128xbf16, #tpu.memory_space<vmem>>, %arg2: memref<4x64x128xbf16, #tpu.memory_space<vmem>>, %arg3: memref<1x128xf32, #tpu.memory_space<vmem>>, %arg4: memref<1x128xf32, #tpu.memory_space<vmem>>, %arg5: memref<128x128xbf16, #tpu.memory_space<vmem>>, %arg6: memref<128x256xbf16, #tpu.memory_space<vmem>>, %arg7: memref<128x128xbf16, #tpu.memory_space<vmem>>, %arg8: memref<1x128xf32, #tpu.memory_space<vmem>>, %arg9: memref<1x128xf32, #tpu.memory_space<vmem>>, %arg10: memref<1x128xf32, #tpu.memory_space<vmem>>, %arg11: memref<1x128xf32, #tpu.memory_space<vmem>>, %arg12: memref<128x512xbf16, #tpu.memory_space<vmem>>, %arg13: memref<1x512xf32, #tpu.memory_space<vmem>>, %arg14: memref<512x128xbf16, #tpu.memory_space<vmem>>, %arg15: memref<1x128xf32, #tpu.memory_space<vmem>>, %arg16: memref<1x128xf32, #tpu.memory_space<vmem>>, %arg17: memref<128x4xbf16, #tpu.memory_space<vmem>>, %arg18: memref<4x128xbf16, #tpu.memory_space<vmem>>, %arg19: memref<4x64x128xbf16, #tpu.memory_space<vmem>>) attributes {dimension_semantics = [#tpu.dimension_semantics<parallel>], iteration_bounds = array<i64: 2>, scalar_prefetch = 0 : i64, scratch_operands = 0 : i64, tpu.core_type = #tpu.core_type<tc>, window_params = [{transform_indices = @transform_0, window_bounds = array<i64: 4, 1, 128>}, {transform_indices = @transform_1, window_bounds = array<i64: 4, 64, 128>}, {pipeline_mode = #tpu.pipeline_mode<synchronous>, transform_indices = @transform_2, window_bounds = array<i64: 1, 128>}, {pipeline_mode = #tpu.pipeline_mode<synchronous>, transform_indices = @transform_3, window_bounds = array<i64: 1, 128>}, {pipeline_mode = #tpu.pipeline_mode<synchronous>, transform_indices = @transform_4, window_bounds = array<i64: 128, 128>}, {pipeline_mode = #tpu.pipeline_mode<synchronous>, transform_indices = @transform_5, window_bounds = array<i64: 128, 256>}, {pipeline_mode = #tpu.pipeline_mode<synchronous>, transform_indices = @transform_6, window_bounds = array<i64: 128, 128>}, {pipeline_mode = #tpu.pipeline_mode<synchronous>, transform_indices = @transform_7, window_bounds = array<i64: 1, 128>}, {pipeline_mode = #tpu.pipeline_mode<synchronous>, transform_indices = @transform_8, window_bounds = array<i64: 1, 128>}, {pipeline_mode = #tpu.pipeline_mode<synchronous>, transform_indices = @transform_9, window_bounds = array<i64: 1, 128>}, {pipeline_mode = #tpu.pipeline_mode<synchronous>, transform_indices = @transform_10, window_bounds = array<i64: 1, 128>}, {pipeline_mode = #tpu.pipeline_mode<synchronous>, transform_indices = @transform_11, window_bounds = array<i64: 128, 512>}, {pipeline_mode = #tpu.pipeline_mode<synchronous>, transform_indices = @transform_12, window_bounds = array<i64: 1, 512>}, {pipeline_mode = #tpu.pipeline_mode<synchronous>, transform_indices = @transform_13, window_bounds = array<i64: 512, 128>}, {pipeline_mode = #tpu.pipeline_mode<synchronous>, transform_indices = @transform_14, window_bounds = array<i64: 1, 128>}, {pipeline_mode = #tpu.pipeline_mode<synchronous>, transform_indices = @transform_15, window_bounds = array<i64: 1, 128>}, {pipeline_mode = #tpu.pipeline_mode<synchronous>, transform_indices = @transform_16, window_bounds = array<i64: 128, 4>}, {pipeline_mode = #tpu.pipeline_mode<synchronous>, transform_indices = @transform_17, window_bounds = array<i64: 4, 128>}, {transform_indices = @transform_18, window_bounds = array<i64: 4, 64, 128>}]} {
    %c0 = arith.constant 0 : index
    %c0_0 = arith.constant 0 : index
    %c0_1 = arith.constant 0 : index
    %0 = vector.load %arg1[%c0, %c0_0, %c0_1] : memref<4x1x128xbf16, #tpu.memory_space<vmem>>, vector<4x1x128xbf16>
    %1 = arith.extf %0 : vector<4x1x128xbf16> to vector<4x1x128xf32>
    %2 = vector.shape_cast %1 : vector<4x1x128xf32> to vector<4x128xf32>
    %c0_2 = arith.constant 0 : index
    %c0_3 = arith.constant 0 : index
    %c0_4 = arith.constant 0 : index
    %3 = vector.load %arg2[%c0_2, %c0_3, %c0_4] : memref<4x64x128xbf16, #tpu.memory_space<vmem>>, vector<4x64x128xbf16>
    %4 = arith.extf %3 : vector<4x64x128xbf16> to vector<4x64x128xf32>
    %5 = vector.shape_cast %4 : vector<4x64x128xf32> to vector<256x128xf32>
    %c0_5 = arith.constant 0 : index
    %c0_6 = arith.constant 0 : index
    %6 = vector.load %arg3[%c0_5, %c0_6] : memref<1x128xf32, #tpu.memory_space<vmem>>, vector<1x128xf32>
    %c0_7 = arith.constant 0 : index
    %c0_8 = arith.constant 0 : index
    %7 = vector.load %arg4[%c0_7, %c0_8] : memref<1x128xf32, #tpu.memory_space<vmem>>, vector<1x128xf32>
    %cst = arith.constant dense<0.000000e+00> : vector<4xf32>
    %8 = vector.multi_reduction <add>, %2, %cst [1] : vector<4x128xf32> to vector<4xf32>
    %9 = vector.shape_cast %8 : vector<4xf32> to vector<4x1xf32>
    %cst_9 = arith.constant 1.280000e+02 : f32
    %10 = vector.broadcast %cst_9 : f32 to vector<4x1xf32>
    %11 = arith.divf %9, %10 : vector<4x1xf32>
    %12 = vector.broadcast %11 : vector<4x1xf32> to vector<4x128xf32>
    %13 = arith.subf %2, %12 : vector<4x128xf32>
    %14 = arith.mulf %13, %13 : vector<4x128xf32>
    %cst_10 = arith.constant dense<0.000000e+00> : vector<4xf32>
    %15 = vector.multi_reduction <add>, %14, %cst_10 [1] : vector<4x128xf32> to vector<4xf32>
    %16 = vector.shape_cast %15 : vector<4xf32> to vector<4x1xf32>
    %cst_11 = arith.constant 1.280000e+02 : f32
    %17 = vector.broadcast %cst_11 : f32 to vector<4x1xf32>
    %18 = arith.divf %16, %17 : vector<4x1xf32>
    %cst_12 = arith.constant 9.99999974E-6 : f32
    %19 = vector.broadcast %cst_12 : f32 to vector<4x1xf32>
    %20 = arith.addf %18, %19 : vector<4x1xf32>
    %21 = math.rsqrt %20 : vector<4x1xf32>
    %22 = vector.broadcast %21 : vector<4x1xf32> to vector<4x128xf32>
    %23 = arith.mulf %13, %22 : vector<4x128xf32>
    %24 = vector.broadcast %6 : vector<1x128xf32> to vector<4x128xf32>
    %25 = arith.mulf %23, %24 : vector<4x128xf32>
    %26 = vector.broadcast %7 : vector<1x128xf32> to vector<4x128xf32>
    %27 = arith.addf %25, %26 : vector<4x128xf32>
    %cst_13 = arith.constant dense<0.000000e+00> : vector<256xf32>
    %28 = vector.multi_reduction <add>, %5, %cst_13 [1] : vector<256x128xf32> to vector<256xf32>
    %29 = vector.shape_cast %28 : vector<256xf32> to vector<256x1xf32>
    %cst_14 = arith.constant 1.280000e+02 : f32
    %30 = vector.broadcast %cst_14 : f32 to vector<256x1xf32>
    %31 = arith.divf %29, %30 : vector<256x1xf32>
    %32 = vector.broadcast %31 : vector<256x1xf32> to vector<256x128xf32>
    %33 = arith.subf %5, %32 : vector<256x128xf32>
    %34 = arith.mulf %33, %33 : vector<256x128xf32>
    %cst_15 = arith.constant dense<0.000000e+00> : vector<256xf32>
    %35 = vector.multi_reduction <add>, %34, %cst_15 [1] : vector<256x128xf32> to vector<256xf32>
    %36 = vector.shape_cast %35 : vector<256xf32> to vector<256x1xf32>
    %cst_16 = arith.constant 1.280000e+02 : f32
    %37 = vector.broadcast %cst_16 : f32 to vector<256x1xf32>
    %38 = arith.divf %36, %37 : vector<256x1xf32>
    %cst_17 = arith.constant 9.99999974E-6 : f32
    %39 = vector.broadcast %cst_17 : f32 to vector<256x1xf32>
    %40 = arith.addf %38, %39 : vector<256x1xf32>
    %41 = math.rsqrt %40 : vector<256x1xf32>
    %42 = vector.broadcast %41 : vector<256x1xf32> to vector<256x128xf32>
    %43 = arith.mulf %33, %42 : vector<256x128xf32>
    %44 = vector.broadcast %6 : vector<1x128xf32> to vector<256x128xf32>
    %45 = arith.mulf %43, %44 : vector<256x128xf32>
    %46 = vector.broadcast %7 : vector<1x128xf32> to vector<256x128xf32>
    %47 = arith.addf %45, %46 : vector<256x128xf32>
    %48 = arith.truncf %27 : vector<4x128xf32> to vector<4x128xbf16>
    %c0_18 = arith.constant 0 : index
    %c0_19 = arith.constant 0 : index
    %49 = vector.load %arg5[%c0_18, %c0_19] : memref<128x128xbf16, #tpu.memory_space<vmem>>, vector<128x128xbf16>
    %cst_20 = arith.constant dense<0.000000e+00> : vector<4x128xf32>
    %50 = tpu.matmul %48, %49, %cst_20 {dimension_numbers = #tpu.dot_dimension_numbers<[1], [0], [0], [1], [0, 0, 1, 1], [], []>} : vector<4x128xbf16>, vector<128x128xbf16>, vector<4x128xf32> -> vector<4x128xf32>
    %51 = arith.truncf %47 : vector<256x128xf32> to vector<256x128xbf16>
    %c0_21 = arith.constant 0 : index
    %c0_22 = arith.constant 0 : index
    %52 = vector.load %arg6[%c0_21, %c0_22] : memref<128x256xbf16, #tpu.memory_space<vmem>>, vector<128x256xbf16>
    %cst_23 = arith.constant dense<0.000000e+00> : vector<256x256xf32>
    %53 = tpu.matmul %51, %52, %cst_23 {dimension_numbers = #tpu.dot_dimension_numbers<[1], [0], [0], [1], [0, 0, 1, 1], [], []>} : vector<256x128xbf16>, vector<128x256xbf16>, vector<256x256xf32> -> vector<256x256xf32>
    %54 = vector.extract_strided_slice %53 {offsets = [0, 0], sizes = [256, 128], strides = [1, 1]} : vector<256x256xf32> to vector<256x128xf32>
    %55 = vector.extract_strided_slice %53 {offsets = [0, 128], sizes = [256, 128], strides = [1, 1]} : vector<256x256xf32> to vector<256x128xf32>
    %56 = vector.shape_cast %54 : vector<256x128xf32> to vector<4x64x128xf32>
    %57 = vector.shape_cast %50 : vector<4x128xf32> to vector<4x1x128xf32>
    %58 = vector.broadcast %57 : vector<4x1x128xf32> to vector<4x64x128xf32>
    %59 = arith.mulf %56, %58 : vector<4x64x128xf32>
    %60 = vector.shape_cast %59 : vector<4x64x128xf32> to vector<256x128xf32>
    %61 = arith.truncf %60 : vector<256x128xf32> to vector<256x128xbf16>
    %c0_24 = arith.constant 0 : index
    %c0_25 = arith.constant 0 : index
    %62 = vector.load %arg17[%c0_24, %c0_25] : memref<128x4xbf16, #tpu.memory_space<vmem>>, vector<128x4xbf16>
    %cst_26 = arith.constant dense<0.000000e+00> : vector<256x4xf32>
    %63 = tpu.matmul %61, %62, %cst_26 {dimension_numbers = #tpu.dot_dimension_numbers<[1], [0], [0], [1], [0, 0, 1, 1], [], []>} : vector<256x128xbf16>, vector<128x4xbf16>, vector<256x4xf32> -> vector<256x4xf32>
    %64 = vector.shape_cast %63 : vector<256x4xf32> to vector<4x64x4xf32>
    %cst_27 = arith.constant dense<0xFF800000> : vector<4x4xf32>
    %65 = vector.multi_reduction <maximumf>, %64, %cst_27 [1] : vector<4x64x4xf32> to vector<4x4xf32>
    %66 = vector.shape_cast %65 : vector<4x4xf32> to vector<4x1x4xf32>
    %67 = vector.broadcast %66 : vector<4x1x4xf32> to vector<4x64x4xf32>
    %68 = arith.subf %64, %67 : vector<4x64x4xf32>
    %69 = math.exp %68 : vector<4x64x4xf32>
    %cst_28 = arith.constant dense<0.000000e+00> : vector<4x4xf32>
    %70 = vector.multi_reduction <add>, %69, %cst_28 [1] : vector<4x64x4xf32> to vector<4x4xf32>
    %71 = vector.shape_cast %70 : vector<4x4xf32> to vector<4x1x4xf32>
    %cst_29 = arith.constant 1.000000e+00 : f32
    %72 = vector.broadcast %cst_29 : f32 to vector<4x1x4xf32>
    %73 = arith.divf %72, %71 : vector<4x1x4xf32>
    %74 = vector.broadcast %73 : vector<4x1x4xf32> to vector<4x64x4xf32>
    %75 = arith.mulf %69, %74 : vector<4x64x4xf32>
    %76 = vector.shape_cast %75 : vector<4x64x4xf32> to vector<256x4xf32>
    %77 = arith.truncf %76 : vector<256x4xf32> to vector<256x4xbf16>
    %c0_30 = arith.constant 0 : index
    %c0_31 = arith.constant 0 : index
    %78 = vector.load %arg18[%c0_30, %c0_31] : memref<4x128xbf16, #tpu.memory_space<vmem>>, vector<4x128xbf16>
    %cst_32 = arith.constant dense<0.000000e+00> : vector<256x128xf32>
    %79 = tpu.matmul %77, %78, %cst_32 {dimension_numbers = #tpu.dot_dimension_numbers<[1], [0], [0], [1], [0, 0, 1, 1], [], []>} : vector<256x4xbf16>, vector<4x128xbf16>, vector<256x128xf32> -> vector<256x128xf32>
    %80 = arith.mulf %79, %55 : vector<256x128xf32>
    %81 = arith.truncf %80 : vector<256x128xf32> to vector<256x128xbf16>
    %c0_33 = arith.constant 0 : index
    %c0_34 = arith.constant 0 : index
    %82 = vector.load %arg7[%c0_33, %c0_34] : memref<128x128xbf16, #tpu.memory_space<vmem>>, vector<128x128xbf16>
    %cst_35 = arith.constant dense<0.000000e+00> : vector<256x128xf32>
    %83 = tpu.matmul %81, %82, %cst_35 {dimension_numbers = #tpu.dot_dimension_numbers<[1], [0], [0], [1], [0, 0, 1, 1], [], []>} : vector<256x128xbf16>, vector<128x128xbf16>, vector<256x128xf32> -> vector<256x128xf32>
    %c0_36 = arith.constant 0 : index
    %c0_37 = arith.constant 0 : index
    %84 = vector.load %arg8[%c0_36, %c0_37] : memref<1x128xf32, #tpu.memory_space<vmem>>, vector<1x128xf32>
    %85 = vector.broadcast %84 : vector<1x128xf32> to vector<256x128xf32>
    %86 = arith.addf %83, %85 : vector<256x128xf32>
    %c0_38 = arith.constant 0 : index
    %c0_39 = arith.constant 0 : index
    %87 = vector.load %arg9[%c0_38, %c0_39] : memref<1x128xf32, #tpu.memory_space<vmem>>, vector<1x128xf32>
    %88 = vector.shape_cast %86 : vector<256x128xf32> to vector<4x64x128xf32>
    %89 = vector.shape_cast %87 : vector<1x128xf32> to vector<1x1x128xf32>
    %90 = vector.broadcast %89 : vector<1x1x128xf32> to vector<4x64x128xf32>
    %91 = arith.mulf %90, %88 : vector<4x64x128xf32>
    %92 = vector.broadcast %1 : vector<4x1x128xf32> to vector<4x64x128xf32>
    %93 = arith.addf %92, %91 : vector<4x64x128xf32>
    %94 = vector.shape_cast %93 : vector<4x64x128xf32> to vector<256x128xf32>
    %c0_40 = arith.constant 0 : index
    %c0_41 = arith.constant 0 : index
    %95 = vector.load %arg10[%c0_40, %c0_41] : memref<1x128xf32, #tpu.memory_space<vmem>>, vector<1x128xf32>
    %c0_42 = arith.constant 0 : index
    %c0_43 = arith.constant 0 : index
    %96 = vector.load %arg11[%c0_42, %c0_43] : memref<1x128xf32, #tpu.memory_space<vmem>>, vector<1x128xf32>
    %cst_44 = arith.constant dense<0.000000e+00> : vector<256xf32>
    %97 = vector.multi_reduction <add>, %94, %cst_44 [1] : vector<256x128xf32> to vector<256xf32>
    %98 = vector.shape_cast %97 : vector<256xf32> to vector<256x1xf32>
    %cst_45 = arith.constant 1.280000e+02 : f32
    %99 = vector.broadcast %cst_45 : f32 to vector<256x1xf32>
    %100 = arith.divf %98, %99 : vector<256x1xf32>
    %101 = vector.broadcast %100 : vector<256x1xf32> to vector<256x128xf32>
    %102 = arith.subf %94, %101 : vector<256x128xf32>
    %103 = arith.mulf %102, %102 : vector<256x128xf32>
    %cst_46 = arith.constant dense<0.000000e+00> : vector<256xf32>
    %104 = vector.multi_reduction <add>, %103, %cst_46 [1] : vector<256x128xf32> to vector<256xf32>
    %105 = vector.shape_cast %104 : vector<256xf32> to vector<256x1xf32>
    %cst_47 = arith.constant 1.280000e+02 : f32
    %106 = vector.broadcast %cst_47 : f32 to vector<256x1xf32>
    %107 = arith.divf %105, %106 : vector<256x1xf32>
    %cst_48 = arith.constant 9.99999974E-6 : f32
    %108 = vector.broadcast %cst_48 : f32 to vector<256x1xf32>
    %109 = arith.addf %107, %108 : vector<256x1xf32>
    %110 = math.rsqrt %109 : vector<256x1xf32>
    %111 = vector.broadcast %110 : vector<256x1xf32> to vector<256x128xf32>
    %112 = arith.mulf %102, %111 : vector<256x128xf32>
    %113 = vector.broadcast %95 : vector<1x128xf32> to vector<256x128xf32>
    %114 = arith.mulf %112, %113 : vector<256x128xf32>
    %115 = vector.broadcast %96 : vector<1x128xf32> to vector<256x128xf32>
    %116 = arith.addf %114, %115 : vector<256x128xf32>
    %117 = arith.truncf %116 : vector<256x128xf32> to vector<256x128xbf16>
    %c0_49 = arith.constant 0 : index
    %c0_50 = arith.constant 0 : index
    %118 = vector.load %arg12[%c0_49, %c0_50] : memref<128x512xbf16, #tpu.memory_space<vmem>>, vector<128x512xbf16>
    %cst_51 = arith.constant dense<0.000000e+00> : vector<256x512xf32>
    %119 = tpu.matmul %117, %118, %cst_51 {dimension_numbers = #tpu.dot_dimension_numbers<[1], [0], [0], [1], [0, 0, 1, 1], [], []>} : vector<256x128xbf16>, vector<128x512xbf16>, vector<256x512xf32> -> vector<256x512xf32>
    %c0_52 = arith.constant 0 : index
    %c0_53 = arith.constant 0 : index
    %120 = vector.load %arg13[%c0_52, %c0_53] : memref<1x512xf32, #tpu.memory_space<vmem>>, vector<1x512xf32>
    %121 = vector.broadcast %120 : vector<1x512xf32> to vector<256x512xf32>
    %122 = arith.addf %119, %121 : vector<256x512xf32>
    %cst_54 = arith.constant 5.000000e-01 : f32
    %123 = vector.broadcast %cst_54 : f32 to vector<256x512xf32>
    %124 = arith.mulf %123, %122 : vector<256x512xf32>
    %125 = arith.mulf %122, %122 : vector<256x512xf32>
    %126 = arith.mulf %125, %122 : vector<256x512xf32>
    %cst_55 = arith.constant 4.471500e-02 : f32
    %127 = vector.broadcast %cst_55 : f32 to vector<256x512xf32>
    %128 = arith.mulf %127, %126 : vector<256x512xf32>
    %129 = arith.addf %122, %128 : vector<256x512xf32>
    %cst_56 = arith.constant 0.797884583 : f32
    %130 = vector.broadcast %cst_56 : f32 to vector<256x512xf32>
    %131 = arith.mulf %130, %129 : vector<256x512xf32>
    %132 = math.tanh %131 : vector<256x512xf32>
    %cst_57 = arith.constant 1.000000e+00 : f32
    %133 = vector.broadcast %cst_57 : f32 to vector<256x512xf32>
    %134 = arith.addf %133, %132 : vector<256x512xf32>
    %135 = arith.mulf %124, %134 : vector<256x512xf32>
    %136 = arith.truncf %135 : vector<256x512xf32> to vector<256x512xbf16>
    %c0_58 = arith.constant 0 : index
    %c0_59 = arith.constant 0 : index
    %137 = vector.load %arg14[%c0_58, %c0_59] : memref<512x128xbf16, #tpu.memory_space<vmem>>, vector<512x128xbf16>
    %cst_60 = arith.constant dense<0.000000e+00> : vector<256x128xf32>
    %138 = tpu.matmul %136, %137, %cst_60 {dimension_numbers = #tpu.dot_dimension_numbers<[1], [0], [0], [1], [0, 0, 1, 1], [], []>} : vector<256x512xbf16>, vector<512x128xbf16>, vector<256x128xf32> -> vector<256x128xf32>
    %c0_61 = arith.constant 0 : index
    %c0_62 = arith.constant 0 : index
    %139 = vector.load %arg15[%c0_61, %c0_62] : memref<1x128xf32, #tpu.memory_space<vmem>>, vector<1x128xf32>
    %140 = vector.broadcast %139 : vector<1x128xf32> to vector<256x128xf32>
    %141 = arith.addf %138, %140 : vector<256x128xf32>
    %c0_63 = arith.constant 0 : index
    %c0_64 = arith.constant 0 : index
    %142 = vector.load %arg16[%c0_63, %c0_64] : memref<1x128xf32, #tpu.memory_space<vmem>>, vector<1x128xf32>
    %143 = vector.broadcast %142 : vector<1x128xf32> to vector<256x128xf32>
    %144 = arith.mulf %143, %141 : vector<256x128xf32>
    %145 = arith.addf %94, %144 : vector<256x128xf32>
    %146 = vector.shape_cast %145 : vector<256x128xf32> to vector<4x64x128xf32>
    %147 = arith.truncf %146 : vector<4x64x128xf32> to vector<4x64x128xbf16>
    %c0_65 = arith.constant 0 : index
    %c0_66 = arith.constant 0 : index
    %c0_67 = arith.constant 0 : index
    %148 = vector.load %arg19[%c0_65, %c0_66, %c0_67] : memref<4x64x128xbf16, #tpu.memory_space<vmem>>, vector<4x64x128xbf16>
    tpu.vector_store %arg19[%c0_65, %c0_66, %c0_67], %147 {strides = array<i32>} : memref<4x64x128xbf16, #tpu.memory_space<vmem>>, vector<4x64x128xbf16>,
    return
  }
  func.func @transform_0(%arg0: i32) -> (i32, i32, i32) {
    %c0_i32 = arith.constant 0 : i32
    %c0_i32_0 = arith.constant 0 : i32
    %c0_i32_1 = arith.constant 0 : i32
    return %arg0, %c0_i32, %c0_i32_0 : i32, i32, i32
  }
  func.func @transform_1(%arg0: i32) -> (i32, i32, i32) {
    %c0_i32 = arith.constant 0 : i32
    %c0_i32_0 = arith.constant 0 : i32
    %c0_i32_1 = arith.constant 0 : i32
    return %arg0, %c0_i32, %c0_i32_0 : i32, i32, i32
  }
  func.func @transform_2(%arg0: i32) -> (i32, i32) {
    %c0_i32 = arith.constant 0 : i32
    %c0_i32_0 = arith.constant 0 : i32
    %c0_i32_1 = arith.constant 0 : i32
    return %c0_i32, %c0_i32_0 : i32, i32
  }
  func.func @transform_3(%arg0: i32) -> (i32, i32) {
    %c0_i32 = arith.constant 0 : i32
    %c0_i32_0 = arith.constant 0 : i32
    %c0_i32_1 = arith.constant 0 : i32
    return %c0_i32, %c0_i32_0 : i32, i32
  }
  func.func @transform_4(%arg0: i32) -> (i32, i32) {
    %c0_i32 = arith.constant 0 : i32
    %c0_i32_0 = arith.constant 0 : i32
    %c0_i32_1 = arith.constant 0 : i32
    return %c0_i32, %c0_i32_0 : i32, i32
  }
  func.func @transform_5(%arg0: i32) -> (i32, i32) {
    %c0_i32 = arith.constant 0 : i32
    %c0_i32_0 = arith.constant 0 : i32
    %c0_i32_1 = arith.constant 0 : i32
    return %c0_i32, %c0_i32_0 : i32, i32
  }
  func.func @transform_6(%arg0: i32) -> (i32, i32) {
    %c0_i32 = arith.constant 0 : i32
    %c0_i32_0 = arith.constant 0 : i32
    %c0_i32_1 = arith.constant 0 : i32
    return %c0_i32, %c0_i32_0 : i32, i32
  }
  func.func @transform_7(%arg0: i32) -> (i32, i32) {
    %c0_i32 = arith.constant 0 : i32
    %c0_i32_0 = arith.constant 0 : i32
    %c0_i32_1 = arith.constant 0 : i32
    return %c0_i32, %c0_i32_0 : i32, i32
  }
  func.func @transform_8(%arg0: i32) -> (i32, i32) {
    %c0_i32 = arith.constant 0 : i32
    %c0_i32_0 = arith.constant 0 : i32
    %c0_i32_1 = arith.constant 0 : i32
    return %c0_i32, %c0_i32_0 : i32, i32
  }
  func.func @transform_9(%arg0: i32) -> (i32, i32) {
    %c0_i32 = arith.constant 0 : i32
    %c0_i32_0 = arith.constant 0 : i32
    %c0_i32_1 = arith.constant 0 : i32
    return %c0_i32, %c0_i32_0 : i32, i32
  }
  func.func @transform_10(%arg0: i32) -> (i32, i32) {
    %c0_i32 = arith.constant 0 : i32
    %c0_i32_0 = arith.constant 0 : i32
    %c0_i32_1 = arith.constant 0 : i32
    return %c0_i32, %c0_i32_0 : i32, i32
  }
  func.func @transform_11(%arg0: i32) -> (i32, i32) {
    %c0_i32 = arith.constant 0 : i32
    %c0_i32_0 = arith.constant 0 : i32
    %c0_i32_1 = arith.constant 0 : i32
    return %c0_i32, %c0_i32_0 : i32, i32
  }
  func.func @transform_12(%arg0: i32) -> (i32, i32) {
    %c0_i32 = arith.constant 0 : i32
    %c0_i32_0 = arith.constant 0 : i32
    %c0_i32_1 = arith.constant 0 : i32
    return %c0_i32, %c0_i32_0 : i32, i32
  }
  func.func @transform_13(%arg0: i32) -> (i32, i32) {
    %c0_i32 = arith.constant 0 : i32
    %c0_i32_0 = arith.constant 0 : i32
    %c0_i32_1 = arith.constant 0 : i32
    return %c0_i32, %c0_i32_0 : i32, i32
  }
  func.func @transform_14(%arg0: i32) -> (i32, i32) {
    %c0_i32 = arith.constant 0 : i32
    %c0_i32_0 = arith.constant 0 : i32
    %c0_i32_1 = arith.constant 0 : i32
    return %c0_i32, %c0_i32_0 : i32, i32
  }
  func.func @transform_15(%arg0: i32) -> (i32, i32) {
    %c0_i32 = arith.constant 0 : i32
    %c0_i32_0 = arith.constant 0 : i32
    %c0_i32_1 = arith.constant 0 : i32
    return %c0_i32, %c0_i32_0 : i32, i32
  }
  func.func @transform_16(%arg0: i32) -> (i32, i32) {
    %c0_i32 = arith.constant 0 : i32
    %c0_i32_0 = arith.constant 0 : i32
    %c0_i32_1 = arith.constant 0 : i32
    return %c0_i32, %c0_i32_0 : i32, i32
  }
  func.func @transform_17(%arg0: i32) -> (i32, i32) {
    %c0_i32 = arith.constant 0 : i32
    %c0_i32_0 = arith.constant 0 : i32
    %c0_i32_1 = arith.constant 0 : i32
    return %c0_i32, %c0_i32_0 : i32, i32
  }
  func.func @transform_18(%arg0: i32) -> (i32, i32, i32) {
    %c0_i32 = arith.constant 0 : i32
    %c0_i32_0 = arith.constant 0 : i32
    %c0_i32_1 = arith.constant 0 : i32
    return %arg0, %c0_i32, %c0_i32_0 : i32, i32, i32
  }
}

</mosaic_0001>

<llo_original>
// kernel: tpu_custom_call.1
$region0: #{tpu_custom_call.1}
  #allocation0 [shape = 'u32[]', space=smem, size = 0x4, offset = 0x4, fixed_abs, tag = 'smem constant byte address 0x4 - core index']
  #allocation1 [shape = 'u32[144,128]{1,0:T(1,128)}', space=vmem, size = 0x12000, scoped, tag = 'internal scratch']
  %s0 = inlined_call_operand.vmem [shape: bf16[8,1,128], index: 0, kind: input, shape index: {}]
  %s1 = inlined_call_operand.hbm [shape: bf16[8,64,128], index: 1, kind: input, shape index: {}]
  %s2 = inlined_call_operand.vmem [shape: f32[1,128], index: 2, kind: input, shape index: {}]
  %s3 = inlined_call_operand.vmem [shape: f32[1,128], index: 3, kind: input, shape index: {}]
  %s4 = inlined_call_operand.vmem [shape: bf16[128,128], index: 4, kind: input, shape index: {}]
  %s5 = inlined_call_operand.hbm [shape: bf16[128,256], index: 5, kind: input, shape index: {}]
  %s6 = inlined_call_operand.hbm [shape: bf16[128,128], index: 6, kind: input, shape index: {}]
  %s7 = inlined_call_operand.vmem [shape: f32[1,128], index: 7, kind: input, shape index: {}]
  %s8 = inlined_call_operand.vmem [shape: f32[1,128], index: 8, kind: input, shape index: {}]
  %s9 = inlined_call_operand.vmem [shape: f32[1,128], index: 9, kind: input, shape index: {}]
  %s10 = inlined_call_operand.vmem [shape: f32[1,128], index: 10, kind: input, shape index: {}]
  %s11 = inlined_call_operand.hbm [shape: bf16[128,512], index: 11, kind: input, shape index: {}]
  %s12 = inlined_call_operand.vmem [shape: f32[1,512], index: 12, kind: input, shape index: {}]
  %s13 = inlined_call_operand.hbm [shape: bf16[512,128], index: 13, kind: input, shape index: {}]
  %s14 = inlined_call_operand.vmem [shape: f32[1,128], index: 14, kind: input, shape index: {}]
  %s15 = inlined_call_operand.vmem [shape: f32[1,128], index: 15, kind: input, shape index: {}]
  %s16 = inlined_call_operand.vmem [shape: bf16[128,4], index: 16, kind: input, shape index: {}]
  %s17 = inlined_call_operand.vmem [shape: bf16[4,128], index: 17, kind: input, shape index: {}]
  %s18 = inlined_call_operand.hbm [shape: bf16[8,64,128], index: 18, kind: output, shape index: {}]
  %s19 = sld [smem:[#allocation0]]
  $region125: #{tpu_custom_call.1} parent=0
    _
  %s21 = ssub.s32 1, %s19
  %s22 = scalar_select 0, %s21, %s19
  $region1: #{tpu_custom_call.1} parent=0
    #allocation2 [shape = 'u8[131072]{0}', space=vmem, size = 0x20000, scoped, tag = 'input window, operand 1']
    #allocation3 [shape = 's32[2]{0}', space=sflag, size = 0x8, scoped, tag = 'scoped memory for tpu_custom_call.1']
    #allocation4 [shape = 's32[2]{0}', space=sflag, size = 0x8, scoped, tag = 'scoped memory for tpu_custom_call.1']
    #allocation5 [shape = 'u8[65536]{0}', space=vmem, size = 0x10000, scoped, tag = 'input window, operand 5, single buffered']
    #allocation6 [shape = 's32[1]{0}', space=sflag, size = 0x4, scoped, tag = 'scoped memory for tpu_custom_call.1']
    #allocation7 [shape = 'u8[32768]{0}', space=vmem, size = 0x8000, scoped, tag = 'input window, operand 6, single buffered']
    #allocation8 [shape = 'u8[131072]{0}', space=vmem, size = 0x20000, scoped, tag = 'input window, operand 11, single buffered']
    #allocation9 [shape = 's32[1]{0}', space=sflag, size = 0x4, scoped, tag = 'scoped memory for tpu_custom_call.1']
    #allocation10 [shape = 'u8[131072]{0}', space=vmem, size = 0x20000, scoped, tag = 'input window, operand 13, single buffered']
    #allocation11 [shape = 'u8[131072]{0}', space=vmem, size = 0x20000, scoped, tag = 'output window, operand 0']
    %23 = vsyncpa [#allocation3], 0
    %s24 = scalar_lea.sflag [#allocation3], 1
    %25 = vsyncpa %s24, 0
    %26 = vsyncpa [#allocation6], 0
    %27 = vsyncpa [#allocation9], 0
    %28 = vsyncpa [#allocation4], 0
    %s29 = scalar_lea.sflag [#allocation4], 1
    %30 = vsyncpa %s29, 0
    loop: start=0, step=1, limit=4
    $region2: #{tpu_custom_call.1} parent=1 // loop_pre_header
      _
    $region3: #{tpu_custom_call.1} parent=1 // loop_header
      %s32 = sphi 0, %s36
      %p33 = scmp.ge.s32.totalorder %s32, 4
      %s42 = sphi 0, %s44
      %s45 = sphi 0, %s42
      %s46 = sphi 0, %s45
      %s62 = sphi 0, %s46
      %s68 = sphi 0, %s70
      %s71 = sphi 0, %s68
      %s72 = sphi 0, %s71
      %s88 = sphi 0, %s72
      %s92 = sphi 0, %s92
      %s94 = sphi 0, %s92
      %s95 = sphi 0, %s94
      %s109 = sphi 0, %s95
      %s113 = sphi 0, %s113
      %s115 = sphi 0, %s113
      %s116 = sphi 0, %s115
      %s130 = sphi 0, %s116
      %s134 = sphi 0, %s134
      %s136 = sphi 0, %s134
      %s137 = sphi 0, %s136
      %s151 = sphi 0, %s137
      %s155 = sphi 0, %s155
      %s157 = sphi 0, %s155
      %s158 = sphi 0, %s157
      %s172 = sphi 0, %s158
      %s176 = sphi 0, %s176
      %s178 = sphi 0, %s176
      %s179 = sphi 0, %s178
      %s193 = sphi 0, %s179
      %s197 = sphi 0, %s197
      %s199 = sphi 0, %s197
      %s200 = sphi 0, %s199
      %s214 = sphi 0, %s200
      %s218 = sphi 0, %s218
      %s220 = sphi 0, %s218
      %s221 = sphi 0, %s220
      %s235 = sphi 0, %s221
      %s239 = sphi 0, %s239
      %s241 = sphi 0, %s239
      %s242 = sphi 0, %s241
      %s256 = sphi 0, %s242
      %s260 = sphi 0, %s260
      %s262 = sphi 0, %s260
      %s263 = sphi 0, %s262
      %s277 = sphi 0, %s263
      %s281 = sphi 0, %s281
      %s283 = sphi 0, %s281
      %s284 = sphi 0, %s283
      %s298 = sphi 0, %s284
      %s302 = sphi 0, %s302
      %s304 = sphi 0, %s302
      %s305 = sphi 0, %s304
      %s319 = sphi 0, %s305
      %s323 = sphi 0, %s323
      %s325 = sphi 0, %s323
      %s326 = sphi 0, %s325
      %s340 = sphi 0, %s326
      %s344 = sphi 0, %s344
      %s346 = sphi 0, %s344
      %s347 = sphi 0, %s346
      %s361 = sphi 0, %s347
      %s365 = sphi 0, %s365
      %s367 = sphi 0, %s365
      %s368 = sphi 0, %s367
      %s382 = sphi 0, %s368
      %s386 = sphi 0, %s386
      %s388 = sphi 0, %s386
      %s389 = sphi 0, %s388
      %s403 = sphi 0, %s389
      %s407 = sphi 0, %s407
      %s409 = sphi 0, %s407
      %s410 = sphi 0, %s409
      %s424 = sphi 0, %s410
      %s430 = sphi 0, %s432
      %s433 = sphi 0, %s430
      %s434 = sphi 0, %s433
      %s450 = sphi 0, %s434
    $region4: #{tpu_custom_call.1} parent=1 // loop_header_branch
      %35 = sbr.rel (%p33) target = $region8
    $region5: #{tpu_custom_call.1} parent=1 // loop_body
      %s37 = ssub.s32 %s32, 1
      %s38 = ssub.s32 %s32, 2
      %s39 = sadd.s32 %s32, 1
      %s40 = ssub.s32 %s32, %s39
      %p41 = scmp.eq.s32.totalorder %s40, 0
      %s43 = sadd.s32 %s42, 1
      %s44 = scalar_select %p41, %s42, %s43
      %p47 = pneg %p41
      %p48 = scmp.eq.s32.totalorder %s32, 1
      %p49 = por %p47, %p48
      %p50 = scmp.ne.s32.totalorder %s42, %s45
      %p51 = scmp.eq.s32.totalorder %s32, 0
      %p52 = por %p50, %p51
      %p53 = scmp.ne.s32.totalorder %s42, %s45
      %p54 = scmp.eq.s32.totalorder %s37, 1
      %p55 = por %p53, %p54
      %p56 = scmp.ne.s32.totalorder %s45, %s46
      %p57 = scmp.eq.s32.totalorder %s37, 0
      %p58 = por %p56, %p57
      %p59 = scmp.ne.s32.totalorder %s45, %s46
      %p60 = scmp.eq.s32.totalorder %s38, 1
      %p61 = por %p59, %p60
      %p63 = scmp.ne.s32.totalorder %s46, %s62
      %p64 = scmp.eq.s32.totalorder %s38, 0
      %p65 = por %p63, %p64
      %s66 = ssub.s32 %s32, %s39
      %p67 = scmp.eq.s32.totalorder %s66, 0
      %s69 = sadd.s32 %s68, 1
      %s70 = scalar_select %p67, %s68, %s69
      %p73 = pneg %p67
      %p74 = scmp.eq.s32.totalorder %s32, 1
      %p75 = por %p73, %p74
      %p76 = scmp.ne.s32.totalorder %s68, %s71
      %p77 = scmp.eq.s32.totalorder %s32, 0
      %p78 = por %p76, %p77
      %p79 = scmp.ne.s32.totalorder %s68, %s71
      %p80 = scmp.eq.s32.totalorder %s37, 1
      %p81 = por %p79, %p80
      %p82 = scmp.ne.s32.totalorder %s71, %s72
      %p83 = scmp.eq.s32.totalorder %s37, 0
      %p84 = por %p82, %p83
      %p85 = scmp.ne.s32.totalorder %s71, %s72
      %p86 = scmp.eq.s32.totalorder %s38, 1
      %p87 = por %p85, %p86
      %p89 = scmp.ne.s32.totalorder %s72, %s88
      %p90 = scmp.eq.s32.totalorder %s38, 0
      %p91 = por %p89, %p90
      %s93 = sadd.s32 %s92, 1
      %p96 = scmp.eq.s32.totalorder %s32, 1
      %p97 = scmp.ne.s32.totalorder %s92, %s94
      %p98 = scmp.eq.s32.totalorder %s32, 0
      %p99 = por %p97, %p98
      %p100 = scmp.ne.s32.totalorder %s92, %s94
      %p101 = scmp.eq.s32.totalorder %s37, 1
      %p102 = por %p100, %p101
      %p103 = scmp.ne.s32.totalorder %s94, %s95
      %p104 = scmp.eq.s32.totalorder %s37, 0
      %p105 = por %p103, %p104
      %p106 = scmp.ne.s32.totalorder %s94, %s95
      %p107 = scmp.eq.s32.totalorder %s38, 1
      %p108 = por %p106, %p107
      %p110 = scmp.ne.s32.totalorder %s95, %s109
      %p111 = scmp.eq.s32.totalorder %s38, 0
      %p112 = por %p110, %p111
      %s114 = sadd.s32 %s113, 1
      %p117 = scmp.eq.s32.totalorder %s32, 1
      %p118 = scmp.ne.s32.totalorder %s113, %s115
      %p119 = scmp.eq.s32.totalorder %s32, 0
      %p120 = por %p118, %p119
      %p121 = scmp.ne.s32.totalorder %s113, %s115
      %p122 = scmp.eq.s32.totalorder %s37, 1
      %p123 = por %p121, %p122
      %p124 = scmp.ne.s32.totalorder %s115, %s116
      %p125 = scmp.eq.s32.totalorder %s37, 0
      %p126 = por %p124, %p125
      %p127 = scmp.ne.s32.totalorder %s115, %s116
      %p128 = scmp.eq.s32.totalorder %s38, 1
      %p129 = por %p127, %p128
      %p131 = scmp.ne.s32.totalorder %s116, %s130
      %p132 = scmp.eq.s32.totalorder %s38, 0
      %p133 = por %p131, %p132
      %s135 = sadd.s32 %s134, 1
      %p138 = scmp.eq.s32.totalorder %s32, 1
      %p139 = scmp.ne.s32.totalorder %s134, %s136
      %p140 = scmp.eq.s32.totalorder %s32, 0
      %p141 = por %p139, %p140
      %p142 = scmp.ne.s32.totalorder %s134, %s136
      %p143 = scmp.eq.s32.totalorder %s37, 1
      %p144 = por %p142, %p143
      %p145 = scmp.ne.s32.totalorder %s136, %s137
      %p146 = scmp.eq.s32.totalorder %s37, 0
      %p147 = por %p145, %p146
      %p148 = scmp.ne.s32.totalorder %s136, %s137
      %p149 = scmp.eq.s32.totalorder %s38, 1
      %p150 = por %p148, %p149
      %p152 = scmp.ne.s32.totalorder %s137, %s151
      %p153 = scmp.eq.s32.totalorder %s38, 0
      %p154 = por %p152, %p153
      %s156 = sadd.s32 %s155, 1
      %p159 = scmp.eq.s32.totalorder %s32, 1
      %p160 = scmp.ne.s32.totalorder %s155, %s157
      %p161 = scmp.eq.s32.totalorder %s32, 0
      %p162 = por %p160, %p161
      %p163 = scmp.ne.s32.totalorder %s155, %s157
      %p164 = scmp.eq.s32.totalorder %s37, 1
      %p165 = por %p163, %p164
      %p166 = scmp.ne.s32.totalorder %s157, %s158
      %p167 = scmp.eq.s32.totalorder %s37, 0
      %p168 = por %p166, %p167
      %p169 = scmp.ne.s32.totalorder %s157, %s158
      %p170 = scmp.eq.s32.totalorder %s38, 1
      %p171 = por %p169, %p170
      %p173 = scmp.ne.s32.totalorder %s158, %s172
      %p174 = scmp.eq.s32.totalorder %s38, 0
      %p175 = por %p173, %p174
      %s177 = sadd.s32 %s176, 1
      %p180 = scmp.eq.s32.totalorder %s32, 1
      %p181 = scmp.ne.s32.totalorder %s176, %s178
      %p182 = scmp.eq.s32.totalorder %s32, 0
      %p183 = por %p181, %p182
      %p184 = scmp.ne.s32.totalorder %s176, %s178
      %p185 = scmp.eq.s32.totalorder %s37, 1
      %p186 = por %p184, %p185
      %p187 = scmp.ne.s32.totalorder %s178, %s179
      %p188 = scmp.eq.s32.totalorder %s37, 0
      %p189 = por %p187, %p188
      %p190 = scmp.ne.s32.totalorder %s178, %s179
      %p191 = scmp.eq.s32.totalorder %s38, 1
      %p192 = por %p190, %p191
      %p194 = scmp.ne.s32.totalorder %s179, %s193
      %p195 = scmp.eq.s32.totalorder %s38, 0
      %p196 = por %p194, %p195
      %s198 = sadd.s32 %s197, 1
      %p201 = scmp.eq.s32.totalorder %s32, 1
      %p202 = scmp.ne.s32.totalorder %s197, %s199
      %p203 = scmp.eq.s32.totalorder %s32, 0
      %p204 = por %p202, %p203
      %p205 = scmp.ne.s32.totalorder %s197, %s199
      %p206 = scmp.eq.s32.totalorder %s37, 1
      %p207 = por %p205, %p206
      %p208 = scmp.ne.s32.totalorder %s199, %s200
      %p209 = scmp.eq.s32.totalorder %s37, 0
      %p210 = por %p208, %p209
      %p211 = scmp.ne.s32.totalorder %s199, %s200
      %p212 = scmp.eq.s32.totalorder %s38, 1
      %p213 = por %p211, %p212
      %p215 = scmp.ne.s32.totalorder %s200, %s214
      %p216 = scmp.eq.s32.totalorder %s38, 0
      %p217 = por %p215, %p216
      %s219 = sadd.s32 %s218, 1
      %p222 = scmp.eq.s32.totalorder %s32, 1
      %p223 = scmp.ne.s32.totalorder %s218, %s220
      %p224 = scmp.eq.s32.totalorder %s32, 0
      %p225 = por %p223, %p224
      %p226 = scmp.ne.s32.totalorder %s218, %s220
      %p227 = scmp.eq.s32.totalorder %s37, 1
      %p228 = por %p226, %p227
      %p229 = scmp.ne.s32.totalorder %s220, %s221
      %p230 = scmp.eq.s32.totalorder %s37, 0
      %p231 = por %p229, %p230
      %p232 = scmp.ne.s32.totalorder %s220, %s221
      %p233 = scmp.eq.s32.totalorder %s38, 1
      %p234 = por %p232, %p233
      %p236 = scmp.ne.s32.totalorder %s221, %s235
      %p237 = scmp.eq.s32.totalorder %s38, 0
      %p238 = por %p236, %p237
      %s240 = sadd.s32 %s239, 1
      %p243 = scmp.eq.s32.totalorder %s32, 1
      %p244 = scmp.ne.s32.totalorder %s239, %s241
      %p245 = scmp.eq.s32.totalorder %s32, 0
      %p246 = por %p244, %p245
      %p247 = scmp.ne.s32.totalorder %s239, %s241
      %p248 = scmp.eq.s32.totalorder %s37, 1
      %p249 = por %p247, %p248
      %p250 = scmp.ne.s32.totalorder %s241, %s242
      %p251 = scmp.eq.s32.totalorder %s37, 0
      %p252 = por %p250, %p251
      %p253 = scmp.ne.s32.totalorder %s241, %s242
      %p254 = scmp.eq.s32.totalorder %s38, 1
      %p255 = por %p253, %p254
      %p257 = scmp.ne.s32.totalorder %s242, %s256
      %p258 = scmp.eq.s32.totalorder %s38, 0
      %p259 = por %p257, %p258
      %s261 = sadd.s32 %s260, 1
      %p264 = scmp.eq.s32.totalorder %s32, 1
      %p265 = scmp.ne.s32.totalorder %s260, %s262
      %p266 = scmp.eq.s32.totalorder %s32, 0
      %p267 = por %p265, %p266
      %p268 = scmp.ne.s32.totalorder %s260, %s262
      %p269 = scmp.eq.s32.totalorder %s37, 1
      %p270 = por %p268, %p269
      %p271 = scmp.ne.s32.totalorder %s262, %s263
      %p272 = scmp.eq.s32.totalorder %s37, 0
      %p273 = por %p271, %p272
      %p274 = scmp.ne.s32.totalorder %s262, %s263
      %p275 = scmp.eq.s32.totalorder %s38, 1
      %p276 = por %p274, %p275
      %p278 = scmp.ne.s32.totalorder %s263, %s277
      %p279 = scmp.eq.s32.totalorder %s38, 0
      %p280 = por %p278, %p279
      %s282 = sadd.s32 %s281, 1
      %p285 = scmp.eq.s32.totalorder %s32, 1
      %p286 = scmp.ne.s32.totalorder %s281, %s283
      %p287 = scmp.eq.s32.totalorder %s32, 0
      %p288 = por %p286, %p287
      %p289 = scmp.ne.s32.totalorder %s281, %s283
      %p290 = scmp.eq.s32.totalorder %s37, 1
      %p291 = por %p289, %p290
      %p292 = scmp.ne.s32.totalorder %s283, %s284
      %p293 = scmp.eq.s32.totalorder %s37, 0
      %p294 = por %p292, %p293
      %p295 = scmp.ne.s32.totalorder %s283, %s284
      %p296 = scmp.eq.s32.totalorder %s38, 1
      %p297 = por %p295, %p296
      %p299 = scmp.ne.s32.totalorder %s284, %s298
      %p300 = scmp.eq.s32.totalorder %s38, 0
      %p301 = por %p299, %p300
      %s303 = sadd.s32 %s302, 1
      %p306 = scmp.eq.s32.totalorder %s32, 1
      %p307 = scmp.ne.s32.totalorder %s302, %s304
      %p308 = scmp.eq.s32.totalorder %s32, 0
      %p309 = por %p307, %p308
      %p310 = scmp.ne.s32.totalorder %s302, %s304
      %p311 = scmp.eq.s32.totalorder %s37, 1
      %p312 = por %p310, %p311
      %p313 = scmp.ne.s32.totalorder %s304, %s305
      %p314 = scmp.eq.s32.totalorder %s37, 0
      %p315 = por %p313, %p314
      %p316 = scmp.ne.s32.totalorder %s304, %s305
      %p317 = scmp.eq.s32.totalorder %s38, 1
      %p318 = por %p316, %p317
      %p320 = scmp.ne.s32.totalorder %s305, %s319
      %p321 = scmp.eq.s32.totalorder %s38, 0
      %p322 = por %p320, %p321
      %s324 = sadd.s32 %s323, 1
      %p327 = scmp.eq.s32.totalorder %s32, 1
      %p328 = scmp.ne.s32.totalorder %s323, %s325
      %p329 = scmp.eq.s32.totalorder %s32, 0
      %p330 = por %p328, %p329
      %p331 = scmp.ne.s32.totalorder %s323, %s325
      %p332 = scmp.eq.s32.totalorder %s37, 1
      %p333 = por %p331, %p332
      %p334 = scmp.ne.s32.totalorder %s325, %s326
      %p335 = scmp.eq.s32.totalorder %s37, 0
      %p336 = por %p334, %p335
      %p337 = scmp.ne.s32.totalorder %s325, %s326
      %p338 = scmp.eq.s32.totalorder %s38, 1
      %p339 = por %p337, %p338
      %p341 = scmp.ne.s32.totalorder %s326, %s340
      %p342 = scmp.eq.s32.totalorder %s38, 0
      %p343 = por %p341, %p342
      %s345 = sadd.s32 %s344, 1
      %p348 = scmp.eq.s32.totalorder %s32, 1
      %p349 = scmp.ne.s32.totalorder %s344, %s346
      %p350 = scmp.eq.s32.totalorder %s32, 0
      %p351 = por %p349, %p350
      %p352 = scmp.ne.s32.totalorder %s344, %s346
      %p353 = scmp.eq.s32.totalorder %s37, 1
      %p354 = por %p352, %p353
      %p355 = scmp.ne.s32.totalorder %s346, %s347
      %p356 = scmp.eq.s32.totalorder %s37, 0
      %p357 = por %p355, %p356
      %p358 = scmp.ne.s32.totalorder %s346, %s347
      %p359 = scmp.eq.s32.totalorder %s38, 1
      %p360 = por %p358, %p359
      %p362 = scmp.ne.s32.totalorder %s347, %s361
      %p363 = scmp.eq.s32.totalorder %s38, 0
      %p364 = por %p362, %p363
      %s366 = sadd.s32 %s365, 1
      %p369 = scmp.eq.s32.totalorder %s32, 1
      %p370 = scmp.ne.s32.totalorder %s365, %s367
      %p371 = scmp.eq.s32.totalorder %s32, 0
      %p372 = por %p370, %p371
      %p373 = scmp.ne.s32.totalorder %s365, %s367
      %p374 = scmp.eq.s32.totalorder %s37, 1
      %p375 = por %p373, %p374
      %p376 = scmp.ne.s32.totalorder %s367, %s368
      %p377 = scmp.eq.s32.totalorder %s37, 0
      %p378 = por %p376, %p377
      %p379 = scmp.ne.s32.totalorder %s367, %s368
      %p380 = scmp.eq.s32.totalorder %s38, 1
      %p381 = por %p379, %p380
      %p383 = scmp.ne.s32.totalorder %s368, %s382
      %p384 = scmp.eq.s32.totalorder %s38, 0
      %p385 = por %p383, %p384
      %s387 = sadd.s32 %s386, 1
      %p390 = scmp.eq.s32.totalorder %s32, 1
      %p391 = scmp.ne.s32.totalorder %s386, %s388
      %p392 = scmp.eq.s32.totalorder %s32, 0
      %p393 = por %p391, %p392
      %p394 = scmp.ne.s32.totalorder %s386, %s388
      %p395 = scmp.eq.s32.totalorder %s37, 1
      %p396 = por %p394, %p395
      %p397 = scmp.ne.s32.totalorder %s388, %s389
      %p398 = scmp.eq.s32.totalorder %s37, 0
      %p399 = por %p397, %p398
      %p400 = scmp.ne.s32.totalorder %s388, %s389
      %p401 = scmp.eq.s32.totalorder %s38, 1
      %p402 = por %p400, %p401
      %p404 = scmp.ne.s32.totalorder %s389, %s403
      %p405 = scmp.eq.s32.totalorder %s38, 0
      %p406 = por %p404, %p405
      %s408 = sadd.s32 %s407, 1
      %p411 = scmp.eq.s32.totalorder %s32, 1
      %p412 = scmp.ne.s32.totalorder %s407, %s409
      %p413 = scmp.eq.s32.totalorder %s32, 0
      %p414 = por %p412, %p413
      %p415 = scmp.ne.s32.totalorder %s407, %s409
      %p416 = scmp.eq.s32.totalorder %s37, 1
      %p417 = por %p415, %p416
      %p418 = scmp.ne.s32.totalorder %s409, %s410
      %p419 = scmp.eq.s32.totalorder %s37, 0
      %p420 = por %p418, %p419
      %p421 = scmp.ne.s32.totalorder %s409, %s410
      %p422 = scmp.eq.s32.totalorder %s38, 1
      %p423 = por %p421, %p422
      %p425 = scmp.ne.s32.totalorder %s410, %s424
      %p426 = scmp.eq.s32.totalorder %s38, 0
      %p427 = por %p425, %p426
      %s428 = ssub.s32 %s32, %s39
      %p429 = scmp.eq.s32.totalorder %s428, 0
      %s431 = sadd.s32 %s430, 1
      %s432 = scalar_select %p429, %s430, %s431
      %p435 = pneg %p429
      %p436 = scmp.eq.s32.totalorder %s32, 1
      %p437 = por %p435, %p436
      %p438 = scmp.ne.s32.totalorder %s430, %s433
      %p439 = scmp.eq.s32.totalorder %s32, 0
      %p440 = por %p438, %p439
      %p441 = scmp.ne.s32.totalorder %s430, %s433
      %p442 = scmp.eq.s32.totalorder %s37, 1
      %p443 = por %p441, %p442
      %p444 = scmp.ne.s32.totalorder %s433, %s434
      %p445 = scmp.eq.s32.totalorder %s37, 0
      %p446 = por %p444, %p445
      %p447 = scmp.ne.s32.totalorder %s433, %s434
      %p448 = scmp.eq.s32.totalorder %s38, 1
      %p449 = por %p447, %p448
      %p451 = scmp.ne.s32.totalorder %s434, %s450
      %p452 = scmp.eq.s32.totalorder %s38, 0
      %p453 = por %p451, %p452
      %p454 = scmp.le.s32.totalorder 1, %s32
      %p455 = scmp.lt.s32.totalorder %s32, 3
      %p456 = pnand %p454, %p455
      %p457 = pneg %p456
      // Predicated region
      $region9: #{tpu_custom_call.1} parent=5 // pred_check
        _
      $region10: #{tpu_custom_call.1} parent=5 // pred_check_branch
        %459 = sbr.rel (%p456) target = $region12
      $region11: #{tpu_custom_call.1} parent=5 // pred_region
        %s460 = ssub.s32 %s32, 1
        // Predicated region
        $region13: #{tpu_custom_call.1} parent=11 // pred_check
          %p461 = pneg %p105
        $region14: #{tpu_custom_call.1} parent=11 // pred_check_branch
          %463 = sbr.rel (%p461) target = $region16
        $region15: #{tpu_custom_call.1} parent=11 // pred_region
          _
        $region16: #{tpu_custom_call.1} parent=11 // pred_fallthru
          _
        // Predicated region
        $region17: #{tpu_custom_call.1} parent=11 // pred_check
          %p464 = pneg %p126
        $region18: #{tpu_custom_call.1} parent=11 // pred_check_branch
          %466 = sbr.rel (%p464) target = $region20
        $region19: #{tpu_custom_call.1} parent=11 // pred_region
          _
        $region20: #{tpu_custom_call.1} parent=11 // pred_fallthru
          _
        // Predicated region
        $region21: #{tpu_custom_call.1} parent=11 // pred_check
          %p467 = pneg %p147
        $region22: #{tpu_custom_call.1} parent=11 // pred_check_branch
          %469 = sbr.rel (%p467) target = $region24
        $region23: #{tpu_custom_call.1} parent=11 // pred_region
          _
        $region24: #{tpu_custom_call.1} parent=11 // pred_fallthru
          _
        // Predicated region
        $region25: #{tpu_custom_call.1} parent=11 // pred_check
          %p470 = pneg %p168
        $region26: #{tpu_custom_call.1} parent=11 // pred_check_branch
          %472 = sbr.rel (%p470) target = $region28
        $region27: #{tpu_custom_call.1} parent=11 // pred_region
          %s474 = ssub.s32 2048, 2048
          %475 = vsyncadd [#allocation6], %s474
          %s476 = sshll.u32 [#allocation5], 4
          %s477 = int_to_ptr.vmem [resolvable:$true] %s476
          %482 = dma.hbm_to_vmem [thread:$0]  %s5, 2048, %s477, [#allocation6], 128, 128, 8
        $region28: #{tpu_custom_call.1} parent=11 // pred_fallthru
          _
        // Predicated region
        $region29: #{tpu_custom_call.1} parent=11 // pred_check
          %p483 = pneg %p189
        $region30: #{tpu_custom_call.1} parent=11 // pred_check_branch
          %485 = sbr.rel (%p483) target = $region32
        $region31: #{tpu_custom_call.1} parent=11 // pred_region
          %s487 = ssub.s32 1024, 1024
          %488 = vsyncadd [#allocation6], %s487
          %s489 = sshll.u32 [#allocation7], 4
          %s490 = int_to_ptr.vmem [resolvable:$true] %s489
          %495 = dma.hbm_to_vmem [thread:$0]  %s6, 1024, %s490, [#allocation6], 64, 64, 4
        $region32: #{tpu_custom_call.1} parent=11 // pred_fallthru
          _
        // Predicated region
        $region33: #{tpu_custom_call.1} parent=11 // pred_check
          %p496 = pneg %p210
        $region34: #{tpu_custom_call.1} parent=11 // pred_check_branch
          %498 = sbr.rel (%p496) target = $region36
        $region35: #{tpu_custom_call.1} parent=11 // pred_region
          _
        $region36: #{tpu_custom_call.1} parent=11 // pred_fallthru
          _
        // Predicated region
        $region37: #{tpu_custom_call.1} parent=11 // pred_check
          %p499 = pneg %p231
        $region38: #{tpu_custom_call.1} parent=11 // pred_check_branch
          %501 = sbr.rel (%p499) target = $region40
        $region39: #{tpu_custom_call.1} parent=11 // pred_region
          _
        $region40: #{tpu_custom_call.1} parent=11 // pred_fallthru
          _
        // Predicated region
        $region41: #{tpu_custom_call.1} parent=11 // pred_check
          %p502 = pneg %p252
        $region42: #{tpu_custom_call.1} parent=11 // pred_check_branch
          %504 = sbr.rel (%p502) target = $region44
        $region43: #{tpu_custom_call.1} parent=11 // pred_region
          _
        $region44: #{tpu_custom_call.1} parent=11 // pred_fallthru
          _
        // Predicated region
        $region45: #{tpu_custom_call.1} parent=11 // pred_check
          %p505 = pneg %p273
        $region46: #{tpu_custom_call.1} parent=11 // pred_check_branch
          %507 = sbr.rel (%p505) target = $region48
        $region47: #{tpu_custom_call.1} parent=11 // pred_region
          _
        $region48: #{tpu_custom_call.1} parent=11 // pred_fallthru
          _
        // Predicated region
        $region49: #{tpu_custom_call.1} parent=11 // pred_check
          %p508 = pneg %p294
        $region50: #{tpu_custom_call.1} parent=11 // pred_check_branch
          %510 = sbr.rel (%p508) target = $region52
        $region51: #{tpu_custom_call.1} parent=11 // pred_region
          %s512 = ssub.s32 4096, 4096
          %513 = vsyncadd [#allocation9], %s512
          %s514 = sshll.u32 [#allocation8], 4
          %s515 = int_to_ptr.vmem [resolvable:$true] %s514
          %520 = dma.hbm_to_vmem [thread:$0]  %s11, 4096, %s515, [#allocation9], 256, 256, 16
        $region52: #{tpu_custom_call.1} parent=11 // pred_fallthru
          _
        // Predicated region
        $region53: #{tpu_custom_call.1} parent=11 // pred_check
          %p521 = pneg %p315
        $region54: #{tpu_custom_call.1} parent=11 // pred_check_branch
          %523 = sbr.rel (%p521) target = $region56
        $region55: #{tpu_custom_call.1} parent=11 // pred_region
          _
        $region56: #{tpu_custom_call.1} parent=11 // pred_fallthru
          _
        // Predicated region
        $region57: #{tpu_custom_call.1} parent=11 // pred_check
          %p524 = pneg %p336
        $region58: #{tpu_custom_call.1} parent=11 // pred_check_branch
          %526 = sbr.rel (%p524) target = $region60
        $region59: #{tpu_custom_call.1} parent=11 // pred_region
          %s528 = ssub.s32 4096, 4096
          %529 = vsyncadd [#allocation9], %s528
          %s530 = sshll.u32 [#allocation10], 4
          %s531 = int_to_ptr.vmem [resolvable:$true] %s530
          %536 = dma.hbm_to_vmem [thread:$0]  %s13, 4096, %s531, [#allocation9], 64, 64, 4
        $region60: #{tpu_custom_call.1} parent=11 // pred_fallthru
          _
        // Predicated region
        $region61: #{tpu_custom_call.1} parent=11 // pred_check
          %p537 = pneg %p357
        $region62: #{tpu_custom_call.1} parent=11 // pred_check_branch
          %539 = sbr.rel (%p537) target = $region64
        $region63: #{tpu_custom_call.1} parent=11 // pred_region
          _
        $region64: #{tpu_custom_call.1} parent=11 // pred_fallthru
          _
        // Predicated region
        $region65: #{tpu_custom_call.1} parent=11 // pred_check
          %p540 = pneg %p378
        $region66: #{tpu_custom_call.1} parent=11 // pred_check_branch
          %542 = sbr.rel (%p540) target = $region68
        $region67: #{tpu_custom_call.1} parent=11 // pred_region
          _
        $region68: #{tpu_custom_call.1} parent=11 // pred_fallthru
          _
        // Predicated region
        $region69: #{tpu_custom_call.1} parent=11 // pred_check
          %p543 = pneg %p399
        $region70: #{tpu_custom_call.1} parent=11 // pred_check_branch
          %545 = sbr.rel (%p543) target = $region72
        $region71: #{tpu_custom_call.1} parent=11 // pred_region
          _
        $region72: #{tpu_custom_call.1} parent=11 // pred_fallthru
          _
        // Predicated region
        $region73: #{tpu_custom_call.1} parent=11 // pred_check
          %p546 = pneg %p420
        $region74: #{tpu_custom_call.1} parent=11 // pred_check_branch
          %548 = sbr.rel (%p546) target = $region76
        $region75: #{tpu_custom_call.1} parent=11 // pred_region
          _
        $region76: #{tpu_custom_call.1} parent=11 // pred_fallthru
          _
      $region12: #{tpu_custom_call.1} parent=5 // pred_fallthru
        _
      %p549 = scmp.lt.s32.totalorder %s32, 2
      // Predicated region
      $region77: #{tpu_custom_call.1} parent=5 // pred_check
        %p550 = pneg %p549
      $region78: #{tpu_custom_call.1} parent=5 // pred_check_branch
        %552 = sbr.rel (%p550) target = $region80
      $region79: #{tpu_custom_call.1} parent=5 // pred_region
        // Predicated region
        $region81: #{tpu_custom_call.1} parent=79 // pred_check
          %p553 = pneg %p52
        $region82: #{tpu_custom_call.1} parent=79 // pred_check_branch
          %555 = sbr.rel (%p553) target = $region84
        $region83: #{tpu_custom_call.1} parent=79 // pred_region
          %s556 = smul.u32 4, %s32
          %p557 = scmp.lt.s32.totalorder %s556, 7
          %s558 = scalar_select %p557, %s556, 7
          %s559 = scalar_lea.vmem %s0, %s558
          %s560 = smul.u32 4, %s32
        $region84: #{tpu_custom_call.1} parent=79 // pred_fallthru
          _
        // Predicated region
        $region85: #{tpu_custom_call.1} parent=79 // pred_check
          %p561 = pneg %p78
        $region86: #{tpu_custom_call.1} parent=79 // pred_check_branch
          %563 = sbr.rel (%p561) target = $region88
        $region87: #{tpu_custom_call.1} parent=79 // pred_region
          %s564 = sand.u32 %s68, 1
          %s565 = scalar_lea.sflag [#allocation3], %s564
          %s566 = sand.u32 %s68, 1
          %s567 = smul.addr %s566, 128
          %s568 = scalar_lea.vmem [#allocation2], %s567
          %s569 = smul.u32 4, %s32
          %s571 = ssub.s32 2048, 2048
          %572 = vsyncadd %s565, %s571
          %s573 = smul.addr %s569, 8
          %s574 = smul.addr %s573, 64
          %s575 = scalar_lea.hbm %s1, %s574
          %s576 = sshll.u32 %s568, 4
          %s577 = int_to_ptr.vmem [resolvable:$true] %s576
          %582 = dma.hbm_to_vmem [thread:$0]  %s575, 2048, %s577, %s565, 64, 64, 4
        $region88: #{tpu_custom_call.1} parent=79 // pred_fallthru
          _
      $region80: #{tpu_custom_call.1} parent=5 // pred_fallthru
        _
      %p583 = scmp.le.s32.totalorder 1, %s32
      %p584 = scmp.lt.s32.totalorder %s32, 3
      %p585 = pnand %p583, %p584
      %p586 = pneg %p585
      // Predicated region
      $region89: #{tpu_custom_call.1} parent=5 // pred_check
        _
      $region90: #{tpu_custom_call.1} parent=5 // pred_check_branch
        %588 = sbr.rel (%p585) target = $region92
      $region91: #{tpu_custom_call.1} parent=5 // pred_region
        %s589 = ssub.s32 %s32, 1
        %s590 = sand.u32 %s71, 1
        %s591 = scalar_lea.sflag [#allocation3], %s590
        %s592 = sand.u32 %s71, 1
        %s593 = smul.addr %s592, 128
        %s594 = scalar_lea.vmem [#allocation2], %s593
        // Predicated region
        $region93: #{tpu_custom_call.1} parent=91 // pred_check
          %p595 = pneg %p84
        $region94: #{tpu_custom_call.1} parent=91 // pred_check_branch
          %597 = sbr.rel (%p595) target = $region96
        $region95: #{tpu_custom_call.1} parent=91 // pred_region
          %598 = dma.done %s591, 2048
        $region96: #{tpu_custom_call.1} parent=91 // pred_fallthru
          _
        // Predicated region
        $region97: #{tpu_custom_call.1} parent=91 // pred_check
          %p599 = pneg %p168
        $region98: #{tpu_custom_call.1} parent=91 // pred_check_branch
          %601 = sbr.rel (%p599) target = $region100
        $region99: #{tpu_custom_call.1} parent=91 // pred_region
          %602 = dma.done [#allocation6], 2048
        $region100: #{tpu_custom_call.1} parent=91 // pred_fallthru
          _
        // Predicated region
        $region101: #{tpu_custom_call.1} parent=91 // pred_check
          %p603 = pneg %p189
        $region102: #{tpu_custom_call.1} parent=91 // pred_check_branch
          %605 = sbr.rel (%p603) target = $region104
        $region103: #{tpu_custom_call.1} parent=91 // pred_region
          %606 = dma.done [#allocation6], 1024
        $region104: #{tpu_custom_call.1} parent=91 // pred_fallthru
          _
        // Predicated region
        $region105: #{tpu_custom_call.1} parent=91 // pred_check
          %p607 = pneg %p294
        $region106: #{tpu_custom_call.1} parent=91 // pred_check_branch
          %609 = sbr.rel (%p607) target = $region108
        $region107: #{tpu_custom_call.1} parent=91 // pred_region
          %610 = dma.done [#allocation9], 4096
        $region108: #{tpu_custom_call.1} parent=91 // pred_fallthru
          _
        // Predicated region
        $region109: #{tpu_custom_call.1} parent=91 // pred_check
          %p611 = pneg %p336
        $region110: #{tpu_custom_call.1} parent=91 // pred_check_branch
          %613 = sbr.rel (%p611) target = $region112
        $region111: #{tpu_custom_call.1} parent=91 // pred_region
          %614 = dma.done [#allocation9], 4096
        $region112: #{tpu_custom_call.1} parent=91 // pred_fallthru
          _
        %s615 = smul.u32 4, %s37
        %p616 = scmp.lt.s32.totalorder %s615, 7
        %s617 = scalar_select %p616, %s615, 7
        %s618 = scalar_lea.vmem %s0, %s617
        %p619 = pneg %p58
        %p620 = pneg %p55
        %s621 = sand.u32 %s71, 1
        %s622 = scalar_lea.sflag [#allocation3], %s621
        %s623 = sand.u32 %s71, 1
        %s624 = smul.addr %s623, 128
        %s625 = scalar_lea.vmem [#allocation2], %s624
        %p626 = pneg %p84
        %p627 = pneg %p81
        %p628 = pneg %p105
        %p629 = pneg %p102
        %p630 = pneg %p126
        %p631 = pneg %p123
        %p632 = pneg %p147
        %p633 = pneg %p144
        %p634 = pneg %p168
        %p635 = pneg %p165
        %p636 = pneg %p189
        %p637 = pneg %p186
        %p638 = pneg %p210
        %p639 = pneg %p207
        %p640 = pneg %p231
        %p641 = pneg %p228
        %p642 = pneg %p252
        %p643 = pneg %p249
        %p644 = pneg %p273
        %p645 = pneg %p270
        %p646 = pneg %p294
        %p647 = pneg %p291
        %p648 = pneg %p315
        %p649 = pneg %p312
        %p650 = pneg %p336
        %p651 = pneg %p333
        %p652 = pneg %p357
        %p653 = pneg %p354
        %p654 = pneg %p378
        %p655 = pneg %p375
        %p656 = pneg %p399
        %p657 = pneg %p396
        %p658 = pneg %p420
        %p659 = pneg %p417
        %p660 = pneg %p446
        %p661 = pneg %p443
        %s662 = sand.u32 %s433, 1
        %s663 = scalar_lea.sflag [#allocation4], %s662
        %s664 = sand.u32 %s433, 1
        %s665 = smul.addr %s664, 128
        %s666 = scalar_lea.vmem [#allocation11], %s665
        %s667 = smul.u32 4, %s37
        %p668 = scmp.lt.s32.totalorder %s667, 7
        %s669 = scalar_select %p668, %s667, 7
        %s670 = scalar_lea.vmem %s0, %s669
        %s671 = smul.u32 4, %s37
        %s672 = smul.u32 4, %s37
        %s673 = smul.u32 4, %s37
        %v675 = vld [vmem:[%s670] sm:$0x1]
        %v676 = vld [vmem:[%s670 + $0x1] sm:$0x1]
        %v677 = vld [vmem:[%s670 + $0x2] sm:$0x1]
        %v678 = vld [vmem:[%s670 + $0x3] sm:$0x1]
        %v679 = vunpack.c.l.bf16 %v675
        %v680 = vunpack.c.l.bf16 %v676
        %v681 = vunpack.c.l.bf16 %v677
        %v682 = vunpack.c.l.bf16 %v678
        %v683 = vld [vmem:[%s594] sm:$0xf]
        %v684 = vld [vmem:[%s594 + $0x4] sm:$0xf]
        %v685 = vld [vmem:[%s594 + $0x8] sm:$0xf]
        %v686 = vld [vmem:[%s594 + $0xc] sm:$0xf]
        %v687 = vld [vmem:[%s594 + $0x10] sm:$0xf]
        %v688 = vld [vmem:[%s594 + $0x14] sm:$0xf]
        %v689 = vld [vmem:[%s594 + $0x18] sm:$0xf]
        %v690 = vld [vmem:[%s594 + $0x1c] sm:$0xf]
        %v691 = vld [vmem:[%s594 + $0x20] sm:$0xf]
        %v692 = vld [vmem:[%s594 + $0x24] sm:$0xf]
        %v693 = vld [vmem:[%s594 + $0x28] sm:$0xf]
        %v694 = vld [vmem:[%s594 + $0x2c] sm:$0xf]
        %v695 = vld [vmem:[%s594 + $0x30] sm:$0xf]
        %v696 = vld [vmem:[%s594 + $0x34] sm:$0xf]
        %v697 = vld [vmem:[%s594 + $0x38] sm:$0xf]
        %v698 = vld [vmem:[%s594 + $0x3c] sm:$0xf]
        %v699 = vld [vmem:[%s594 + $0x40] sm:$0xf]
        %v700 = vld [vmem:[%s594 + $0x44] sm:$0xf]
        %v701 = vld [vmem:[%s594 + $0x48] sm:$0xf]
        %v702 = vld [vmem:[%s594 + $0x4c] sm:$0xf]
        %v703 = vld [vmem:[%s594 + $0x50] sm:$0xf]
        %v704 = vld [vmem:[%s594 + $0x54] sm:$0xf]
        %v705 = vld [vmem:[%s594 + $0x58] sm:$0xf]
        %v706 = vld [vmem:[%s594 + $0x5c] sm:$0xf]
        %v707 = vld [vmem:[%s594 + $0x60] sm:$0xf]
        %v708 = vld [vmem:[%s594 + $0x64] sm:$0xf]
        %v709 = vld [vmem:[%s594 + $0x68] sm:$0xf]
        %v710 = vld [vmem:[%s594 + $0x6c] sm:$0xf]
        %v711 = vld [vmem:[%s594 + $0x70] sm:$0xf]
        %v712 = vld [vmem:[%s594 + $0x74] sm:$0xf]
        %v713 = vld [vmem:[%s594 + $0x78] sm:$0xf]
        %v714 = vld [vmem:[%s594 + $0x7c] sm:$0xf]
        %v715 = vunpack.c.l.bf16 %v683
        %v716 = vunpack.c.l.bf16 %v684
        %v717 = vunpack.c.l.bf16 %v685
        %v718 = vunpack.c.l.bf16 %v686
        %v719 = vunpack.c.l.bf16 %v687
        %v720 = vunpack.c.l.bf16 %v688
        %v721 = vunpack.c.l.bf16 %v689
        %v722 = vunpack.c.l.bf16 %v690
        %v723 = vunpack.c.l.bf16 %v691
        %v724 = vunpack.c.l.bf16 %v692
        %v725 = vunpack.c.l.bf16 %v693
        %v726 = vunpack.c.l.bf16 %v694
        %v727 = vunpack.c.l.bf16 %v695
        %v728 = vunpack.c.l.bf16 %v696
        %v729 = vunpack.c.l.bf16 %v697
        %v730 = vunpack.c.l.bf16 %v698
        %v731 = vunpack.c.l.bf16 %v699
        %v732 = vunpack.c.l.bf16 %v700
        %v733 = vunpack.c.l.bf16 %v701
        %v734 = vunpack.c.l.bf16 %v702
        %v735 = vunpack.c.l.bf16 %v703
        %v736 = vunpack.c.l.bf16 %v704
        %v737 = vunpack.c.l.bf16 %v705
        %v738 = vunpack.c.l.bf16 %v706
        %v739 = vunpack.c.l.bf16 %v707
        %v740 = vunpack.c.l.bf16 %v708
        %v741 = vunpack.c.l.bf16 %v709
        %v742 = vunpack.c.l.bf16 %v710
        %v743 = vunpack.c.l.bf16 %v711
        %v744 = vunpack.c.l.bf16 %v712
        %v745 = vunpack.c.l.bf16 %v713
        %v746 = vunpack.c.l.bf16 %v714
        %v747 = vld [vmem:[%s2] sm:$0x1]
        %v748 = vld [vmem:[%s3] sm:$0x1]
        %v753 = vlaneseq
        %v754 = vshrl.u32 %v753, 7
        %v755 = vsub.s32 0, %v754
        %v756 = vrot.slane %v679, %v755
        %v757 = vlaneseq
        %v758 = vshrl.u32 %v757, 7
        %v759 = vsub.s32 0, %v758
        %v760 = vrot.slane %v680, %v759
        %v761 = vlaneseq
        %v762 = vshrl.u32 %v761, 7
        %v763 = vsub.s32 0, %v762
        %v764 = vrot.slane %v681, %v763
        %v765 = vlaneseq
        %v766 = vshrl.u32 %v765, 7
        %v767 = vsub.s32 0, %v766
        %v768 = vrot.slane %v682, %v767
        %vm769 = vcmask 1041409
        %v770 = vsel %vm769, %v760, %v756
        %vm771 = vcmask 1042434
        %v772 = vsel %vm771, %v764, %v770
        %vm773 = vcmask 1043459
        %v774 = vsel %vm773, %v768, %v772
        %vm776 = vcmask 1043456
        %v777 = vsel %vm776, %v774, 0.0
        %778 = vadd.xlane.f32.xlu0 %v777
        %v779 = vpop.xlane.xlu0 %778
        %v780 = vrcp.pop 128.0
        %v781 = vmul.f32 %v779, %v780
        %v784 = vunpack.c.l.s4 269488144
        %v785 = vunpack.c.0.s8 %v784
        %v786 = vlaneseq
        %v787 = vshrl.u32 %v786, 7
        %v788 = vsub.s32 %v785, %v787
        %v789 = vrot.slane %v781, %v788
        %v791 = vunpack.c.l.s4 842150450
        %v792 = vunpack.c.0.s8 %v791
        %v793 = vlaneseq
        %v794 = vshrl.u32 %v793, 7
        %v795 = vsub.s32 %v792, %v794
        %v796 = vrot.slane %v781, %v795
        %v797 = vrot.slane %v789, 1
        %v798 = vrot.slane %v796, 1
        %v803 = vsub.f32 %v679, %v789
        %v804 = vsub.f32 %v680, %v797
        %v805 = vsub.f32 %v681, %v796
        %v806 = vsub.f32 %v682, %v798
        %v807 = vmul.f32 %v803, %v803
        %v808 = vmul.f32 %v804, %v804
        %v809 = vmul.f32 %v805, %v805
        %v810 = vmul.f32 %v806, %v806
        %v815 = vlaneseq
        %v816 = vshrl.u32 %v815, 7
        %v817 = vsub.s32 0, %v816
        %v818 = vrot.slane %v807, %v817
        %v819 = vlaneseq
        %v820 = vshrl.u32 %v819, 7
        %v821 = vsub.s32 0, %v820
        %v822 = vrot.slane %v808, %v821
        %v823 = vlaneseq
        %v824 = vshrl.u32 %v823, 7
        %v825 = vsub.s32 0, %v824
        %v826 = vrot.slane %v809, %v825
        %v827 = vlaneseq
        %v828 = vshrl.u32 %v827, 7
        %v829 = vsub.s32 0, %v828
        %v830 = vrot.slane %v810, %v829
        %v831 = vsel %vm769, %v822, %v818
        %v832 = vsel %vm771, %v826, %v831
        %v833 = vsel %vm773, %v830, %v832
        %v835 = vsel %vm776, %v833, 0.0
        %836 = vadd.xlane.f32.xlu0 %v835
        %v837 = vpop.xlane.xlu0 %836
        %v838 = vmul.f32 %v837, %v780
        %v839 = vadd.f32 %v838, 1e-05
        %v840 = vrsqrt.pop %v839
        %v843 = vunpack.c.l.s4 269488144
        %v844 = vunpack.c.0.s8 %v843
        %v845 = vlaneseq
        %v846 = vshrl.u32 %v845, 7
        %v847 = vsub.s32 %v844, %v846
        %v848 = vrot.slane %v840, %v847
        %v850 = vunpack.c.l.s4 842150450
        %v851 = vunpack.c.0.s8 %v850
        %v852 = vlaneseq
        %v853 = vshrl.u32 %v852, 7
        %v854 = vsub.s32 %v851, %v853
        %v855 = vrot.slane %v840, %v854
        %v856 = vrot.slane %v848, 1
        %v857 = vrot.slane %v855, 1
        %v862 = vmul.f32 %v803, %v848
        %v863 = vmul.f32 %v804, %v856
        %v864 = vmul.f32 %v805, %v855
        %v865 = vmul.f32 %v806, %v857
        %v867 = vlaneseq
        %v868 = vshrl.u32 %v867, 7
        %v869 = vsub.s32 0, %v868
        %v870 = vrot.slane %v747, %v869
        %v872 = vunpack.c.l.s4 1983009808
        %v873 = vunpack.c.0.s8 %v872
        %v874 = vlaneseq
        %v875 = vshrl.u32 %v874, 7
        %v876 = vsub.s32 %v873, %v875
        %v877 = vrot.slane %v870, %v876
        %v878 = vcombine.high %v877, %v877
        %v879 = vrot.slane %v877, 1
        %v880 = vrot.slane %v878, 1
        %v885 = vmul.f32 %v862, %v877
        %v886 = vmul.f32 %v863, %v879
        %v887 = vmul.f32 %v864, %v878
        %v888 = vmul.f32 %v865, %v880
        %v890 = vlaneseq
        %v891 = vshrl.u32 %v890, 7
        %v892 = vsub.s32 0, %v891
        %v893 = vrot.slane %v748, %v892
        %v895 = vunpack.c.l.s4 1983009808
        %v896 = vunpack.c.0.s8 %v895
        %v897 = vlaneseq
        %v898 = vshrl.u32 %v897, 7
        %v899 = vsub.s32 %v896, %v898
        %v900 = vrot.slane %v893, %v899
        %v901 = vcombine.high %v900, %v900
        %v902 = vrot.slane %v900, 1
        %v903 = vrot.slane %v901, 1
        %v908 = vadd.f32 %v885, %v900
        %v909 = vadd.f32 %v886, %v902
        %v910 = vadd.f32 %v887, %v901
        %v911 = vadd.f32 %v888, %v903
        %912 = vadd.xlane.f32.xlu0 %v715
        %v913 = vpop.xlane.xlu0 %912
        %914 = vadd.xlane.f32.xlu0 %v716
        %v915 = vpop.xlane.xlu0 %914
        %916 = vadd.xlane.f32.xlu0 %v717
        %v917 = vpop.xlane.xlu0 %916
        %918 = vadd.xlane.f32.xlu0 %v718
        %v919 = vpop.xlane.xlu0 %918
        %920 = vadd.xlane.f32.xlu0 %v719
        %v921 = vpop.xlane.xlu0 %920
        %922 = vadd.xlane.f32.xlu0 %v720
        %v923 = vpop.xlane.xlu0 %922
        %924 = vadd.xlane.f32.xlu0 %v721
        %v925 = vpop.xlane.xlu0 %924
        %926 = vadd.xlane.f32.xlu0 %v722
        %v927 = vpop.xlane.xlu0 %926
        %928 = vadd.xlane.f32.xlu0 %v723
        %v929 = vpop.xlane.xlu0 %928
        %930 = vadd.xlane.f32.xlu0 %v724
        %v931 = vpop.xlane.xlu0 %930
        %932 = vadd.xlane.f32.xlu0 %v725
        %v933 = vpop.xlane.xlu0 %932
        %934 = vadd.xlane.f32.xlu0 %v726
        %v935 = vpop.xlane.xlu0 %934
        %936 = vadd.xlane.f32.xlu0 %v727
        %v937 = vpop.xlane.xlu0 %936
        %938 = vadd.xlane.f32.xlu0 %v728
        %v939 = vpop.xlane.xlu0 %938
        %940 = vadd.xlane.f32.xlu0 %v729
        %v941 = vpop.xlane.xlu0 %940
        %942 = vadd.xlane.f32.xlu0 %v730
        %v943 = vpop.xlane.xlu0 %942
        %944 = vadd.xlane.f32.xlu0 %v731
        %v945 = vpop.xlane.xlu0 %944
        %946 = vadd.xlane.f32.xlu0 %v732
        %v947 = vpop.xlane.xlu0 %946
        %948 = vadd.xlane.f32.xlu0 %v733
        %v949 = vpop.xlane.xlu0 %948
        %950 = vadd.xlane.f32.xlu0 %v734
        %v951 = vpop.xlane.xlu0 %950
        %952 = vadd.xlane.f32.xlu0 %v735
        %v953 = vpop.xlane.xlu0 %952
        %954 = vadd.xlane.f32.xlu0 %v736
        %v955 = vpop.xlane.xlu0 %954
        %956 = vadd.xlane.f32.xlu0 %v737
        %v957 = vpop.xlane.xlu0 %956
        %958 = vadd.xlane.f32.xlu0 %v738
        %v959 = vpop.xlane.xlu0 %958
        %960 = vadd.xlane.f32.xlu0 %v739
        %v961 = vpop.xlane.xlu0 %960
        %962 = vadd.xlane.f32.xlu0 %v740
        %v963 = vpop.xlane.xlu0 %962
        %964 = vadd.xlane.f32.xlu0 %v741
        %v965 = vpop.xlane.xlu0 %964
        %966 = vadd.xlane.f32.xlu0 %v742
        %v967 = vpop.xlane.xlu0 %966
        %968 = vadd.xlane.f32.xlu0 %v743
        %v969 = vpop.xlane.xlu0 %968
        %970 = vadd.xlane.f32.xlu0 %v744
        %v971 = vpop.xlane.xlu0 %970
        %972 = vadd.xlane.f32.xlu0 %v745
        %v973 = vpop.xlane.xlu0 %972
        %974 = vadd.xlane.f32.xlu0 %v746
        %v975 = vpop.xlane.xlu0 %974
        %v976 = vmul.f32 %v913, %v780
        %v977 = vmul.f32 %v915, %v780
        %v978 = vmul.f32 %v917, %v780
        %v979 = vmul.f32 %v919, %v780
        %v980 = vmul.f32 %v921, %v780
        %v981 = vmul.f32 %v923, %v780
        %v982 = vmul.f32 %v925, %v780
        %v983 = vmul.f32 %v927, %v780
        %v984 = vmul.f32 %v929, %v780
        %v985 = vmul.f32 %v931, %v780
        %v986 = vmul.f32 %v933, %v780
        %v987 = vmul.f32 %v935, %v780
        %v988 = vmul.f32 %v937, %v780
        %v989 = vmul.f32 %v939, %v780
        %v990 = vmul.f32 %v941, %v780
        %v991 = vmul.f32 %v943, %v780
        %v992 = vmul.f32 %v945, %v780
        %v993 = vmul.f32 %v947, %v780
        %v994 = vmul.f32 %v949, %v780
        %v995 = vmul.f32 %v951, %v780
        %v996 = vmul.f32 %v953, %v780
        %v997 = vmul.f32 %v955, %v780
        %v998 = vmul.f32 %v957, %v780
        %v999 = vmul.f32 %v959, %v780
        %v1000 = vmul.f32 %v961, %v780
        %v1001 = vmul.f32 %v963, %v780
        %v1002 = vmul.f32 %v965, %v780
        %v1003 = vmul.f32 %v967, %v780
        %v1004 = vmul.f32 %v969, %v780
        %v1005 = vmul.f32 %v971, %v780
        %v1006 = vmul.f32 %v973, %v780
        %v1007 = vmul.f32 %v975, %v780
        %v1008 = vsub.f32 %v715, %v976
        %v1009 = vsub.f32 %v716, %v977
        %v1010 = vsub.f32 %v717, %v978
        %v1011 = vsub.f32 %v718, %v979
        %v1012 = vsub.f32 %v719, %v980
        %v1013 = vsub.f32 %v720, %v981
        %v1014 = vsub.f32 %v721, %v982
        %v1015 = vsub.f32 %v722, %v983
        %v1016 = vsub.f32 %v723, %v984
        %v1017 = vsub.f32 %v724, %v985
        %v1018 = vsub.f32 %v725, %v986
        %v1019 = vsub.f32 %v726, %v987
        %v1020 = vsub.f32 %v727, %v988
        %v1021 = vsub.f32 %v728, %v989
        %v1022 = vsub.f32 %v729, %v990
        %v1023 = vsub.f32 %v730, %v991
        %v1024 = vsub.f32 %v731, %v992
        %v1025 = vsub.f32 %v732, %v993
        %v1026 = vsub.f32 %v733, %v994
        %v1027 = vsub.f32 %v734, %v995
        %v1028 = vsub.f32 %v735, %v996
        %v1029 = vsub.f32 %v736, %v997
        %v1030 = vsub.f32 %v737, %v998
        %v1031 = vsub.f32 %v738, %v999
        %v1032 = vsub.f32 %v739, %v1000
        %v1033 = vsub.f32 %v740, %v1001
        %v1034 = vsub.f32 %v741, %v1002
        %v1035 = vsub.f32 %v742, %v1003
        %v1036 = vsub.f32 %v743, %v1004
        %v1037 = vsub.f32 %v744, %v1005
        %v1038 = vsub.f32 %v745, %v1006
        %v1039 = vsub.f32 %v746, %v1007
        %v1040 = vmul.f32 %v1008, %v1008
        %v1041 = vmul.f32 %v1009, %v1009
        %v1042 = vmul.f32 %v1010, %v1010
        %v1043 = vmul.f32 %v1011, %v1011
        %v1044 = vmul.f32 %v1012, %v1012
        %v1045 = vmul.f32 %v1013, %v1013
        %v1046 = vmul.f32 %v1014, %v1014
        %v1047 = vmul.f32 %v1015, %v1015
        %v1048 = vmul.f32 %v1016, %v1016
        %v1049 = vmul.f32 %v1017, %v1017
        %v1050 = vmul.f32 %v1018, %v1018
        %v1051 = vmul.f32 %v1019, %v1019
        %v1052 = vmul.f32 %v1020, %v1020
        %v1053 = vmul.f32 %v1021, %v1021
        %v1054 = vmul.f32 %v1022, %v1022
        %v1055 = vmul.f32 %v1023, %v1023
        %v1056 = vmul.f32 %v1024, %v1024
        %v1057 = vmul.f32 %v1025, %v1025
        %v1058 = vmul.f32 %v1026, %v1026
        %v1059 = vmul.f32 %v1027, %v1027
        %v1060 = vmul.f32 %v1028, %v1028
        %v1061 = vmul.f32 %v1029, %v1029
        %v1062 = vmul.f32 %v1030, %v1030
        %v1063 = vmul.f32 %v1031, %v1031
        %v1064 = vmul.f32 %v1032, %v1032
        %v1065 = vmul.f32 %v1033, %v1033
        %v1066 = vmul.f32 %v1034, %v1034
        %v1067 = vmul.f32 %v1035, %v1035
        %v1068 = vmul.f32 %v1036, %v1036
        %v1069 = vmul.f32 %v1037, %v1037
        %v1070 = vmul.f32 %v1038, %v1038
        %v1071 = vmul.f32 %v1039, %v1039
        %1072 = vadd.xlane.f32.xlu0 %v1040
        %v1073 = vpop.xlane.xlu0 %1072
        %1074 = vadd.xlane.f32.xlu0 %v1041
        %v1075 = vpop.xlane.xlu0 %1074
        %1076 = vadd.xlane.f32.xlu0 %v1042
        %v1077 = vpop.xlane.xlu0 %1076
        %1078 = vadd.xlane.f32.xlu0 %v1043
        %v1079 = vpop.xlane.xlu0 %1078
        %1080 = vadd.xlane.f32.xlu0 %v1044
        %v1081 = vpop.xlane.xlu0 %1080
        %1082 = vadd.xlane.f32.xlu0 %v1045
        %v1083 = vpop.xlane.xlu0 %1082
        %1084 = vadd.xlane.f32.xlu0 %v1046
        %v1085 = vpop.xlane.xlu0 %1084
        %1086 = vadd.xlane.f32.xlu0 %v1047
        %v1087 = vpop.xlane.xlu0 %1086
        %1088 = vadd.xlane.f32.xlu0 %v1048
        %v1089 = vpop.xlane.xlu0 %1088
        %1090 = vadd.xlane.f32.xlu0 %v1049
        %v1091 = vpop.xlane.xlu0 %1090
        %1092 = vadd.xlane.f32.xlu0 %v1050
        %v1093 = vpop.xlane.xlu0 %1092
        %1094 = vadd.xlane.f32.xlu0 %v1051
        %v1095 = vpop.xlane.xlu0 %1094
        %1096 = vadd.xlane.f32.xlu0 %v1052
        %v1097 = vpop.xlane.xlu0 %1096
        %1098 = vadd.xlane.f32.xlu0 %v1053
        %v1099 = vpop.xlane.xlu0 %1098
        %1100 = vadd.xlane.f32.xlu0 %v1054
        %v1101 = vpop.xlane.xlu0 %1100
        %1102 = vadd.xlane.f32.xlu0 %v1055
        %v1103 = vpop.xlane.xlu0 %1102
        %1104 = vadd.xlane.f32.xlu0 %v1056
        %v1105 = vpop.xlane.xlu0 %1104
        %1106 = vadd.xlane.f32.xlu0 %v1057
        %v1107 = vpop.xlane.xlu0 %1106
        %1108 = vadd.xlane.f32.xlu0 %v1058
        %v1109 = vpop.xlane.xlu0 %1108
        %1110 = vadd.xlane.f32.xlu0 %v1059
        %v1111 = vpop.xlane.xlu0 %1110
        %1112 = vadd.xlane.f32.xlu0 %v1060
        %v1113 = vpop.xlane.xlu0 %1112
        %1114 = vadd.xlane.f32.xlu0 %v1061
        %v1115 = vpop.xlane.xlu0 %1114
        %1116 = vadd.xlane.f32.xlu0 %v1062
        %v1117 = vpop.xlane.xlu0 %1116
        %1118 = vadd.xlane.f32.xlu0 %v1063
        %v1119 = vpop.xlane.xlu0 %1118
        %1120 = vadd.xlane.f32.xlu0 %v1064
        %v1121 = vpop.xlane.xlu0 %1120
        %1122 = vadd.xlane.f32.xlu0 %v1065
        %v1123 = vpop.xlane.xlu0 %1122
        %1124 = vadd.xlane.f32.xlu0 %v1066
        %v1125 = vpop.xlane.xlu0 %1124
        %1126 = vadd.xlane.f32.xlu0 %v1067
        %v1127 = vpop.xlane.xlu0 %1126
        %1128 = vadd.xlane.f32.xlu0 %v1068
        %v1129 = vpop.xlane.xlu0 %1128
        %1130 = vadd.xlane.f32.xlu0 %v1069
        %v1131 = vpop.xlane.xlu0 %1130
        %1132 = vadd.xlane.f32.xlu0 %v1070
        %v1133 = vpop.xlane.xlu0 %1132
        %1134 = vadd.xlane.f32.xlu0 %v1071
        %v1135 = vpop.xlane.xlu0 %1134
        %v1136 = vmul.f32 %v1073, %v780
        %v1137 = vmul.f32 %v1075, %v780
        %v1138 = vmul.f32 %v1077, %v780
        %v1139 = vmul.f32 %v1079, %v780
        %v1140 = vmul.f32 %v1081, %v780
        %v1141 = vmul.f32 %v1083, %v780
        %v1142 = vmul.f32 %v1085, %v780
        %v1143 = vmul.f32 %v1087, %v780
        %v1144 = vmul.f32 %v1089, %v780
        %v1145 = vmul.f32 %v1091, %v780
        %v1146 = vmul.f32 %v1093, %v780
        %v1147 = vmul.f32 %v1095, %v780
        %v1148 = vmul.f32 %v1097, %v780
        %v1149 = vmul.f32 %v1099, %v780
        %v1150 = vmul.f32 %v1101, %v780
        %v1151 = vmul.f32 %v1103, %v780
        %v1152 = vmul.f32 %v1105, %v780
        %v1153 = vmul.f32 %v1107, %v780
        %v1154 = vmul.f32 %v1109, %v780
        %v1155 = vmul.f32 %v1111, %v780
        %v1156 = vmul.f32 %v1113, %v780
        %v1157 = vmul.f32 %v1115, %v780
        %v1158 = vmul.f32 %v1117, %v780
        %v1159 = vmul.f32 %v1119, %v780
        %v1160 = vmul.f32 %v1121, %v780
        %v1161 = vmul.f32 %v1123, %v780
        %v1162 = vmul.f32 %v1125, %v780
        %v1163 = vmul.f32 %v1127, %v780
        %v1164 = vmul.f32 %v1129, %v780
        %v1165 = vmul.f32 %v1131, %v780
        %v1166 = vmul.f32 %v1133, %v780
        %v1167 = vmul.f32 %v1135, %v780
        %v1168 = vadd.f32 %v1136, 1e-05
        %v1169 = vadd.f32 %v1137, 1e-05
        %v1170 = vadd.f32 %v1138, 1e-05
        %v1171 = vadd.f32 %v1139, 1e-05
        %v1172 = vadd.f32 %v1140, 1e-05
        %v1173 = vadd.f32 %v1141, 1e-05
        %v1174 = vadd.f32 %v1142, 1e-05
        %v1175 = vadd.f32 %v1143, 1e-05
        %v1176 = vadd.f32 %v1144, 1e-05
        %v1177 = vadd.f32 %v1145, 1e-05
        %v1178 = vadd.f32 %v1146, 1e-05
        %v1179 = vadd.f32 %v1147, 1e-05
        %v1180 = vadd.f32 %v1148, 1e-05
        %v1181 = vadd.f32 %v1149, 1e-05
        %v1182 = vadd.f32 %v1150, 1e-05
        %v1183 = vadd.f32 %v1151, 1e-05
        %v1184 = vadd.f32 %v1152, 1e-05
        %v1185 = vadd.f32 %v1153, 1e-05
        %v1186 = vadd.f32 %v1154, 1e-05
        %v1187 = vadd.f32 %v1155, 1e-05
        %v1188 = vadd.f32 %v1156, 1e-05
        %v1189 = vadd.f32 %v1157, 1e-05
        %v1190 = vadd.f32 %v1158, 1e-05
        %v1191 = vadd.f32 %v1159, 1e-05
        %v1192 = vadd.f32 %v1160, 1e-05
        %v1193 = vadd.f32 %v1161, 1e-05
        %v1194 = vadd.f32 %v1162, 1e-05
        %v1195 = vadd.f32 %v1163, 1e-05
        %v1196 = vadd.f32 %v1164, 1e-05
        %v1197 = vadd.f32 %v1165, 1e-05
        %v1198 = vadd.f32 %v1166, 1e-05
        %v1199 = vadd.f32 %v1167, 1e-05
        %v1200 = vrsqrt.pop %v1168
        %v1201 = vrsqrt.pop %v1169
        %v1202 = vrsqrt.pop %v1170
        %v1203 = vrsqrt.pop %v1171
        %v1204 = vrsqrt.pop %v1172
        %v1205 = vrsqrt.pop %v1173
        %v1206 = vrsqrt.pop %v1174
        %v1207 = vrsqrt.pop %v1175
        %v1208 = vrsqrt.pop %v1176
        %v1209 = vrsqrt.pop %v1177
        %v1210 = vrsqrt.pop %v1178
        %v1211 = vrsqrt.pop %v1179
        %v1212 = vrsqrt.pop %v1180
        %v1213 = vrsqrt.pop %v1181
        %v1214 = vrsqrt.pop %v1182
        %v1215 = vrsqrt.pop %v1183
        %v1216 = vrsqrt.pop %v1184
        %v1217 = vrsqrt.pop %v1185
        %v1218 = vrsqrt.pop %v1186
        %v1219 = vrsqrt.pop %v1187
        %v1220 = vrsqrt.pop %v1188
        %v1221 = vrsqrt.pop %v1189
        %v1222 = vrsqrt.pop %v1190
        %v1223 = vrsqrt.pop %v1191
        %v1224 = vrsqrt.pop %v1192
        %v1225 = vrsqrt.pop %v1193
        %v1226 = vrsqrt.pop %v1194
        %v1227 = vrsqrt.pop %v1195
        %v1228 = vrsqrt.pop %v1196
        %v1229 = vrsqrt.pop %v1197
        %v1230 = vrsqrt.pop %v1198
        %v1231 = vrsqrt.pop %v1199
        %v1232 = vmul.f32 %v1008, %v1200
        %v1233 = vmul.f32 %v1009, %v1201
        %v1234 = vmul.f32 %v1010, %v1202
        %v1235 = vmul.f32 %v1011, %v1203
        %v1236 = vmul.f32 %v1012, %v1204
        %v1237 = vmul.f32 %v1013, %v1205
        %v1238 = vmul.f32 %v1014, %v1206
        %v1239 = vmul.f32 %v1015, %v1207
        %v1240 = vmul.f32 %v1016, %v1208
        %v1241 = vmul.f32 %v1017, %v1209
        %v1242 = vmul.f32 %v1018, %v1210
        %v1243 = vmul.f32 %v1019, %v1211
        %v1244 = vmul.f32 %v1020, %v1212
        %v1245 = vmul.f32 %v1021, %v1213
        %v1246 = vmul.f32 %v1022, %v1214
        %v1247 = vmul.f32 %v1023, %v1215
        %v1248 = vmul.f32 %v1024, %v1216
        %v1249 = vmul.f32 %v1025, %v1217
        %v1250 = vmul.f32 %v1026, %v1218
        %v1251 = vmul.f32 %v1027, %v1219
        %v1252 = vmul.f32 %v1028, %v1220
        %v1253 = vmul.f32 %v1029, %v1221
        %v1254 = vmul.f32 %v1030, %v1222
        %v1255 = vmul.f32 %v1031, %v1223
        %v1256 = vmul.f32 %v1032, %v1224
        %v1257 = vmul.f32 %v1033, %v1225
        %v1258 = vmul.f32 %v1034, %v1226
        %v1259 = vmul.f32 %v1035, %v1227
        %v1260 = vmul.f32 %v1036, %v1228
        %v1261 = vmul.f32 %v1037, %v1229
        %v1262 = vmul.f32 %v1038, %v1230
        %v1263 = vmul.f32 %v1039, %v1231
        %v1265 = vmul.f32 %v1232, %v870
        %v1266 = vmul.f32 %v1233, %v870
        %v1267 = vmul.f32 %v1234, %v870
        %v1268 = vmul.f32 %v1235, %v870
        %v1269 = vmul.f32 %v1236, %v870
        %v1270 = vmul.f32 %v1237, %v870
        %v1271 = vmul.f32 %v1238, %v870
        %v1272 = vmul.f32 %v1239, %v870
        %v1273 = vmul.f32 %v1240, %v870
        %v1274 = vmul.f32 %v1241, %v870
        %v1275 = vmul.f32 %v1242, %v870
        %v1276 = vmul.f32 %v1243, %v870
        %v1277 = vmul.f32 %v1244, %v870
        %v1278 = vmul.f32 %v1245, %v870
        %v1279 = vmul.f32 %v1246, %v870
        %v1280 = vmul.f32 %v1247, %v870
        %v1281 = vmul.f32 %v1248, %v870
        %v1282 = vmul.f32 %v1249, %v870
        %v1283 = vmul.f32 %v1250, %v870
        %v1284 = vmul.f32 %v1251, %v870
        %v1285 = vmul.f32 %v1252, %v870
        %v1286 = vmul.f32 %v1253, %v870
        %v1287 = vmul.f32 %v1254, %v870
        %v1288 = vmul.f32 %v1255, %v870
        %v1289 = vmul.f32 %v1256, %v870
        %v1290 = vmul.f32 %v1257, %v870
        %v1291 = vmul.f32 %v1258, %v870
        %v1292 = vmul.f32 %v1259, %v870
        %v1293 = vmul.f32 %v1260, %v870
        %v1294 = vmul.f32 %v1261, %v870
        %v1295 = vmul.f32 %v1262, %v870
        %v1296 = vmul.f32 %v1263, %v870
        %v1298 = vadd.f32 %v1265, %v893
        %v1299 = vadd.f32 %v1266, %v893
        %v1300 = vadd.f32 %v1267, %v893
        %v1301 = vadd.f32 %v1268, %v893
        %v1302 = vadd.f32 %v1269, %v893
        %v1303 = vadd.f32 %v1270, %v893
        %v1304 = vadd.f32 %v1271, %v893
        %v1305 = vadd.f32 %v1272, %v893
        %v1306 = vadd.f32 %v1273, %v893
        %v1307 = vadd.f32 %v1274, %v893
        %v1308 = vadd.f32 %v1275, %v893
        %v1309 = vadd.f32 %v1276, %v893
        %v1310 = vadd.f32 %v1277, %v893
        %v1311 = vadd.f32 %v1278, %v893
        %v1312 = vadd.f32 %v1279, %v893
        %v1313 = vadd.f32 %v1280, %v893
        %v1314 = vadd.f32 %v1281, %v893
        %v1315 = vadd.f32 %v1282, %v893
        %v1316 = vadd.f32 %v1283, %v893
        %v1317 = vadd.f32 %v1284, %v893
        %v1318 = vadd.f32 %v1285, %v893
        %v1319 = vadd.f32 %v1286, %v893
        %v1320 = vadd.f32 %v1287, %v893
        %v1321 = vadd.f32 %v1288, %v893
        %v1322 = vadd.f32 %v1289, %v893
        %v1323 = vadd.f32 %v1290, %v893
        %v1324 = vadd.f32 %v1291, %v893
        %v1325 = vadd.f32 %v1292, %v893
        %v1326 = vadd.f32 %v1293, %v893
        %v1327 = vadd.f32 %v1294, %v893
        %v1328 = vadd.f32 %v1295, %v893
        %v1329 = vadd.f32 %v1296, %v893
        %v1330 = vpack.c.bf16 %v908, %v908
        %v1331 = vpack.c.bf16 %v909, %v909
        %v1332 = vpack.c.bf16 %v910, %v910
        %v1333 = vpack.c.bf16 %v911, %v911
        %v1334 = vld [vmem:[%s4] sm:$0xf]
        %v1335 = vld [vmem:[%s4 + $0x4] sm:$0xf]
        %v1336 = vld [vmem:[%s4 + $0x8] sm:$0xf]
        %v1337 = vld [vmem:[%s4 + $0xc] sm:$0xf]
        %v1338 = vld [vmem:[%s4 + $0x10] sm:$0xf]
        %v1339 = vld [vmem:[%s4 + $0x14] sm:$0xf]
        %v1340 = vld [vmem:[%s4 + $0x18] sm:$0xf]
        %v1341 = vld [vmem:[%s4 + $0x1c] sm:$0xf]
        %v1342 = vld [vmem:[%s4 + $0x20] sm:$0xf]
        %v1343 = vld [vmem:[%s4 + $0x24] sm:$0xf]
        %v1344 = vld [vmem:[%s4 + $0x28] sm:$0xf]
        %v1345 = vld [vmem:[%s4 + $0x2c] sm:$0xf]
        %v1346 = vld [vmem:[%s4 + $0x30] sm:$0xf]
        %v1347 = vld [vmem:[%s4 + $0x34] sm:$0xf]
        %v1348 = vld [vmem:[%s4 + $0x38] sm:$0xf]
        %v1349 = vld [vmem:[%s4 + $0x3c] sm:$0xf]
        %v1354 = vunpack.c.l.b16 %v1330
        %v1355 = vunpack.c.l.b16 %v1331
        %v1356 = vunpack.c.l.b16 %v1332
        %v1357 = vunpack.c.l.b16 %v1333
        %v1358 = vrot.slane %v1355, 7
        %v1359 = vsel %vm769, %v1358, %v1354
        %v1360 = vrot.slane %v1356, 6
        %v1361 = vsel %vm771, %v1360, %v1359
        %v1362 = vrot.slane %v1357, 5
        %v1363 = vsel %vm773, %v1362, %v1361
        %v1364 = vpack.c.b16 %v1363, %v1363
        %v1382 = vunpack.c.l.b16 %v1334
        %v1383 = vunpack.c.l.b16 %v1335
        %v1384 = vunpack.c.l.b16 %v1336
        %v1385 = vunpack.c.l.b16 %v1337
        %v1386 = vunpack.c.l.b16 %v1338
        %v1387 = vunpack.c.l.b16 %v1339
        %v1388 = vunpack.c.l.b16 %v1340
        %v1389 = vunpack.c.l.b16 %v1341
        %v1390 = vunpack.c.l.b16 %v1342
        %v1391 = vunpack.c.l.b16 %v1343
        %v1392 = vunpack.c.l.b16 %v1344
        %v1393 = vunpack.c.l.b16 %v1345
        %v1394 = vunpack.c.l.b16 %v1346
        %v1395 = vunpack.c.l.b16 %v1347
        %v1396 = vunpack.c.l.b16 %v1348
        %v1397 = vunpack.c.l.b16 %v1349
        %v1398 = vpack.c.b16 %v1383, %v1382
        %v1399 = vpack.c.b16 %v1385, %v1384
        %v1400 = vpack.c.b16 %v1387, %v1386
        %v1401 = vpack.c.b16 %v1389, %v1388
        %v1402 = vpack.c.b16 %v1391, %v1390
        %v1403 = vpack.c.b16 %v1393, %v1392
        %v1404 = vpack.c.b16 %v1395, %v1394
        %v1405 = vpack.c.b16 %v1397, %v1396
        %1414 = vmatprep.subr.bf16.mxu0 0
        %1415 = vmatpush1.bf16.msra.mxu0 %v1398
        %1416 = vmatprep.subr.bf16.mxu0 0
        %1417 = vmatpush1.bf16.msra.mxu0 %v1399
        %1418 = vmatprep.subr.bf16.mxu0 0
        %1419 = vmatpush1.bf16.msra.mxu0 %v1400
        %1420 = vmatprep.subr.bf16.mxu0 0
        %1421 = vmatpush1.bf16.msra.mxu0 %v1401
        %1422 = vmatprep.subr.bf16.mxu0 0
        %1423 = vmatpush1.bf16.msra.mxu0 %v1402
        %1424 = vmatprep.subr.bf16.mxu0 0
        %1425 = vmatpush1.bf16.msra.mxu0 %v1403
        %1426 = vmatprep.subr.bf16.mxu0 0
        %1427 = vmatpush1.bf16.msra.mxu0 %v1404
        %1428 = vmatprep.subr.bf16.mxu0 0
        %1429 = vmatpush1.bf16.msra.mxu0 %v1405
        %1430 = vmatprep.subr.bf16.mxu0 0
        %1431 = vmatpush1.bf16.msra.mxu0 0
        %1432 = vmatprep.subr.bf16.mxu0 0
        %1433 = vmatpush1.bf16.msra.mxu0 0
        %1434 = vmatprep.subr.bf16.mxu0 0
        %1435 = vmatpush1.bf16.msra.mxu0 0
        %1436 = vmatprep.subr.bf16.mxu0 0
        %1437 = vmatpush1.bf16.msra.mxu0 0
        %1438 = vmatprep.subr.bf16.mxu0 0
        %1439 = vmatpush1.bf16.msra.mxu0 0
        %1440 = vmatprep.subr.bf16.mxu0 0
        %1441 = vmatpush1.bf16.msra.mxu0 0
        %1442 = vmatprep.subr.bf16.mxu0 0
        %1443 = vmatpush1.bf16.msra.mxu0 0
        %1444 = vmatprep.subr.bf16.mxu0 0
        %1445 = vmatpush1.bf16.msra.mxu0 0
        %1446 = vmatprep.mubr.bf16.mxu0 0
        %1447 = vmatmul.mubr.bf16.gmra.mrb[0].mxu0 %v1364
        %v1448 = vpop.f32.mrb[0].mxu0
        %v1449 = vadd.f32 0.0, %v1448
        %v1450 = vpop.f32.mrb[0].mxu0
        %v1451 = vpop.f32.mrb[0].mxu0
        %v1452 = vpop.f32.mrb[0].mxu0
        %1453 = vdwg.mxu0
        %v1454 = vpack.c.bf16 %v1299, %v1298
        %v1455 = vpack.c.bf16 %v1301, %v1300
        %v1456 = vpack.c.bf16 %v1303, %v1302
        %v1457 = vpack.c.bf16 %v1305, %v1304
        %v1458 = vpack.c.bf16 %v1307, %v1306
        %v1459 = vpack.c.bf16 %v1309, %v1308
        %v1460 = vpack.c.bf16 %v1311, %v1310
        %v1461 = vpack.c.bf16 %v1313, %v1312
        %v1462 = vpack.c.bf16 %v1315, %v1314
        %v1463 = vpack.c.bf16 %v1317, %v1316
        %v1464 = vpack.c.bf16 %v1319, %v1318
        %v1465 = vpack.c.bf16 %v1321, %v1320
        %v1466 = vpack.c.bf16 %v1323, %v1322
        %v1467 = vpack.c.bf16 %v1325, %v1324
        %v1468 = vpack.c.bf16 %v1327, %v1326
        %v1469 = vpack.c.bf16 %v1329, %v1328
        %v1470 = vld [vmem:[#allocation5] sm:$0xff]
        %v1471 = vld [vmem:[#allocation5 + $0x8] sm:$0xff]
        %v1472 = vld [vmem:[#allocation5 + $0x10] sm:$0xff]
        %v1473 = vld [vmem:[#allocation5 + $0x18] sm:$0xff]
        %v1474 = vld [vmem:[#allocation5 + $0x20] sm:$0xff]
        %v1475 = vld [vmem:[#allocation5 + $0x28] sm:$0xff]
        %v1476 = vld [vmem:[#allocation5 + $0x30] sm:$0xff]
        %v1477 = vld [vmem:[#allocation5 + $0x38] sm:$0xff]
        %v1478 = vld [vmem:[#allocation5 + $0x40] sm:$0xff]
        %v1479 = vld [vmem:[#allocation5 + $0x48] sm:$0xff]
        %v1480 = vld [vmem:[#allocation5 + $0x50] sm:$0xff]
        %v1481 = vld [vmem:[#allocation5 + $0x58] sm:$0xff]
        %v1482 = vld [vmem:[#allocation5 + $0x60] sm:$0xff]
        %v1483 = vld [vmem:[#allocation5 + $0x68] sm:$0xff]
        %v1484 = vld [vmem:[#allocation5 + $0x70] sm:$0xff]
        %v1485 = vld [vmem:[#allocation5 + $0x78] sm:$0xff]
        %v1502 = vunpack.c.l.b16 %v1470
        %v1503 = vunpack.c.h.b16 %v1470
        %v1504 = vunpack.c.l.b16 %v1471
        %v1505 = vunpack.c.h.b16 %v1471
        %v1506 = vunpack.c.l.b16 %v1472
        %v1507 = vunpack.c.h.b16 %v1472
        %v1508 = vunpack.c.l.b16 %v1473
        %v1509 = vunpack.c.h.b16 %v1473
        %v1510 = vunpack.c.l.b16 %v1474
        %v1511 = vunpack.c.h.b16 %v1474
        %v1512 = vunpack.c.l.b16 %v1475
        %v1513 = vunpack.c.h.b16 %v1475
        %v1514 = vunpack.c.l.b16 %v1476
        %v1515 = vunpack.c.h.b16 %v1476
        %v1516 = vunpack.c.l.b16 %v1477
        %v1517 = vunpack.c.h.b16 %v1477
        %v1518 = vunpack.c.l.b16 %v1478
        %v1519 = vunpack.c.h.b16 %v1478
        %v1520 = vunpack.c.l.b16 %v1479
        %v1521 = vunpack.c.h.b16 %v1479
        %v1522 = vunpack.c.l.b16 %v1480
        %v1523 = vunpack.c.h.b16 %v1480
        %v1524 = vunpack.c.l.b16 %v1481
        %v1525 = vunpack.c.h.b16 %v1481
        %v1526 = vunpack.c.l.b16 %v1482
        %v1527 = vunpack.c.h.b16 %v1482
        %v1528 = vunpack.c.l.b16 %v1483
        %v1529 = vunpack.c.h.b16 %v1483
        %v1530 = vunpack.c.l.b16 %v1484
        %v1531 = vunpack.c.h.b16 %v1484
        %v1532 = vunpack.c.l.b16 %v1485
        %v1533 = vunpack.c.h.b16 %v1485
        %v1534 = vpack.c.b16 %v1504, %v1502
        %v1535 = vpack.c.b16 %v1505, %v1503
        %v1536 = vpack.c.b16 %v1508, %v1506
        %v1537 = vpack.c.b16 %v1509, %v1507
        %v1538 = vpack.c.b16 %v1512, %v1510
        %v1539 = vpack.c.b16 %v1513, %v1511
        %v1540 = vpack.c.b16 %v1516, %v1514
        %v1541 = vpack.c.b16 %v1517, %v1515
        %v1542 = vpack.c.b16 %v1520, %v1518
        %v1543 = vpack.c.b16 %v1521, %v1519
        %v1544 = vpack.c.b16 %v1524, %v1522
        %v1545 = vpack.c.b16 %v1525, %v1523
        %v1546 = vpack.c.b16 %v1528, %v1526
        %v1547 = vpack.c.b16 %v1529, %v1527
        %v1548 = vpack.c.b16 %v1532, %v1530
        %v1549 = vpack.c.b16 %v1533, %v1531
        %1566 = vmatprep.subr.bf16.mxu0 %v1535
        %1567 = vmatpush1.bf16.msra.mxu0 %v1534
        %1568 = vmatprep.subr.bf16.mxu0 %v1537
        %1569 = vmatpush1.bf16.msra.mxu0 %v1536
        %1570 = vmatprep.subr.bf16.mxu0 %v1539
        %1571 = vmatpush1.bf16.msra.mxu0 %v1538
        %1572 = vmatprep.subr.bf16.mxu0 %v1541
        %1573 = vmatpush1.bf16.msra.mxu0 %v1540
        %1574 = vmatprep.subr.bf16.mxu0 %v1543
        %1575 = vmatpush1.bf16.msra.mxu0 %v1542
        %1576 = vmatprep.subr.bf16.mxu0 %v1545
        %1577 = vmatpush1.bf16.msra.mxu0 %v1544
        %1578 = vmatprep.subr.bf16.mxu0 %v1547
        %1579 = vmatpush1.bf16.msra.mxu0 %v1546
        %1580 = vmatprep.subr.bf16.mxu0 %v1549
        %1581 = vmatpush1.bf16.msra.mxu0 %v1548
        %1582 = vmatprep.subr.bf16.mxu0 0
        %1583 = vmatpush1.bf16.msra.mxu0 0
        %1584 = vmatprep.subr.bf16.mxu0 0
        %1585 = vmatpush1.bf16.msra.mxu0 0
        %1586 = vmatprep.subr.bf16.mxu0 0
        %1587 = vmatpush1.bf16.msra.mxu0 0
        %1588 = vmatprep.subr.bf16.mxu0 0
        %1589 = vmatpush1.bf16.msra.mxu0 0
        %1590 = vmatprep.subr.bf16.mxu0 0
        %1591 = vmatpush1.bf16.msra.mxu0 0
        %1592 = vmatprep.subr.bf16.mxu0 0
        %1593 = vmatpush1.bf16.msra.mxu0 0
        %1594 = vmatprep.subr.bf16.mxu0 0
        %1595 = vmatpush1.bf16.msra.mxu0 0
        %1596 = vmatprep.subr.bf16.mxu0 0
        %1597 = vmatpush1.bf16.msra.mxu0 0
        %1598 = vmatprep.mubr.bf16.mxu0 0
        %1599 = vmatmul.mubr.bf16.gmra.mrb[0].mxu0 %v1454
        %v1600 = vpop.f32.mrb[0].mxu0
        %v1601 = vadd.f32 0.0, %v1600
        %v1602 = vpop.f32.mrb[0].mxu0
        %v1603 = vadd.f32 0.0, %v1602
        %v1604 = vpop.f32.mrb[0].mxu0
        %v1605 = vadd.f32 0.0, %v1604
        %v1606 = vpop.f32.mrb[0].mxu0
        %v1607 = vadd.f32 0.0, %v1606
        %1608 = vmatprep.mubr.bf16.mxu0 0
        %1609 = vmatmul.mubr.bf16.gmra.mrb[0].mxu0 %v1455
        %v1610 = vpop.f32.mrb[0].mxu0
        %v1611 = vadd.f32 0.0, %v1610
        %v1612 = vpop.f32.mrb[0].mxu0
        %v1613 = vadd.f32 0.0, %v1612
        %v1614 = vpop.f32.mrb[0].mxu0
        %v1615 = vadd.f32 0.0, %v1614
        %v1616 = vpop.f32.mrb[0].mxu0
        %v1617 = vadd.f32 0.0, %v1616
        %1618 = vmatprep.mubr.bf16.mxu0 0
        %1619 = vmatmul.mubr.bf16.gmra.mrb[0].mxu0 %v1456
        %v1620 = vpop.f32.mrb[0].mxu0
        %v1621 = vadd.f32 0.0, %v1620
        %v1622 = vpop.f32.mrb[0].mxu0
        %v1623 = vadd.f32 0.0, %v1622
        %v1624 = vpop.f32.mrb[0].mxu0
        %v1625 = vadd.f32 0.0, %v1624
        %v1626 = vpop.f32.mrb[0].mxu0
        %v1627 = vadd.f32 0.0, %v1626
        %1628 = vmatprep.mubr.bf16.mxu0 0
        %1629 = vmatmul.mubr.bf16.gmra.mrb[0].mxu0 %v1457
        %v1630 = vpop.f32.mrb[0].mxu0
        %v1631 = vadd.f32 0.0, %v1630
        %v1632 = vpop.f32.mrb[0].mxu0
        %v1633 = vadd.f32 0.0, %v1632
        %v1634 = vpop.f32.mrb[0].mxu0
        %v1635 = vadd.f32 0.0, %v1634
        %v1636 = vpop.f32.mrb[0].mxu0
        %v1637 = vadd.f32 0.0, %v1636
        %1638 = vmatprep.mubr.bf16.mxu0 0
        %1639 = vmatmul.mubr.bf16.gmra.mrb[0].mxu0 %v1458
        %v1640 = vpop.f32.mrb[0].mxu0
        %v1641 = vadd.f32 0.0, %v1640
        %v1642 = vpop.f32.mrb[0].mxu0
        %v1643 = vadd.f32 0.0, %v1642
        %v1644 = vpop.f32.mrb[0].mxu0
        %v1645 = vadd.f32 0.0, %v1644
        %v1646 = vpop.f32.mrb[0].mxu0
        %v1647 = vadd.f32 0.0, %v1646
        %1648 = vmatprep.mubr.bf16.mxu0 0
        %1649 = vmatmul.mubr.bf16.gmra.mrb[0].mxu0 %v1459
        %v1650 = vpop.f32.mrb[0].mxu0
        %v1651 = vadd.f32 0.0, %v1650
        %v1652 = vpop.f32.mrb[0].mxu0
        %v1653 = vadd.f32 0.0, %v1652
        %v1654 = vpop.f32.mrb[0].mxu0
        %v1655 = vadd.f32 0.0, %v1654
        %v1656 = vpop.f32.mrb[0].mxu0
        %v1657 = vadd.f32 0.0, %v1656
        %1658 = vmatprep.mubr.bf16.mxu0 0
        %1659 = vmatmul.mubr.bf16.gmra.mrb[0].mxu0 %v1460
        %v1660 = vpop.f32.mrb[0].mxu0
        %v1661 = vadd.f32 0.0, %v1660
        %v1662 = vpop.f32.mrb[0].mxu0
        %v1663 = vadd.f32 0.0, %v1662
        %v1664 = vpop.f32.mrb[0].mxu0
        %v1665 = vadd.f32 0.0, %v1664
        %v1666 = vpop.f32.mrb[0].mxu0
        %v1667 = vadd.f32 0.0, %v1666
        %1668 = vmatprep.mubr.bf16.mxu0 0
        %1669 = vmatmul.mubr.bf16.gmra.mrb[0].mxu0 %v1461
        %v1670 = vpop.f32.mrb[0].mxu0
        %v1671 = vadd.f32 0.0, %v1670
        %v1672 = vpop.f32.mrb[0].mxu0
        %v1673 = vadd.f32 0.0, %v1672
        %v1674 = vpop.f32.mrb[0].mxu0
        %v1675 = vadd.f32 0.0, %v1674
        %v1676 = vpop.f32.mrb[0].mxu0
        %v1677 = vadd.f32 0.0, %v1676
        %1678 = vmatprep.mubr.bf16.mxu0 0
        %1679 = vmatmul.mubr.bf16.gmra.mrb[0].mxu0 %v1462
        %v1680 = vpop.f32.mrb[0].mxu0
        %v1681 = vadd.f32 0.0, %v1680
        %v1682 = vpop.f32.mrb[0].mxu0
        %v1683 = vadd.f32 0.0, %v1682
        %v1684 = vpop.f32.mrb[0].mxu0
        %v1685 = vadd.f32 0.0, %v1684
        %v1686 = vpop.f32.mrb[0].mxu0
        %v1687 = vadd.f32 0.0, %v1686
        %1688 = vmatprep.mubr.bf16.mxu0 0
        %1689 = vmatmul.mubr.bf16.gmra.mrb[0].mxu0 %v1463
        %v1690 = vpop.f32.mrb[0].mxu0
        %v1691 = vadd.f32 0.0, %v1690
        %v1692 = vpop.f32.mrb[0].mxu0
        %v1693 = vadd.f32 0.0, %v1692
        %v1694 = vpop.f32.mrb[0].mxu0
        %v1695 = vadd.f32 0.0, %v1694
        %v1696 = vpop.f32.mrb[0].mxu0
        %v1697 = vadd.f32 0.0, %v1696
        %1698 = vmatprep.mubr.bf16.mxu0 0
        %1699 = vmatmul.mubr.bf16.gmra.mrb[0].mxu0 %v1464
        %v1700 = vpop.f32.mrb[0].mxu0
        %v1701 = vadd.f32 0.0, %v1700
        %v1702 = vpop.f32.mrb[0].mxu0
        %v1703 = vadd.f32 0.0, %v1702
        %v1704 = vpop.f32.mrb[0].mxu0
        %v1705 = vadd.f32 0.0, %v1704
        %v1706 = vpop.f32.mrb[0].mxu0
        %v1707 = vadd.f32 0.0, %v1706
        %1708 = vmatprep.mubr.bf16.mxu0 0
        %1709 = vmatmul.mubr.bf16.gmra.mrb[0].mxu0 %v1465
        %v1710 = vpop.f32.mrb[0].mxu0
        %v1711 = vadd.f32 0.0, %v1710
        %v1712 = vpop.f32.mrb[0].mxu0
        %v1713 = vadd.f32 0.0, %v1712
        %v1714 = vpop.f32.mrb[0].mxu0
        %v1715 = vadd.f32 0.0, %v1714
        %v1716 = vpop.f32.mrb[0].mxu0
        %v1717 = vadd.f32 0.0, %v1716
        %1718 = vmatprep.mubr.bf16.mxu0 0
        %1719 = vmatmul.mubr.bf16.gmra.mrb[0].mxu0 %v1466
        %v1720 = vpop.f32.mrb[0].mxu0
        %v1721 = vadd.f32 0.0, %v1720
        %v1722 = vpop.f32.mrb[0].mxu0
        %v1723 = vadd.f32 0.0, %v1722
        %v1724 = vpop.f32.mrb[0].mxu0
        %v1725 = vadd.f32 0.0, %v1724
        %v1726 = vpop.f32.mrb[0].mxu0
        %v1727 = vadd.f32 0.0, %v1726
        %1728 = vmatprep.mubr.bf16.mxu0 0
        %1729 = vmatmul.mubr.bf16.gmra.mrb[0].mxu0 %v1467
        %v1730 = vpop.f32.mrb[0].mxu0
        %v1731 = vadd.f32 0.0, %v1730
        %v1732 = vpop.f32.mrb[0].mxu0
        %v1733 = vadd.f32 0.0, %v1732
        %v1734 = vpop.f32.mrb[0].mxu0
        %v1735 = vadd.f32 0.0, %v1734
        %v1736 = vpop.f32.mrb[0].mxu0
        %v1737 = vadd.f32 0.0, %v1736
        %1738 = vmatprep.mubr.bf16.mxu0 0
        %1739 = vmatmul.mubr.bf16.gmra.mrb[0].mxu0 %v1468
        %v1740 = vpop.f32.mrb[0].mxu0
        %v1741 = vadd.f32 0.0, %v1740
        %v1742 = vpop.f32.mrb[0].mxu0
        %v1743 = vadd.f32 0.0, %v1742
        %v1744 = vpop.f32.mrb[0].mxu0
        %v1745 = vadd.f32 0.0, %v1744
        %v1746 = vpop.f32.mrb[0].mxu0
        %v1747 = vadd.f32 0.0, %v1746
        %1748 = vmatprep.mubr.bf16.mxu0 0
        %1749 = vmatmul.mubr.bf16.gmra.mrb[0].mxu0 %v1469
        %v1750 = vpop.f32.mrb[0].mxu0
        %v1751 = vadd.f32 0.0, %v1750
        %v1752 = vpop.f32.mrb[0].mxu0
        %v1753 = vadd.f32 0.0, %v1752
        %v1754 = vpop.f32.mrb[0].mxu0
        %v1755 = vadd.f32 0.0, %v1754
        %v1756 = vpop.f32.mrb[0].mxu0
        %v1757 = vadd.f32 0.0, %v1756
        %1758 = vdwg.mxu0
        %v1761 = vunpack.c.l.s4 1966171168
        %v1762 = vunpack.c.0.s8 %v1761
        %v1763 = vlaneseq
        %v1764 = vshrl.u32 %v1763, 7
        %v1765 = vsub.s32 %v1762, %v1764
        %v1766 = vrot.slane %v1449, %v1765
        %v1767 = vcombine.high %v1766, %v1766
        %v1769 = vunpack.c.l.s4 1966171168
        %v1770 = vunpack.c.0.s8 %v1769
        %v1771 = vlaneseq
        %v1772 = vshrl.u32 %v1771, 7
        %v1773 = vsub.s32 %v1770, %v1772
        %v1774 = vrot.slane %v1766, %v1773
        %v1776 = vunpack.c.l.s4 1966171168
        %v1777 = vunpack.c.0.s8 %v1776
        %v1778 = vlaneseq
        %v1779 = vshrl.u32 %v1778, 7
        %v1780 = vsub.s32 %v1777, %v1779
        %v1781 = vrot.slane %v1767, %v1780
        %v1782 = vcombine.high %v1774, %v1774
        %v1783 = vcombine.high %v1781, %v1781
        %v1784 = vlaneseq
        %v1785 = vshrl.u32 %v1784, 7
        %v1786 = vsub.s32 0, %v1785
        %v1787 = vrot.slane %v1774, %v1786
        %v1788 = vlaneseq
        %v1789 = vshrl.u32 %v1788, 7
        %v1790 = vsub.s32 0, %v1789
        %v1791 = vrot.slane %v1781, %v1790
        %v1792 = vlaneseq
        %v1793 = vshrl.u32 %v1792, 7
        %v1794 = vsub.s32 0, %v1793
        %v1795 = vrot.slane %v1782, %v1794
        %v1796 = vlaneseq
        %v1797 = vshrl.u32 %v1796, 7
        %v1798 = vsub.s32 0, %v1797
        %v1799 = vrot.slane %v1783, %v1798
        %v1804 = vmul.f32 %v1601, %v1787
        %v1805 = vmul.f32 %v1605, %v1787
        %v1806 = vmul.f32 %v1611, %v1787
        %v1807 = vmul.f32 %v1615, %v1787
        %v1808 = vmul.f32 %v1621, %v1787
        %v1809 = vmul.f32 %v1625, %v1787
        %v1810 = vmul.f32 %v1631, %v1787
        %v1811 = vmul.f32 %v1635, %v1787
        %v1812 = vmul.f32 %v1641, %v1791
        %v1813 = vmul.f32 %v1645, %v1791
        %v1814 = vmul.f32 %v1651, %v1791
        %v1815 = vmul.f32 %v1655, %v1791
        %v1816 = vmul.f32 %v1661, %v1791
        %v1817 = vmul.f32 %v1665, %v1791
        %v1818 = vmul.f32 %v1671, %v1791
        %v1819 = vmul.f32 %v1675, %v1791
        %v1820 = vmul.f32 %v1681, %v1795
        %v1821 = vmul.f32 %v1685, %v1795
        %v1822 = vmul.f32 %v1691, %v1795
        %v1823 = vmul.f32 %v1695, %v1795
        %v1824 = vmul.f32 %v1701, %v1795
        %v1825 = vmul.f32 %v1705, %v1795
        %v1826 = vmul.f32 %v1711, %v1795
        %v1827 = vmul.f32 %v1715, %v1795
        %v1828 = vmul.f32 %v1721, %v1799
        %v1829 = vmul.f32 %v1725, %v1799
        %v1830 = vmul.f32 %v1731, %v1799
        %v1831 = vmul.f32 %v1735, %v1799
        %v1832 = vmul.f32 %v1741, %v1799
        %v1833 = vmul.f32 %v1745, %v1799
        %v1834 = vmul.f32 %v1751, %v1799
        %v1835 = vmul.f32 %v1755, %v1799
        %v1836 = vpack.c.bf16 %v1805, %v1804
        %v1837 = vpack.c.bf16 %v1807, %v1806
        %v1838 = vpack.c.bf16 %v1809, %v1808
        %v1839 = vpack.c.bf16 %v1811, %v1810
        %v1840 = vpack.c.bf16 %v1813, %v1812
        %v1841 = vpack.c.bf16 %v1815, %v1814
        %v1842 = vpack.c.bf16 %v1817, %v1816
        %v1843 = vpack.c.bf16 %v1819, %v1818
        %v1844 = vpack.c.bf16 %v1821, %v1820
        %v1845 = vpack.c.bf16 %v1823, %v1822
        %v1846 = vpack.c.bf16 %v1825, %v1824
        %v1847 = vpack.c.bf16 %v1827, %v1826
        %v1848 = vpack.c.bf16 %v1829, %v1828
        %v1849 = vpack.c.bf16 %v1831, %v1830
        %v1850 = vpack.c.bf16 %v1833, %v1832
        %v1851 = vpack.c.bf16 %v1835, %v1834
        %v1852 = vld [vmem:[%s16] sm:$0xf]
        %v1853 = vld [vmem:[%s16 + $0x4] sm:$0xf]
        %v1854 = vld [vmem:[%s16 + $0x8] sm:$0xf]
        %v1855 = vld [vmem:[%s16 + $0xc] sm:$0xf]
        %v1856 = vld [vmem:[%s16 + $0x10] sm:$0xf]
        %v1857 = vld [vmem:[%s16 + $0x14] sm:$0xf]
        %v1858 = vld [vmem:[%s16 + $0x18] sm:$0xf]
        %v1859 = vld [vmem:[%s16 + $0x1c] sm:$0xf]
        %v1860 = vld [vmem:[%s16 + $0x20] sm:$0xf]
        %v1861 = vld [vmem:[%s16 + $0x24] sm:$0xf]
        %v1862 = vld [vmem:[%s16 + $0x28] sm:$0xf]
        %v1863 = vld [vmem:[%s16 + $0x2c] sm:$0xf]
        %v1864 = vld [vmem:[%s16 + $0x30] sm:$0xf]
        %v1865 = vld [vmem:[%s16 + $0x34] sm:$0xf]
        %v1866 = vld [vmem:[%s16 + $0x38] sm:$0xf]
        %v1867 = vld [vmem:[%s16 + $0x3c] sm:$0xf]
        %v1884 = vunpack.c.l.b16 %v1852
        %v1885 = vunpack.c.l.b16 %v1853
        %v1886 = vunpack.c.l.b16 %v1854
        %v1887 = vunpack.c.l.b16 %v1855
        %v1888 = vunpack.c.l.b16 %v1856
        %v1889 = vunpack.c.l.b16 %v1857
        %v1890 = vunpack.c.l.b16 %v1858
        %v1891 = vunpack.c.l.b16 %v1859
        %v1892 = vunpack.c.l.b16 %v1860
        %v1893 = vunpack.c.l.b16 %v1861
        %v1894 = vunpack.c.l.b16 %v1862
        %v1895 = vunpack.c.l.b16 %v1863
        %v1896 = vunpack.c.l.b16 %v1864
        %v1897 = vunpack.c.l.b16 %v1865
        %v1898 = vunpack.c.l.b16 %v1866
        %v1899 = vunpack.c.l.b16 %v1867
        %v1900 = vpack.c.b16 %v1885, %v1884
        %v1901 = vpack.c.b16 %v1887, %v1886
        %v1902 = vpack.c.b16 %v1889, %v1888
        %v1903 = vpack.c.b16 %v1891, %v1890
        %v1904 = vpack.c.b16 %v1893, %v1892
        %v1905 = vpack.c.b16 %v1895, %v1894
        %v1906 = vpack.c.b16 %v1897, %v1896
        %v1907 = vpack.c.b16 %v1899, %v1898
        %1916 = vmatprep.subr.bf16.mxu0 0
        %1917 = vmatpush1.bf16.msra.mxu0 %v1900
        %1918 = vmatprep.subr.bf16.mxu0 0
        %1919 = vmatpush1.bf16.msra.mxu0 %v1901
        %1920 = vmatprep.subr.bf16.mxu0 0
        %1921 = vmatpush1.bf16.msra.mxu0 %v1902
        %1922 = vmatprep.subr.bf16.mxu0 0
        %1923 = vmatpush1.bf16.msra.mxu0 %v1903
        %1924 = vmatprep.subr.bf16.mxu0 0
        %1925 = vmatpush1.bf16.msra.mxu0 %v1904
        %1926 = vmatprep.subr.bf16.mxu0 0
        %1927 = vmatpush1.bf16.msra.mxu0 %v1905
        %1928 = vmatprep.subr.bf16.mxu0 0
        %1929 = vmatpush1.bf16.msra.mxu0 %v1906
        %1930 = vmatprep.subr.bf16.mxu0 0
        %1931 = vmatpush1.bf16.msra.mxu0 %v1907
        %1932 = vmatprep.subr.bf16.mxu0 0
        %1933 = vmatpush1.bf16.msra.mxu0 0
        %1934 = vmatprep.subr.bf16.mxu0 0
        %1935 = vmatpush1.bf16.msra.mxu0 0
        %1936 = vmatprep.subr.bf16.mxu0 0
        %1937 = vmatpush1.bf16.msra.mxu0 0
        %1938 = vmatprep.subr.bf16.mxu0 0
        %1939 = vmatpush1.bf16.msra.mxu0 0
        %1940 = vmatprep.subr.bf16.mxu0 0
        %1941 = vmatpush1.bf16.msra.mxu0 0
        %1942 = vmatprep.subr.bf16.mxu0 0
        %1943 = vmatpush1.bf16.msra.mxu0 0
        %1944 = vmatprep.subr.bf16.mxu0 0
        %1945 = vmatpush1.bf16.msra.mxu0 0
        %1946 = vmatprep.subr.bf16.mxu0 0
        %1947 = vmatpush1.bf16.msra.mxu0 0
        %1948 = vmatprep.mubr.bf16.mxu0 0
        %1949 = vmatmul.mubr.bf16.gmra.mrb[0].mxu0 %v1836
        %v1950 = vpop.f32.mrb[0].mxu0
        %v1951 = vadd.f32 0.0, %v1950
        %v1952 = vpop.f32.mrb[0].mxu0
        %v1953 = vpop.f32.mrb[0].mxu0
        %v1954 = vadd.f32 0.0, %v1953
        %v1955 = vpop.f32.mrb[0].mxu0
        %1956 = vmatprep.mubr.bf16.mxu0 0
        %1957 = vmatmul.mubr.bf16.gmra.mrb[0].mxu0 %v1837
        %v1958 = vpop.f32.mrb[0].mxu0
        %v1959 = vadd.f32 0.0, %v1958
        %v1960 = vpop.f32.mrb[0].mxu0
        %v1961 = vpop.f32.mrb[0].mxu0
        %v1962 = vadd.f32 0.0, %v1961
        %v1963 = vpop.f32.mrb[0].mxu0
        %1964 = vmatprep.mubr.bf16.mxu0 0
        %1965 = vmatmul.mubr.bf16.gmra.mrb[0].mxu0 %v1838
        %v1966 = vpop.f32.mrb[0].mxu0
        %v1967 = vadd.f32 0.0, %v1966
        %v1968 = vpop.f32.mrb[0].mxu0
        %v1969 = vpop.f32.mrb[0].mxu0
        %v1970 = vadd.f32 0.0, %v1969
        %v1971 = vpop.f32.mrb[0].mxu0
        %1972 = vmatprep.mubr.bf16.mxu0 0
        %1973 = vmatmul.mubr.bf16.gmra.mrb[0].mxu0 %v1839
        %v1974 = vpop.f32.mrb[0].mxu0
        %v1975 = vadd.f32 0.0, %v1974
        %v1976 = vpop.f32.mrb[0].mxu0
        %v1977 = vpop.f32.mrb[0].mxu0
        %v1978 = vadd.f32 0.0, %v1977
        %v1979 = vpop.f32.mrb[0].mxu0
        %1980 = vmatprep.mubr.bf16.mxu0 0
        %1981 = vmatmul.mubr.bf16.gmra.mrb[0].mxu0 %v1840
        %v1982 = vpop.f32.mrb[0].mxu0
        %v1983 = vadd.f32 0.0, %v1982
        %v1984 = vpop.f32.mrb[0].mxu0
        %v1985 = vpop.f32.mrb[0].mxu0
        %v1986 = vadd.f32 0.0, %v1985
        %v1987 = vpop.f32.mrb[0].mxu0
        %1988 = vmatprep.mubr.bf16.mxu0 0
        %1989 = vmatmul.mubr.bf16.gmra.mrb[0].mxu0 %v1841
        %v1990 = vpop.f32.mrb[0].mxu0
        %v1991 = vadd.f32 0.0, %v1990
        %v1992 = vpop.f32.mrb[0].mxu0
        %v1993 = vpop.f32.mrb[0].mxu0
        %v1994 = vadd.f32 0.0, %v1993
        %v1995 = vpop.f32.mrb[0].mxu0
        %1996 = vmatprep.mubr.bf16.mxu0 0
        %1997 = vmatmul.mubr.bf16.gmra.mrb[0].mxu0 %v1842
        %v1998 = vpop.f32.mrb[0].mxu0
        %v1999 = vadd.f32 0.0, %v1998
        %v2000 = vpop.f32.mrb[0].mxu0
        %v2001 = vpop.f32.mrb[0].mxu0
        %v2002 = vadd.f32 0.0, %v2001
        %v2003 = vpop.f32.mrb[0].mxu0
        %2004 = vmatprep.mubr.bf16.mxu0 0
        %2005 = vmatmul.mubr.bf16.gmra.mrb[0].mxu0 %v1843
        %v2006 = vpop.f32.mrb[0].mxu0
        %v2007 = vadd.f32 0.0, %v2006
        %v2008 = vpop.f32.mrb[0].mxu0
        %v2009 = vpop.f32.mrb[0].mxu0
        %v2010 = vadd.f32 0.0, %v2009
        %v2011 = vpop.f32.mrb[0].mxu0
        %2012 = vmatprep.mubr.bf16.mxu0 0
        %2013 = vmatmul.mubr.bf16.gmra.mrb[0].mxu0 %v1844
        %v2014 = vpop.f32.mrb[0].mxu0
        %v2015 = vadd.f32 0.0, %v2014
        %v2016 = vpop.f32.mrb[0].mxu0
        %v2017 = vpop.f32.mrb[0].mxu0
        %v2018 = vadd.f32 0.0, %v2017
        %v2019 = vpop.f32.mrb[0].mxu0
        %2020 = vmatprep.mubr.bf16.mxu0 0
        %2021 = vmatmul.mubr.bf16.gmra.mrb[0].mxu0 %v1845
        %v2022 = vpop.f32.mrb[0].mxu0
        %v2023 = vadd.f32 0.0, %v2022
        %v2024 = vpop.f32.mrb[0].mxu0
        %v2025 = vpop.f32.mrb[0].mxu0
        %v2026 = vadd.f32 0.0, %v2025
        %v2027 = vpop.f32.mrb[0].mxu0
        %2028 = vmatprep.mubr.bf16.mxu0 0
        %2029 = vmatmul.mubr.bf16.gmra.mrb[0].mxu0 %v1846
        %v2030 = vpop.f32.mrb[0].mxu0
        %v2031 = vadd.f32 0.0, %v2030
        %v2032 = vpop.f32.mrb[0].mxu0
        %v2033 = vpop.f32.mrb[0].mxu0
        %v2034 = vadd.f32 0.0, %v2033
        %v2035 = vpop.f32.mrb[0].mxu0
        %2036 = vmatprep.mubr.bf16.mxu0 0
        %2037 = vmatmul.mubr.bf16.gmra.mrb[0].mxu0 %v1847
        %v2038 = vpop.f32.mrb[0].mxu0
        %v2039 = vadd.f32 0.0, %v2038
        %v2040 = vpop.f32.mrb[0].mxu0
        %v2041 = vpop.f32.mrb[0].mxu0
        %v2042 = vadd.f32 0.0, %v2041
        %v2043 = vpop.f32.mrb[0].mxu0
        %2044 = vmatprep.mubr.bf16.mxu0 0
        %2045 = vmatmul.mubr.bf16.gmra.mrb[0].mxu0 %v1848
        %v2046 = vpop.f32.mrb[0].mxu0
        %v2047 = vadd.f32 0.0, %v2046
        %v2048 = vpop.f32.mrb[0].mxu0
        %v2049 = vpop.f32.mrb[0].mxu0
        %v2050 = vadd.f32 0.0, %v2049
        %v2051 = vpop.f32.mrb[0].mxu0
        %2052 = vmatprep.mubr.bf16.mxu0 0
        %2053 = vmatmul.mubr.bf16.gmra.mrb[0].mxu0 %v1849
        %v2054 = vpop.f32.mrb[0].mxu0
        %v2055 = vadd.f32 0.0, %v2054
        %v2056 = vpop.f32.mrb[0].mxu0
        %v2057 = vpop.f32.mrb[0].mxu0
        %v2058 = vadd.f32 0.0, %v2057
        %v2059 = vpop.f32.mrb[0].mxu0
        %2060 = vmatprep.mubr.bf16.mxu0 0
        %2061 = vmatmul.mubr.bf16.gmra.mrb[0].mxu0 %v1850
        %v2062 = vpop.f32.mrb[0].mxu0
        %v2063 = vadd.f32 0.0, %v2062
        %v2064 = vpop.f32.mrb[0].mxu0
        %v2065 = vpop.f32.mrb[0].mxu0
        %v2066 = vadd.f32 0.0, %v2065
        %v2067 = vpop.f32.mrb[0].mxu0
        %2068 = vmatprep.mubr.bf16.mxu0 0
        %2069 = vmatmul.mubr.bf16.gmra.mrb[0].mxu0 %v1851
        %v2070 = vpop.f32.mrb[0].mxu0
        %v2071 = vadd.f32 0.0, %v2070
        %v2072 = vpop.f32.mrb[0].mxu0
        %v2073 = vpop.f32.mrb[0].mxu0
        %v2074 = vadd.f32 0.0, %v2073
        %v2075 = vpop.f32.mrb[0].mxu0
        %2076 = vdwg.mxu0
        %vm2077 = vcmask 31744
        %v2078 = vsel %vm2077, %v1951, -inf
        %v2079 = vsel %vm2077, %v1954, -inf
        %v2080 = vmax.f32 %v2078, %v2079
        %v2081 = vsel %vm2077, %v1959, -inf
        %v2082 = vmax.f32 %v2080, %v2081
        %v2083 = vsel %vm2077, %v1962, -inf
        %v2084 = vmax.f32 %v2082, %v2083
        %v2085 = vsel %vm2077, %v1967, -inf
        %v2086 = vmax.f32 %v2084, %v2085
        %v2087 = vsel %vm2077, %v1970, -inf
        %v2088 = vmax.f32 %v2086, %v2087
        %v2089 = vsel %vm2077, %v1975, -inf
        %v2090 = vmax.f32 %v2088, %v2089
        %v2091 = vsel %vm2077, %v1978, -inf
        %v2092 = vmax.f32 %v2090, %v2091
        %v2093 = vrot.slane %v2092, 4
        %v2094 = vmax.f32 %v2092, %v2093
        %v2095 = vrot.slane %v2094, 2
        %v2096 = vmax.f32 %v2094, %v2095
        %v2097 = vrot.slane %v2096, 1
        %v2098 = vmax.f32 %v2096, %v2097
        %v2099 = vsel %vm2077, %v1983, -inf
        %v2100 = vsel %vm2077, %v1986, -inf
        %v2101 = vmax.f32 %v2099, %v2100
        %v2102 = vsel %vm2077, %v1991, -inf
        %v2103 = vmax.f32 %v2101, %v2102
        %v2104 = vsel %vm2077, %v1994, -inf
        %v2105 = vmax.f32 %v2103, %v2104
        %v2106 = vsel %vm2077, %v1999, -inf
        %v2107 = vmax.f32 %v2105, %v2106
        %v2108 = vsel %vm2077, %v2002, -inf
        %v2109 = vmax.f32 %v2107, %v2108
        %v2110 = vsel %vm2077, %v2007, -inf
        %v2111 = vmax.f32 %v2109, %v2110
        %v2112 = vsel %vm2077, %v2010, -inf
        %v2113 = vmax.f32 %v2111, %v2112
        %v2114 = vrot.slane %v2113, 4
        %v2115 = vmax.f32 %v2113, %v2114
        %v2116 = vrot.slane %v2115, 2
        %v2117 = vmax.f32 %v2115, %v2116
        %v2118 = vrot.slane %v2117, 1
        %v2119 = vmax.f32 %v2117, %v2118
        %v2120 = vsel %vm2077, %v2015, -inf
        %v2121 = vsel %vm2077, %v2018, -inf
        %v2122 = vmax.f32 %v2120, %v2121
        %v2123 = vsel %vm2077, %v2023, -inf
        %v2124 = vmax.f32 %v2122, %v2123
        %v2125 = vsel %vm2077, %v2026, -inf
        %v2126 = vmax.f32 %v2124, %v2125
        %v2127 = vsel %vm2077, %v2031, -inf
        %v2128 = vmax.f32 %v2126, %v2127
        %v2129 = vsel %vm2077, %v2034, -inf
        %v2130 = vmax.f32 %v2128, %v2129
        %v2131 = vsel %vm2077, %v2039, -inf
        %v2132 = vmax.f32 %v2130, %v2131
        %v2133 = vsel %vm2077, %v2042, -inf
        %v2134 = vmax.f32 %v2132, %v2133
        %v2135 = vrot.slane %v2134, 4
        %v2136 = vmax.f32 %v2134, %v2135
        %v2137 = vrot.slane %v2136, 2
        %v2138 = vmax.f32 %v2136, %v2137
        %v2139 = vrot.slane %v2138, 1
        %v2140 = vmax.f32 %v2138, %v2139
        %v2141 = vsel %vm2077, %v2047, -inf
        %v2142 = vsel %vm2077, %v2050, -inf
        %v2143 = vmax.f32 %v2141, %v2142
        %v2144 = vsel %vm2077, %v2055, -inf
        %v2145 = vmax.f32 %v2143, %v2144
        %v2146 = vsel %vm2077, %v2058, -inf
        %v2147 = vmax.f32 %v2145, %v2146
        %v2148 = vsel %vm2077, %v2063, -inf
        %v2149 = vmax.f32 %v2147, %v2148
        %v2150 = vsel %vm2077, %v2066, -inf
        %v2151 = vmax.f32 %v2149, %v2150
        %v2152 = vsel %vm2077, %v2071, -inf
        %v2153 = vmax.f32 %v2151, %v2152
        %v2154 = vsel %vm2077, %v2074, -inf
        %v2155 = vmax.f32 %v2153, %v2154
        %v2156 = vrot.slane %v2155, 4
        %v2157 = vmax.f32 %v2155, %v2156
        %v2158 = vrot.slane %v2157, 2
        %v2159 = vmax.f32 %v2157, %v2158
        %v2160 = vrot.slane %v2159, 1
        %v2161 = vmax.f32 %v2159, %v2160
        %v2162 = vsub.f32 %v1951, %v2098
        %v2163 = vsub.f32 %v1954, %v2098
        %v2164 = vsub.f32 %v1959, %v2098
        %v2165 = vsub.f32 %v1962, %v2098
        %v2166 = vsub.f32 %v1967, %v2098
        %v2167 = vsub.f32 %v1970, %v2098
        %v2168 = vsub.f32 %v1975, %v2098
        %v2169 = vsub.f32 %v1978, %v2098
        %v2170 = vsub.f32 %v1983, %v2119
        %v2171 = vsub.f32 %v1986, %v2119
        %v2172 = vsub.f32 %v1991, %v2119
        %v2173 = vsub.f32 %v1994, %v2119
        %v2174 = vsub.f32 %v1999, %v2119
        %v2175 = vsub.f32 %v2002, %v2119
        %v2176 = vsub.f32 %v2007, %v2119
        %v2177 = vsub.f32 %v2010, %v2119
        %v2178 = vsub.f32 %v2015, %v2140
        %v2179 = vsub.f32 %v2018, %v2140
        %v2180 = vsub.f32 %v2023, %v2140
        %v2181 = vsub.f32 %v2026, %v2140
        %v2182 = vsub.f32 %v2031, %v2140
        %v2183 = vsub.f32 %v2034, %v2140
        %v2184 = vsub.f32 %v2039, %v2140
        %v2185 = vsub.f32 %v2042, %v2140
        %v2186 = vsub.f32 %v2047, %v2161
        %v2187 = vsub.f32 %v2050, %v2161
        %v2188 = vsub.f32 %v2055, %v2161
        %v2189 = vsub.f32 %v2058, %v2161
        %v2190 = vsub.f32 %v2063, %v2161
        %v2191 = vsub.f32 %v2066, %v2161
        %v2192 = vsub.f32 %v2071, %v2161
        %v2193 = vsub.f32 %v2074, %v2161
        %v2194 = vmul.f32 %v2162, 1.442695
        %v2195 = vpow.pop %v2194
        %v2196 = vmul.f32 %v2163, 1.442695
        %v2197 = vpow.pop %v2196
        %v2198 = vmul.f32 %v2164, 1.442695
        %v2199 = vpow.pop %v2198
        %v2200 = vmul.f32 %v2165, 1.442695
        %v2201 = vpow.pop %v2200
        %v2202 = vmul.f32 %v2166, 1.442695
        %v2203 = vpow.pop %v2202
        %v2204 = vmul.f32 %v2167, 1.442695
        %v2205 = vpow.pop %v2204
        %v2206 = vmul.f32 %v2168, 1.442695
        %v2207 = vpow.pop %v2206
        %v2208 = vmul.f32 %v2169, 1.442695
        %v2209 = vpow.pop %v2208
        %v2210 = vmul.f32 %v2170, 1.442695
        %v2211 = vpow.pop %v2210
        %v2212 = vmul.f32 %v2171, 1.442695
        %v2213 = vpow.pop %v2212
        %v2214 = vmul.f32 %v2172, 1.442695
        %v2215 = vpow.pop %v2214
        %v2216 = vmul.f32 %v2173, 1.442695
        %v2217 = vpow.pop %v2216
        %v2218 = vmul.f32 %v2174, 1.442695
        %v2219 = vpow.pop %v2218
        %v2220 = vmul.f32 %v2175, 1.442695
        %v2221 = vpow.pop %v2220
        %v2222 = vmul.f32 %v2176, 1.442695
        %v2223 = vpow.pop %v2222
        %v2224 = vmul.f32 %v2177, 1.442695
        %v2225 = vpow.pop %v2224
        %v2226 = vmul.f32 %v2178, 1.442695
        %v2227 = vpow.pop %v2226
        %v2228 = vmul.f32 %v2179, 1.442695
        %v2229 = vpow.pop %v2228
        %v2230 = vmul.f32 %v2180, 1.442695
        %v2231 = vpow.pop %v2230
        %v2232 = vmul.f32 %v2181, 1.442695
        %v2233 = vpow.pop %v2232
        %v2234 = vmul.f32 %v2182, 1.442695
        %v2235 = vpow.pop %v2234
        %v2236 = vmul.f32 %v2183, 1.442695
        %v2237 = vpow.pop %v2236
        %v2238 = vmul.f32 %v2184, 1.442695
        %v2239 = vpow.pop %v2238
        %v2240 = vmul.f32 %v2185, 1.442695
        %v2241 = vpow.pop %v2240
        %v2242 = vmul.f32 %v2186, 1.442695
        %v2243 = vpow.pop %v2242
        %v2244 = vmul.f32 %v2187, 1.442695
        %v2245 = vpow.pop %v2244
        %v2246 = vmul.f32 %v2188, 1.442695
        %v2247 = vpow.pop %v2246
        %v2248 = vmul.f32 %v2189, 1.442695
        %v2249 = vpow.pop %v2248
        %v2250 = vmul.f32 %v2190, 1.442695
        %v2251 = vpow.pop %v2250
        %v2252 = vmul.f32 %v2191, 1.442695
        %v2253 = vpow.pop %v2252
        %v2254 = vmul.f32 %v2192, 1.442695
        %v2255 = vpow.pop %v2254
        %v2256 = vmul.f32 %v2193, 1.442695
        %v2257 = vpow.pop %v2256
        %v2258 = vsel %vm2077, %v2195, 0.0
        %v2259 = vsel %vm2077, %v2197, 0.0
        %v2260 = vadd.f32 %v2258, %v2259
        %v2261 = vsel %vm2077, %v2199, 0.0
        %v2262 = vadd.f32 %v2260, %v2261
        %v2263 = vsel %vm2077, %v2201, 0.0
        %v2264 = vadd.f32 %v2262, %v2263
        %v2265 = vsel %vm2077, %v2203, 0.0
        %v2266 = vadd.f32 %v2264, %v2265
        %v2267 = vsel %vm2077, %v2205, 0.0
        %v2268 = vadd.f32 %v2266, %v2267
        %v2269 = vsel %vm2077, %v2207, 0.0
        %v2270 = vadd.f32 %v2268, %v2269
        %v2271 = vsel %vm2077, %v2209, 0.0
        %v2272 = vadd.f32 %v2270, %v2271
        %v2273 = vrot.slane %v2272, 4
        %v2274 = vadd.f32 %v2272, %v2273
        %v2275 = vrot.slane %v2274, 2
        %v2276 = vadd.f32 %v2274, %v2275
        %v2277 = vrot.slane %v2276, 1
        %v2278 = vadd.f32 %v2276, %v2277
        %v2279 = vsel %vm2077, %v2211, 0.0
        %v2280 = vsel %vm2077, %v2213, 0.0
        %v2281 = vadd.f32 %v2279, %v2280
        %v2282 = vsel %vm2077, %v2215, 0.0
        %v2283 = vadd.f32 %v2281, %v2282
        %v2284 = vsel %vm2077, %v2217, 0.0
        %v2285 = vadd.f32 %v2283, %v2284
        %v2286 = vsel %vm2077, %v2219, 0.0
        %v2287 = vadd.f32 %v2285, %v2286
        %v2288 = vsel %vm2077, %v2221, 0.0
        %v2289 = vadd.f32 %v2287, %v2288
        %v2290 = vsel %vm2077, %v2223, 0.0
        %v2291 = vadd.f32 %v2289, %v2290
        %v2292 = vsel %vm2077, %v2225, 0.0
        %v2293 = vadd.f32 %v2291, %v2292
        %v2294 = vrot.slane %v2293, 4
        %v2295 = vadd.f32 %v2293, %v2294
        %v2296 = vrot.slane %v2295, 2
        %v2297 = vadd.f32 %v2295, %v2296
        %v2298 = vrot.slane %v2297, 1
        %v2299 = vadd.f32 %v2297, %v2298
        %v2300 = vsel %vm2077, %v2227, 0.0
        %v2301 = vsel %vm2077, %v2229, 0.0
        %v2302 = vadd.f32 %v2300, %v2301
        %v2303 = vsel %vm2077, %v2231, 0.0
        %v2304 = vadd.f32 %v2302, %v2303
        %v2305 = vsel %vm2077, %v2233, 0.0
        %v2306 = vadd.f32 %v2304, %v2305
        %v2307 = vsel %vm2077, %v2235, 0.0
        %v2308 = vadd.f32 %v2306, %v2307
        %v2309 = vsel %vm2077, %v2237, 0.0
        %v2310 = vadd.f32 %v2308, %v2309
        %v2311 = vsel %vm2077, %v2239, 0.0
        %v2312 = vadd.f32 %v2310, %v2311
        %v2313 = vsel %vm2077, %v2241, 0.0
        %v2314 = vadd.f32 %v2312, %v2313
        %v2315 = vrot.slane %v2314, 4
        %v2316 = vadd.f32 %v2314, %v2315
        %v2317 = vrot.slane %v2316, 2
        %v2318 = vadd.f32 %v2316, %v2317
        %v2319 = vrot.slane %v2318, 1
        %v2320 = vadd.f32 %v2318, %v2319
        %v2321 = vsel %vm2077, %v2243, 0.0
        %v2322 = vsel %vm2077, %v2245, 0.0
        %v2323 = vadd.f32 %v2321, %v2322
        %v2324 = vsel %vm2077, %v2247, 0.0
        %v2325 = vadd.f32 %v2323, %v2324
        %v2326 = vsel %vm2077, %v2249, 0.0
        %v2327 = vadd.f32 %v2325, %v2326
        %v2328 = vsel %vm2077, %v2251, 0.0
        %v2329 = vadd.f32 %v2327, %v2328
        %v2330 = vsel %vm2077, %v2253, 0.0
        %v2331 = vadd.f32 %v2329, %v2330
        %v2332 = vsel %vm2077, %v2255, 0.0
        %v2333 = vadd.f32 %v2331, %v2332
        %v2334 = vsel %vm2077, %v2257, 0.0
        %v2335 = vadd.f32 %v2333, %v2334
        %v2336 = vrot.slane %v2335, 4
        %v2337 = vadd.f32 %v2335, %v2336
        %v2338 = vrot.slane %v2337, 2
        %v2339 = vadd.f32 %v2337, %v2338
        %v2340 = vrot.slane %v2339, 1
        %v2341 = vadd.f32 %v2339, %v2340
        %v2342 = vrcp.pop %v2278
        %v2343 = vmul.f32 1.0, %v2342
        %v2344 = vrcp.pop %v2299
        %v2345 = vmul.f32 1.0, %v2344
        %v2346 = vrcp.pop %v2320
        %v2347 = vmul.f32 1.0, %v2346
        %v2348 = vrcp.pop %v2341
        %v2349 = vmul.f32 1.0, %v2348
        %v2350 = vmul.f32 %v2195, %v2343
        %v2351 = vmul.f32 %v2197, %v2343
        %v2352 = vmul.f32 %v2199, %v2343
        %v2353 = vmul.f32 %v2201, %v2343
        %v2354 = vmul.f32 %v2203, %v2343
        %v2355 = vmul.f32 %v2205, %v2343
        %v2356 = vmul.f32 %v2207, %v2343
        %v2357 = vmul.f32 %v2209, %v2343
        %v2358 = vmul.f32 %v2211, %v2345
        %v2359 = vmul.f32 %v2213, %v2345
        %v2360 = vmul.f32 %v2215, %v2345
        %v2361 = vmul.f32 %v2217, %v2345
        %v2362 = vmul.f32 %v2219, %v2345
        %v2363 = vmul.f32 %v2221, %v2345
        %v2364 = vmul.f32 %v2223, %v2345
        %v2365 = vmul.f32 %v2225, %v2345
        %v2366 = vmul.f32 %v2227, %v2347
        %v2367 = vmul.f32 %v2229, %v2347
        %v2368 = vmul.f32 %v2231, %v2347
        %v2369 = vmul.f32 %v2233, %v2347
        %v2370 = vmul.f32 %v2235, %v2347
        %v2371 = vmul.f32 %v2237, %v2347
        %v2372 = vmul.f32 %v2239, %v2347
        %v2373 = vmul.f32 %v2241, %v2347
        %v2374 = vmul.f32 %v2243, %v2349
        %v2375 = vmul.f32 %v2245, %v2349
        %v2376 = vmul.f32 %v2247, %v2349
        %v2377 = vmul.f32 %v2249, %v2349
        %v2378 = vmul.f32 %v2251, %v2349
        %v2379 = vmul.f32 %v2253, %v2349
        %v2380 = vmul.f32 %v2255, %v2349
        %v2381 = vmul.f32 %v2257, %v2349
        %v2382 = vpack.c.bf16 %v2351, %v2350
        %v2383 = vpack.c.bf16 %v2353, %v2352
        %v2384 = vpack.c.bf16 %v2355, %v2354
        %v2385 = vpack.c.bf16 %v2357, %v2356
        %v2386 = vpack.c.bf16 %v2359, %v2358
        %v2387 = vpack.c.bf16 %v2361, %v2360
        %v2388 = vpack.c.bf16 %v2363, %v2362
        %v2389 = vpack.c.bf16 %v2365, %v2364
        %v2390 = vpack.c.bf16 %v2367, %v2366
        %v2391 = vpack.c.bf16 %v2369, %v2368
        %v2392 = vpack.c.bf16 %v2371, %v2370
        %v2393 = vpack.c.bf16 %v2373, %v2372
        %v2394 = vpack.c.bf16 %v2375, %v2374
        %v2395 = vpack.c.bf16 %v2377, %v2376
        %v2396 = vpack.c.bf16 %v2379, %v2378
        %v2397 = vpack.c.bf16 %v2381, %v2380
        %v2398 = vld [vmem:[%s17] sm:$0x3]
        %v2400 = vsel %vm2077, %v2382, 0
        %v2403 = vsel %vm2077, %v2383, 0
        %v2406 = vsel %vm2077, %v2384, 0
        %v2409 = vsel %vm2077, %v2385, 0
        %v2412 = vsel %vm2077, %v2386, 0
        %v2415 = vsel %vm2077, %v2387, 0
        %v2418 = vsel %vm2077, %v2388, 0
        %v2421 = vsel %vm2077, %v2389, 0
        %v2424 = vsel %vm2077, %v2390, 0
        %v2427 = vsel %vm2077, %v2391, 0
        %v2430 = vsel %vm2077, %v2392, 0
        %v2433 = vsel %vm2077, %v2393, 0
        %v2436 = vsel %vm2077, %v2394, 0
        %v2439 = vsel %vm2077, %v2395, 0
        %v2442 = vsel %vm2077, %v2396, 0
        %v2445 = vsel %vm2077, %v2397, 0
        %vm2447 = vcmask 1041408
        %v2449 = vsel %vm2447, %v2398, 0
        %2451 = vmatprep.subr.bf16.mxu0 0
        %2452 = vmatpush1.bf16.msra.mxu0 %v2449
        %2453 = vmatprep.subr.bf16.mxu0 0
        %2454 = vmatpush1.bf16.msra.mxu0 0
        %2455 = vmatprep.subr.bf16.mxu0 0
        %2456 = vmatpush1.bf16.msra.mxu0 0
        %2457 = vmatprep.subr.bf16.mxu0 0
        %2458 = vmatpush1.bf16.msra.mxu0 0
        %2459 = vmatprep.subr.bf16.mxu0 0
        %2460 = vmatpush1.bf16.msra.mxu0 0
        %2461 = vmatprep.subr.bf16.mxu0 0
        %2462 = vmatpush1.bf16.msra.mxu0 0
        %2463 = vmatprep.subr.bf16.mxu0 0
        %2464 = vmatpush1.bf16.msra.mxu0 0
        %2465 = vmatprep.subr.bf16.mxu0 0
        %2466 = vmatpush1.bf16.msra.mxu0 0
        %2467 = vmatprep.subr.bf16.mxu0 0
        %2468 = vmatpush1.bf16.msra.mxu0 0
        %2469 = vmatprep.subr.bf16.mxu0 0
        %2470 = vmatpush1.bf16.msra.mxu0 0
        %2471 = vmatprep.subr.bf16.mxu0 0
        %2472 = vmatpush1.bf16.msra.mxu0 0
        %2473 = vmatprep.subr.bf16.mxu0 0
        %2474 = vmatpush1.bf16.msra.mxu0 0
        %2475 = vmatprep.subr.bf16.mxu0 0
        %2476 = vmatpush1.bf16.msra.mxu0 0
        %2477 = vmatprep.subr.bf16.mxu0 0
        %2478 = vmatpush1.bf16.msra.mxu0 0
        %2479 = vmatprep.subr.bf16.mxu0 0
        %2480 = vmatpush1.bf16.msra.mxu0 0
        %2481 = vmatprep.subr.bf16.mxu0 0
        %2482 = vmatpush1.bf16.msra.mxu0 0
        %2483 = vmatprep.mubr.bf16.mxu0 0
        %2484 = vmatmul.mubr.bf16.gmra.mrb[0].mxu0 %v2400
        %v2485 = vpop.f32.mrb[0].mxu0
        %v2486 = vadd.f32 0.0, %v2485
        %v2487 = vpop.f32.mrb[0].mxu0
        %v2488 = vpop.f32.mrb[0].mxu0
        %v2489 = vadd.f32 0.0, %v2488
        %v2490 = vpop.f32.mrb[0].mxu0
        %2491 = vmatprep.mubr.bf16.mxu0 0
        %2492 = vmatmul.mubr.bf16.gmra.mrb[0].mxu0 %v2403
        %v2493 = vpop.f32.mrb[0].mxu0
        %v2494 = vadd.f32 0.0, %v2493
        %v2495 = vpop.f32.mrb[0].mxu0
        %v2496 = vpop.f32.mrb[0].mxu0
        %v2497 = vadd.f32 0.0, %v2496
        %v2498 = vpop.f32.mrb[0].mxu0
        %2499 = vmatprep.mubr.bf16.mxu0 0
        %2500 = vmatmul.mubr.bf16.gmra.mrb[0].mxu0 %v2406
        %v2501 = vpop.f32.mrb[0].mxu0
        %v2502 = vadd.f32 0.0, %v2501
        %v2503 = vpop.f32.mrb[0].mxu0
        %v2504 = vpop.f32.mrb[0].mxu0
        %v2505 = vadd.f32 0.0, %v2504
        %v2506 = vpop.f32.mrb[0].mxu0
        %2507 = vmatprep.mubr.bf16.mxu0 0
        %2508 = vmatmul.mubr.bf16.gmra.mrb[0].mxu0 %v2409
        %v2509 = vpop.f32.mrb[0].mxu0
        %v2510 = vadd.f32 0.0, %v2509
        %v2511 = vpop.f32.mrb[0].mxu0
        %v2512 = vpop.f32.mrb[0].mxu0
        %v2513 = vadd.f32 0.0, %v2512
        %v2514 = vpop.f32.mrb[0].mxu0
        %2515 = vmatprep.mubr.bf16.mxu0 0
        %2516 = vmatmul.mubr.bf16.gmra.mrb[0].mxu0 %v2412
        %v2517 = vpop.f32.mrb[0].mxu0
        %v2518 = vadd.f32 0.0, %v2517
        %v2519 = vpop.f32.mrb[0].mxu0
        %v2520 = vpop.f32.mrb[0].mxu0
        %v2521 = vadd.f32 0.0, %v2520
        %v2522 = vpop.f32.mrb[0].mxu0
        %2523 = vmatprep.mubr.bf16.mxu0 0
        %2524 = vmatmul.mubr.bf16.gmra.mrb[0].mxu0 %v2415
        %v2525 = vpop.f32.mrb[0].mxu0
        %v2526 = vadd.f32 0.0, %v2525
        %v2527 = vpop.f32.mrb[0].mxu0
        %v2528 = vpop.f32.mrb[0].mxu0
        %v2529 = vadd.f32 0.0, %v2528
        %v2530 = vpop.f32.mrb[0].mxu0
        %2531 = vmatprep.mubr.bf16.mxu0 0
        %2532 = vmatmul.mubr.bf16.gmra.mrb[0].mxu0 %v2418
        %v2533 = vpop.f32.mrb[0].mxu0
        %v2534 = vadd.f32 0.0, %v2533
        %v2535 = vpop.f32.mrb[0].mxu0
        %v2536 = vpop.f32.mrb[0].mxu0
        %v2537 = vadd.f32 0.0, %v2536
        %v2538 = vpop.f32.mrb[0].mxu0
        %2539 = vmatprep.mubr.bf16.mxu0 0
        %2540 = vmatmul.mubr.bf16.gmra.mrb[0].mxu0 %v2421
        %v2541 = vpop.f32.mrb[0].mxu0
        %v2542 = vadd.f32 0.0, %v2541
        %v2543 = vpop.f32.mrb[0].mxu0
        %v2544 = vpop.f32.mrb[0].mxu0
        %v2545 = vadd.f32 0.0, %v2544
        %v2546 = vpop.f32.mrb[0].mxu0
        %2547 = vmatprep.mubr.bf16.mxu0 0
        %2548 = vmatmul.mubr.bf16.gmra.mrb[0].mxu0 %v2424
        %v2549 = vpop.f32.mrb[0].mxu0
        %v2550 = vadd.f32 0.0, %v2549
        %v2551 = vpop.f32.mrb[0].mxu0
        %v2552 = vpop.f32.mrb[0].mxu0
        %v2553 = vadd.f32 0.0, %v2552
        %v2554 = vpop.f32.mrb[0].mxu0
        %2555 = vmatprep.mubr.bf16.mxu0 0
        %2556 = vmatmul.mubr.bf16.gmra.mrb[0].mxu0 %v2427
        %v2557 = vpop.f32.mrb[0].mxu0
        %v2558 = vadd.f32 0.0, %v2557
        %v2559 = vpop.f32.mrb[0].mxu0
        %v2560 = vpop.f32.mrb[0].mxu0
        %v2561 = vadd.f32 0.0, %v2560
        %v2562 = vpop.f32.mrb[0].mxu0
        %2563 = vmatprep.mubr.bf16.mxu0 0
        %2564 = vmatmul.mubr.bf16.gmra.mrb[0].mxu0 %v2430
        %v2565 = vpop.f32.mrb[0].mxu0
        %v2566 = vadd.f32 0.0, %v2565
        %v2567 = vpop.f32.mrb[0].mxu0
        %v2568 = vpop.f32.mrb[0].mxu0
        %v2569 = vadd.f32 0.0, %v2568
        %v2570 = vpop.f32.mrb[0].mxu0
        %2571 = vmatprep.mubr.bf16.mxu0 0
        %2572 = vmatmul.mubr.bf16.gmra.mrb[0].mxu0 %v2433
        %v2573 = vpop.f32.mrb[0].mxu0
        %v2574 = vadd.f32 0.0, %v2573
        %v2575 = vpop.f32.mrb[0].mxu0
        %v2576 = vpop.f32.mrb[0].mxu0
        %v2577 = vadd.f32 0.0, %v2576
        %v2578 = vpop.f32.mrb[0].mxu0
        %2579 = vmatprep.mubr.bf16.mxu0 0
        %2580 = vmatmul.mubr.bf16.gmra.mrb[0].mxu0 %v2436
        %v2581 = vpop.f32.mrb[0].mxu0
        %v2582 = vadd.f32 0.0, %v2581
        %v2583 = vpop.f32.mrb[0].mxu0
        %v2584 = vpop.f32.mrb[0].mxu0
        %v2585 = vadd.f32 0.0, %v2584
        %v2586 = vpop.f32.mrb[0].mxu0
        %2587 = vmatprep.mubr.bf16.mxu0 0
        %2588 = vmatmul.mubr.bf16.gmra.mrb[0].mxu0 %v2439
        %v2589 = vpop.f32.mrb[0].mxu0
        %v2590 = vadd.f32 0.0, %v2589
        %v2591 = vpop.f32.mrb[0].mxu0
        %v2592 = vpop.f32.mrb[0].mxu0
        %v2593 = vadd.f32 0.0, %v2592
        %v2594 = vpop.f32.mrb[0].mxu0
        %2595 = vmatprep.mubr.bf16.mxu0 0
        %2596 = vmatmul.mubr.bf16.gmra.mrb[0].mxu0 %v2442
        %v2597 = vpop.f32.mrb[0].mxu0
        %v2598 = vadd.f32 0.0, %v2597
        %v2599 = vpop.f32.mrb[0].mxu0
        %v2600 = vpop.f32.mrb[0].mxu0
        %v2601 = vadd.f32 0.0, %v2600
        %v2602 = vpop.f32.mrb[0].mxu0
        %2603 = vmatprep.mubr.bf16.mxu0 0
        %2604 = vmatmul.mubr.bf16.gmra.mrb[0].mxu0 %v2445
        %v2605 = vpop.f32.mrb[0].mxu0
        %v2606 = vadd.f32 0.0, %v2605
        %v2607 = vpop.f32.mrb[0].mxu0
        %v2608 = vpop.f32.mrb[0].mxu0
        %v2609 = vadd.f32 0.0, %v2608
        %v2610 = vpop.f32.mrb[0].mxu0
        %2611 = vdwg.mxu0
        %v2612 = vmul.f32 %v2486, %v1603
        %v2613 = vmul.f32 %v2489, %v1607
        %v2614 = vmul.f32 %v2494, %v1613
        %v2615 = vmul.f32 %v2497, %v1617
        %v2616 = vmul.f32 %v2502, %v1623
        %v2617 = vmul.f32 %v2505, %v1627
        %v2618 = vmul.f32 %v2510, %v1633
        %v2619 = vmul.f32 %v2513, %v1637
        %v2620 = vmul.f32 %v2518, %v1643
        %v2621 = vmul.f32 %v2521, %v1647
        %v2622 = vmul.f32 %v2526, %v1653
        %v2623 = vmul.f32 %v2529, %v1657
        %v2624 = vmul.f32 %v2534, %v1663
        %v2625 = vmul.f32 %v2537, %v1667
        %v2626 = vmul.f32 %v2542, %v1673
        %v2627 = vmul.f32 %v2545, %v1677
        %v2628 = vmul.f32 %v2550, %v1683
        %v2629 = vmul.f32 %v2553, %v1687
        %v2630 = vmul.f32 %v2558, %v1693
        %v2631 = vmul.f32 %v2561, %v1697
        %v2632 = vmul.f32 %v2566, %v1703
        %v2633 = vmul.f32 %v2569, %v1707
        %v2634 = vmul.f32 %v2574, %v1713
        %v2635 = vmul.f32 %v2577, %v1717
        %v2636 = vmul.f32 %v2582, %v1723
        %v2637 = vmul.f32 %v2585, %v1727
        %v2638 = vmul.f32 %v2590, %v1733
        %v2639 = vmul.f32 %v2593, %v1737
        %v2640 = vmul.f32 %v2598, %v1743
        %v2641 = vmul.f32 %v2601, %v1747
        %v2642 = vmul.f32 %v2606, %v1753
        %v2643 = vmul.f32 %v2609, %v1757
        %v2644 = vpack.c.bf16 %v2613, %v2612
        %v2645 = vpack.c.bf16 %v2615, %v2614
        %v2646 = vpack.c.bf16 %v2617, %v2616
        %v2647 = vpack.c.bf16 %v2619, %v2618
        %v2648 = vpack.c.bf16 %v2621, %v2620
        %v2649 = vpack.c.bf16 %v2623, %v2622
        %v2650 = vpack.c.bf16 %v2625, %v2624
        %v2651 = vpack.c.bf16 %v2627, %v2626
        %v2652 = vpack.c.bf16 %v2629, %v2628
        %v2653 = vpack.c.bf16 %v2631, %v2630
        %v2654 = vpack.c.bf16 %v2633, %v2632
        %v2655 = vpack.c.bf16 %v2635, %v2634
        %v2656 = vpack.c.bf16 %v2637, %v2636
        %v2657 = vpack.c.bf16 %v2639, %v2638
        %v2658 = vpack.c.bf16 %v2641, %v2640
        %v2659 = vpack.c.bf16 %v2643, %v2642
        %v2660 = vld [vmem:[#allocation7] sm:$0xf]
        %v2661 = vld [vmem:[#allocation7 + $0x4] sm:$0xf]
        %v2662 = vld [vmem:[#allocation7 + $0x8] sm:$0xf]
        %v2663 = vld [vmem:[#allocation7 + $0xc] sm:$0xf]
        %v2664 = vld [vmem:[#allocation7 + $0x10] sm:$0xf]
        %v2665 = vld [vmem:[#allocation7 + $0x14] sm:$0xf]
        %v2666 = vld [vmem:[#allocation7 + $0x18] sm:$0xf]
        %v2667 = vld [vmem:[#allocation7 + $0x1c] sm:$0xf]
        %v2668 = vld [vmem:[#allocation7 + $0x20] sm:$0xf]
        %v2669 = vld [vmem:[#allocation7 + $0x24] sm:$0xf]
        %v2670 = vld [vmem:[#allocation7 + $0x28] sm:$0xf]
        %v2671 = vld [vmem:[#allocation7 + $0x2c] sm:$0xf]
        %v2672 = vld [vmem:[#allocation7 + $0x30] sm:$0xf]
        %v2673 = vld [vmem:[#allocation7 + $0x34] sm:$0xf]
        %v2674 = vld [vmem:[#allocation7 + $0x38] sm:$0xf]
        %v2675 = vld [vmem:[#allocation7 + $0x3c] sm:$0xf]
        %v2676 = vld [vmem:[%s7] sm:$0x1]
        %v2678 = vlaneseq
        %v2679 = vshrl.u32 %v2678, 7
        %v2680 = vsub.s32 0, %v2679
        %v2681 = vrot.slane %v2676, %v2680
        %v2699 = vunpack.c.l.b16 %v2660
        %v2700 = vunpack.c.l.b16 %v2661
        %v2701 = vunpack.c.l.b16 %v2662
        %v2702 = vunpack.c.l.b16 %v2663
        %v2703 = vunpack.c.l.b16 %v2664
        %v2704 = vunpack.c.l.b16 %v2665
        %v2705 = vunpack.c.l.b16 %v2666
        %v2706 = vunpack.c.l.b16 %v2667
        %v2707 = vunpack.c.l.b16 %v2668
        %v2708 = vunpack.c.l.b16 %v2669
        %v2709 = vunpack.c.l.b16 %v2670
        %v2710 = vunpack.c.l.b16 %v2671
        %v2711 = vunpack.c.l.b16 %v2672
        %v2712 = vunpack.c.l.b16 %v2673
        %v2713 = vunpack.c.l.b16 %v2674
        %v2714 = vunpack.c.l.b16 %v2675
        %v2715 = vpack.c.b16 %v2700, %v2699
        %v2716 = vpack.c.b16 %v2702, %v2701
        %v2717 = vpack.c.b16 %v2704, %v2703
        %v2718 = vpack.c.b16 %v2706, %v2705
        %v2719 = vpack.c.b16 %v2708, %v2707
        %v2720 = vpack.c.b16 %v2710, %v2709
        %v2721 = vpack.c.b16 %v2712, %v2711
        %v2722 = vpack.c.b16 %v2714, %v2713
        %2731 = vmatprep.subr.bf16.mxu0 0
        %2732 = vmatpush1.bf16.msra.mxu0 %v2715
        %2733 = vmatprep.subr.bf16.mxu0 0
        %2734 = vmatpush1.bf16.msra.mxu0 %v2716
        %2735 = vmatprep.subr.bf16.mxu0 0
        %2736 = vmatpush1.bf16.msra.mxu0 %v2717
        %2737 = vmatprep.subr.bf16.mxu0 0
        %2738 = vmatpush1.bf16.msra.mxu0 %v2718
        %2739 = vmatprep.subr.bf16.mxu0 0
        %2740 = vmatpush1.bf16.msra.mxu0 %v2719
        %2741 = vmatprep.subr.bf16.mxu0 0
        %2742 = vmatpush1.bf16.msra.mxu0 %v2720
        %2743 = vmatprep.subr.bf16.mxu0 0
        %2744 = vmatpush1.bf16.msra.mxu0 %v2721
        %2745 = vmatprep.subr.bf16.mxu0 0
        %2746 = vmatpush1.bf16.msra.mxu0 %v2722
        %2747 = vmatprep.subr.bf16.mxu0 0
        %2748 = vmatpush1.bf16.msra.mxu0 0
        %2749 = vmatprep.subr.bf16.mxu0 0
        %2750 = vmatpush1.bf16.msra.mxu0 0
        %2751 = vmatprep.subr.bf16.mxu0 0
        %2752 = vmatpush1.bf16.msra.mxu0 0
        %2753 = vmatprep.subr.bf16.mxu0 0
        %2754 = vmatpush1.bf16.msra.mxu0 0
        %2755 = vmatprep.subr.bf16.mxu0 0
        %2756 = vmatpush1.bf16.msra.mxu0 0
        %2757 = vmatprep.subr.bf16.mxu0 0
        %2758 = vmatpush1.bf16.msra.mxu0 0
        %2759 = vmatprep.subr.bf16.mxu0 0
        %2760 = vmatpush1.bf16.msra.mxu0 0
        %2761 = vmatprep.subr.bf16.mxu0 0
        %2762 = vmatpush1.bf16.msra.mxu0 0
        %2763 = vmatprep.mubr.bf16.mxu0 0
        %2764 = vmatmul.mubr.bf16.gmra.mrb[0].mxu0 %v2644
        %v2765 = vpop.f32.mrb[0].mxu0
        %v2766 = vadd.f32 %v2681, %v2765
        %v2767 = vpop.f32.mrb[0].mxu0
        %v2768 = vpop.f32.mrb[0].mxu0
        %v2769 = vadd.f32 %v2681, %v2768
        %v2770 = vpop.f32.mrb[0].mxu0
        %2771 = vmatprep.mubr.bf16.mxu0 0
        %2772 = vmatmul.mubr.bf16.gmra.mrb[0].mxu0 %v2645
        %v2773 = vpop.f32.mrb[0].mxu0
        %v2774 = vadd.f32 %v2681, %v2773
        %v2775 = vpop.f32.mrb[0].mxu0
        %v2776 = vpop.f32.mrb[0].mxu0
        %v2777 = vadd.f32 %v2681, %v2776
        %v2778 = vpop.f32.mrb[0].mxu0
        %2779 = vmatprep.mubr.bf16.mxu0 0
        %2780 = vmatmul.mubr.bf16.gmra.mrb[0].mxu0 %v2646
        %v2781 = vpop.f32.mrb[0].mxu0
        %v2782 = vadd.f32 %v2681, %v2781
        %v2783 = vpop.f32.mrb[0].mxu0
        %v2784 = vpop.f32.mrb[0].mxu0
        %v2785 = vadd.f32 %v2681, %v2784
        %v2786 = vpop.f32.mrb[0].mxu0
        %2787 = vmatprep.mubr.bf16.mxu0 0
        %2788 = vmatmul.mubr.bf16.gmra.mrb[0].mxu0 %v2647
        %v2789 = vpop.f32.mrb[0].mxu0
        %v2790 = vadd.f32 %v2681, %v2789
        %v2791 = vpop.f32.mrb[0].mxu0
        %v2792 = vpop.f32.mrb[0].mxu0
        %v2793 = vadd.f32 %v2681, %v2792
        %v2794 = vpop.f32.mrb[0].mxu0
        %2795 = vmatprep.mubr.bf16.mxu0 0
        %2796 = vmatmul.mubr.bf16.gmra.mrb[0].mxu0 %v2648
        %v2797 = vpop.f32.mrb[0].mxu0
        %v2798 = vadd.f32 %v2681, %v2797
        %v2799 = vpop.f32.mrb[0].mxu0
        %v2800 = vpop.f32.mrb[0].mxu0
        %v2801 = vadd.f32 %v2681, %v2800
        %v2802 = vpop.f32.mrb[0].mxu0
        %2803 = vmatprep.mubr.bf16.mxu0 0
        %2804 = vmatmul.mubr.bf16.gmra.mrb[0].mxu0 %v2649
        %v2805 = vpop.f32.mrb[0].mxu0
        %v2806 = vadd.f32 %v2681, %v2805
        %v2807 = vpop.f32.mrb[0].mxu0
        %v2808 = vpop.f32.mrb[0].mxu0
        %v2809 = vadd.f32 %v2681, %v2808
        %v2810 = vpop.f32.mrb[0].mxu0
        %2811 = vmatprep.mubr.bf16.mxu0 0
        %2812 = vmatmul.mubr.bf16.gmra.mrb[0].mxu0 %v2650
        %v2813 = vpop.f32.mrb[0].mxu0
        %v2814 = vadd.f32 %v2681, %v2813
        %v2815 = vpop.f32.mrb[0].mxu0
        %v2816 = vpop.f32.mrb[0].mxu0
        %v2817 = vadd.f32 %v2681, %v2816
        %v2818 = vpop.f32.mrb[0].mxu0
        %2819 = vmatprep.mubr.bf16.mxu0 0
        %2820 = vmatmul.mubr.bf16.gmra.mrb[0].mxu0 %v2651
        %v2821 = vpop.f32.mrb[0].mxu0
        %v2822 = vadd.f32 %v2681, %v2821
        %v2823 = vpop.f32.mrb[0].mxu0
        %v2824 = vpop.f32.mrb[0].mxu0
        %v2825 = vadd.f32 %v2681, %v2824
        %v2826 = vpop.f32.mrb[0].mxu0
        %2827 = vmatprep.mubr.bf16.mxu0 0
        %2828 = vmatmul.mubr.bf16.gmra.mrb[0].mxu0 %v2652
        %v2829 = vpop.f32.mrb[0].mxu0
        %v2830 = vadd.f32 %v2681, %v2829
        %v2831 = vpop.f32.mrb[0].mxu0
        %v2832 = vpop.f32.mrb[0].mxu0
        %v2833 = vadd.f32 %v2681, %v2832
        %v2834 = vpop.f32.mrb[0].mxu0
        %2835 = vmatprep.mubr.bf16.mxu0 0
        %2836 = vmatmul.mubr.bf16.gmra.mrb[0].mxu0 %v2653
        %v2837 = vpop.f32.mrb[0].mxu0
        %v2838 = vadd.f32 %v2681, %v2837
        %v2839 = vpop.f32.mrb[0].mxu0
        %v2840 = vpop.f32.mrb[0].mxu0
        %v2841 = vadd.f32 %v2681, %v2840
        %v2842 = vpop.f32.mrb[0].mxu0
        %2843 = vmatprep.mubr.bf16.mxu0 0
        %2844 = vmatmul.mubr.bf16.gmra.mrb[0].mxu0 %v2654
        %v2845 = vpop.f32.mrb[0].mxu0
        %v2846 = vadd.f32 %v2681, %v2845
        %v2847 = vpop.f32.mrb[0].mxu0
        %v2848 = vpop.f32.mrb[0].mxu0
        %v2849 = vadd.f32 %v2681, %v2848
        %v2850 = vpop.f32.mrb[0].mxu0
        %2851 = vmatprep.mubr.bf16.mxu0 0
        %2852 = vmatmul.mubr.bf16.gmra.mrb[0].mxu0 %v2655
        %v2853 = vpop.f32.mrb[0].mxu0
        %v2854 = vadd.f32 %v2681, %v2853
        %v2855 = vpop.f32.mrb[0].mxu0
        %v2856 = vpop.f32.mrb[0].mxu0
        %v2857 = vadd.f32 %v2681, %v2856
        %v2858 = vpop.f32.mrb[0].mxu0
        %2859 = vmatprep.mubr.bf16.mxu0 0
        %2860 = vmatmul.mubr.bf16.gmra.mrb[0].mxu0 %v2656
        %v2861 = vpop.f32.mrb[0].mxu0
        %v2862 = vadd.f32 %v2681, %v2861
        %v2863 = vpop.f32.mrb[0].mxu0
        %v2864 = vpop.f32.mrb[0].mxu0
        %v2865 = vadd.f32 %v2681, %v2864
        %v2866 = vpop.f32.mrb[0].mxu0
        %2867 = vmatprep.mubr.bf16.mxu0 0
        %2868 = vmatmul.mubr.bf16.gmra.mrb[0].mxu0 %v2657
        %v2869 = vpop.f32.mrb[0].mxu0
        %v2870 = vadd.f32 %v2681, %v2869
        %v2871 = vpop.f32.mrb[0].mxu0
        %v2872 = vpop.f32.mrb[0].mxu0
        %v2873 = vadd.f32 %v2681, %v2872
        %v2874 = vpop.f32.mrb[0].mxu0
        %2875 = vmatprep.mubr.bf16.mxu0 0
        %2876 = vmatmul.mubr.bf16.gmra.mrb[0].mxu0 %v2658
        %v2877 = vpop.f32.mrb[0].mxu0
        %v2878 = vadd.f32 %v2681, %v2877
        %v2879 = vpop.f32.mrb[0].mxu0
        %v2880 = vpop.f32.mrb[0].mxu0
        %v2881 = vadd.f32 %v2681, %v2880
        %v2882 = vpop.f32.mrb[0].mxu0
        %2883 = vmatprep.mubr.bf16.mxu0 0
        %2884 = vmatmul.mubr.bf16.gmra.mrb[0].mxu0 %v2659
        %v2885 = vpop.f32.mrb[0].mxu0
        %v2886 = vadd.f32 %v2681, %v2885
        %v2887 = vpop.f32.mrb[0].mxu0
        %v2888 = vpop.f32.mrb[0].mxu0
        %v2889 = vadd.f32 %v2681, %v2888
        %v2890 = vpop.f32.mrb[0].mxu0
        %2891 = vdwg.mxu0
        %v2892 = vld [vmem:[%s8] sm:$0x1]
        %v2894 = vlaneseq
        %v2895 = vshrl.u32 %v2894, 7
        %v2896 = vsub.s32 0, %v2895
        %v2897 = vrot.slane %v2892, %v2896
        %v2899 = vmul.f32 %v2897, %v2766
        %v2900 = vmul.f32 %v2897, %v2769
        %v2901 = vmul.f32 %v2897, %v2774
        %v2902 = vmul.f32 %v2897, %v2777
        %v2903 = vmul.f32 %v2897, %v2782
        %v2904 = vmul.f32 %v2897, %v2785
        %v2905 = vmul.f32 %v2897, %v2790
        %v2906 = vmul.f32 %v2897, %v2793
        %v2907 = vmul.f32 %v2897, %v2798
        %v2908 = vmul.f32 %v2897, %v2801
        %v2909 = vmul.f32 %v2897, %v2806
        %v2910 = vmul.f32 %v2897, %v2809
        %v2911 = vmul.f32 %v2897, %v2814
        %v2912 = vmul.f32 %v2897, %v2817
        %v2913 = vmul.f32 %v2897, %v2822
        %v2914 = vmul.f32 %v2897, %v2825
        %v2915 = vmul.f32 %v2897, %v2830
        %v2916 = vmul.f32 %v2897, %v2833
        %v2917 = vmul.f32 %v2897, %v2838
        %v2918 = vmul.f32 %v2897, %v2841
        %v2919 = vmul.f32 %v2897, %v2846
        %v2920 = vmul.f32 %v2897, %v2849
        %v2921 = vmul.f32 %v2897, %v2854
        %v2922 = vmul.f32 %v2897, %v2857
        %v2923 = vmul.f32 %v2897, %v2862
        %v2924 = vmul.f32 %v2897, %v2865
        %v2925 = vmul.f32 %v2897, %v2870
        %v2926 = vmul.f32 %v2897, %v2873
        %v2927 = vmul.f32 %v2897, %v2878
        %v2928 = vmul.f32 %v2897, %v2881
        %v2929 = vmul.f32 %v2897, %v2886
        %v2930 = vmul.f32 %v2897, %v2889
        %v2931 = vlaneseq
        %v2932 = vshrl.u32 %v2931, 7
        %v2933 = vsub.s32 0, %v2932
        %v2934 = vrot.slane %v679, %v2933
        %v2935 = vlaneseq
        %v2936 = vshrl.u32 %v2935, 7
        %v2937 = vsub.s32 0, %v2936
        %v2938 = vrot.slane %v680, %v2937
        %v2939 = vlaneseq
        %v2940 = vshrl.u32 %v2939, 7
        %v2941 = vsub.s32 0, %v2940
        %v2942 = vrot.slane %v681, %v2941
        %v2943 = vlaneseq
        %v2944 = vshrl.u32 %v2943, 7
        %v2945 = vsub.s32 0, %v2944
        %v2946 = vrot.slane %v682, %v2945
        %v2947 = vadd.f32 %v2934, %v2899
        %v2948 = vadd.f32 %v2934, %v2900
        %v2949 = vadd.f32 %v2934, %v2901
        %v2950 = vadd.f32 %v2934, %v2902
        %v2951 = vadd.f32 %v2934, %v2903
        %v2952 = vadd.f32 %v2934, %v2904
        %v2953 = vadd.f32 %v2934, %v2905
        %v2954 = vadd.f32 %v2934, %v2906
        %v2955 = vadd.f32 %v2938, %v2907
        %v2956 = vadd.f32 %v2938, %v2908
        %v2957 = vadd.f32 %v2938, %v2909
        %v2958 = vadd.f32 %v2938, %v2910
        %v2959 = vadd.f32 %v2938, %v2911
        %v2960 = vadd.f32 %v2938, %v2912
        %v2961 = vadd.f32 %v2938, %v2913
        %v2962 = vadd.f32 %v2938, %v2914
        %v2963 = vadd.f32 %v2942, %v2915
        %v2964 = vadd.f32 %v2942, %v2916
        %v2965 = vadd.f32 %v2942, %v2917
        %v2966 = vadd.f32 %v2942, %v2918
        %v2967 = vadd.f32 %v2942, %v2919
        %v2968 = vadd.f32 %v2942, %v2920
        %v2969 = vadd.f32 %v2942, %v2921
        %v2970 = vadd.f32 %v2942, %v2922
        %v2971 = vadd.f32 %v2946, %v2923
        %v2972 = vadd.f32 %v2946, %v2924
        %v2973 = vadd.f32 %v2946, %v2925
        %v2974 = vadd.f32 %v2946, %v2926
        %v2975 = vadd.f32 %v2946, %v2927
        %v2976 = vadd.f32 %v2946, %v2928
        %v2977 = vadd.f32 %v2946, %v2929
        %v2978 = vadd.f32 %v2946, %v2930
        %v2979 = vld [vmem:[%s9] sm:$0x1]
        %v2980 = vld [vmem:[%s10] sm:$0x1]
        %2981 = vadd.xlane.f32.xlu0 %v2947
        %v2982 = vpop.xlane.xlu0 %2981
        %2983 = vadd.xlane.f32.xlu0 %v2948
        %v2984 = vpop.xlane.xlu0 %2983
        %2985 = vadd.xlane.f32.xlu0 %v2949
        %v2986 = vpop.xlane.xlu0 %2985
        %2987 = vadd.xlane.f32.xlu0 %v2950
        %v2988 = vpop.xlane.xlu0 %2987
        %2989 = vadd.xlane.f32.xlu0 %v2951
        %v2990 = vpop.xlane.xlu0 %2989
        %2991 = vadd.xlane.f32.xlu0 %v2952
        %v2992 = vpop.xlane.xlu0 %2991
        %2993 = vadd.xlane.f32.xlu0 %v2953
        %v2994 = vpop.xlane.xlu0 %2993
        %2995 = vadd.xlane.f32.xlu0 %v2954
        %v2996 = vpop.xlane.xlu0 %2995
        %2997 = vadd.xlane.f32.xlu0 %v2955
        %v2998 = vpop.xlane.xlu0 %2997
        %2999 = vadd.xlane.f32.xlu0 %v2956
        %v3000 = vpop.xlane.xlu0 %2999
        %3001 = vadd.xlane.f32.xlu0 %v2957
        %v3002 = vpop.xlane.xlu0 %3001
        %3003 = vadd.xlane.f32.xlu0 %v2958
        %v3004 = vpop.xlane.xlu0 %3003
        %3005 = vadd.xlane.f32.xlu0 %v2959
        %v3006 = vpop.xlane.xlu0 %3005
        %3007 = vadd.xlane.f32.xlu0 %v2960
        %v3008 = vpop.xlane.xlu0 %3007
        %3009 = vadd.xlane.f32.xlu0 %v2961
        %v3010 = vpop.xlane.xlu0 %3009
        %3011 = vadd.xlane.f32.xlu0 %v2962
        %v3012 = vpop.xlane.xlu0 %3011
        %3013 = vadd.xlane.f32.xlu0 %v2963
        %v3014 = vpop.xlane.xlu0 %3013
        %3015 = vadd.xlane.f32.xlu0 %v2964
        %v3016 = vpop.xlane.xlu0 %3015
        %3017 = vadd.xlane.f32.xlu0 %v2965
        %v3018 = vpop.xlane.xlu0 %3017
        %3019 = vadd.xlane.f32.xlu0 %v2966
        %v3020 = vpop.xlane.xlu0 %3019
        %3021 = vadd.xlane.f32.xlu0 %v2967
        %v3022 = vpop.xlane.xlu0 %3021
        %3023 = vadd.xlane.f32.xlu0 %v2968
        %v3024 = vpop.xlane.xlu0 %3023
        %3025 = vadd.xlane.f32.xlu0 %v2969
        %v3026 = vpop.xlane.xlu0 %3025
        %3027 = vadd.xlane.f32.xlu0 %v2970
        %v3028 = vpop.xlane.xlu0 %3027
        %3029 = vadd.xlane.f32.xlu0 %v2971
        %v3030 = vpop.xlane.xlu0 %3029
        %3031 = vadd.xlane.f32.xlu0 %v2972
        %v3032 = vpop.xlane.xlu0 %3031
        %3033 = vadd.xlane.f32.xlu0 %v2973
        %v3034 = vpop.xlane.xlu0 %3033
        %3035 = vadd.xlane.f32.xlu0 %v2974
        %v3036 = vpop.xlane.xlu0 %3035
        %3037 = vadd.xlane.f32.xlu0 %v2975
        %v3038 = vpop.xlane.xlu0 %3037
        %3039 = vadd.xlane.f32.xlu0 %v2976
        %v3040 = vpop.xlane.xlu0 %3039
        %3041 = vadd.xlane.f32.xlu0 %v2977
        %v3042 = vpop.xlane.xlu0 %3041
        %3043 = vadd.xlane.f32.xlu0 %v2978
        %v3044 = vpop.xlane.xlu0 %3043
        %v3045 = vmul.f32 %v2982, %v780
        %v3046 = vmul.f32 %v2984, %v780
        %v3047 = vmul.f32 %v2986, %v780
        %v3048 = vmul.f32 %v2988, %v780
        %v3049 = vmul.f32 %v2990, %v780
        %v3050 = vmul.f32 %v2992, %v780
        %v3051 = vmul.f32 %v2994, %v780
        %v3052 = vmul.f32 %v2996, %v780
        %v3053 = vmul.f32 %v2998, %v780
        %v3054 = vmul.f32 %v3000, %v780
        %v3055 = vmul.f32 %v3002, %v780
        %v3056 = vmul.f32 %v3004, %v780
        %v3057 = vmul.f32 %v3006, %v780
        %v3058 = vmul.f32 %v3008, %v780
        %v3059 = vmul.f32 %v3010, %v780
        %v3060 = vmul.f32 %v3012, %v780
        %v3061 = vmul.f32 %v3014, %v780
        %v3062 = vmul.f32 %v3016, %v780
        %v3063 = vmul.f32 %v3018, %v780
        %v3064 = vmul.f32 %v3020, %v780
        %v3065 = vmul.f32 %v3022, %v780
        %v3066 = vmul.f32 %v3024, %v780
        %v3067 = vmul.f32 %v3026, %v780
        %v3068 = vmul.f32 %v3028, %v780
        %v3069 = vmul.f32 %v3030, %v780
        %v3070 = vmul.f32 %v3032, %v780
        %v3071 = vmul.f32 %v3034, %v780
        %v3072 = vmul.f32 %v3036, %v780
        %v3073 = vmul.f32 %v3038, %v780
        %v3074 = vmul.f32 %v3040, %v780
        %v3075 = vmul.f32 %v3042, %v780
        %v3076 = vmul.f32 %v3044, %v780
        %v3077 = vsub.f32 %v2947, %v3045
        %v3078 = vsub.f32 %v2948, %v3046
        %v3079 = vsub.f32 %v2949, %v3047
        %v3080 = vsub.f32 %v2950, %v3048
        %v3081 = vsub.f32 %v2951, %v3049
        %v3082 = vsub.f32 %v2952, %v3050
        %v3083 = vsub.f32 %v2953, %v3051
        %v3084 = vsub.f32 %v2954, %v3052
        %v3085 = vsub.f32 %v2955, %v3053
        %v3086 = vsub.f32 %v2956, %v3054
        %v3087 = vsub.f32 %v2957, %v3055
        %v3088 = vsub.f32 %v2958, %v3056
        %v3089 = vsub.f32 %v2959, %v3057
        %v3090 = vsub.f32 %v2960, %v3058
        %v3091 = vsub.f32 %v2961, %v3059
        %v3092 = vsub.f32 %v2962, %v3060
        %v3093 = vsub.f32 %v2963, %v3061
        %v3094 = vsub.f32 %v2964, %v3062
        %v3095 = vsub.f32 %v2965, %v3063
        %v3096 = vsub.f32 %v2966, %v3064
        %v3097 = vsub.f32 %v2967, %v3065
        %v3098 = vsub.f32 %v2968, %v3066
        %v3099 = vsub.f32 %v2969, %v3067
        %v3100 = vsub.f32 %v2970, %v3068
        %v3101 = vsub.f32 %v2971, %v3069
        %v3102 = vsub.f32 %v2972, %v3070
        %v3103 = vsub.f32 %v2973, %v3071
        %v3104 = vsub.f32 %v2974, %v3072
        %v3105 = vsub.f32 %v2975, %v3073
        %v3106 = vsub.f32 %v2976, %v3074
        %v3107 = vsub.f32 %v2977, %v3075
        %v3108 = vsub.f32 %v2978, %v3076
        %v3109 = vmul.f32 %v3077, %v3077
        %v3110 = vmul.f32 %v3078, %v3078
        %v3111 = vmul.f32 %v3079, %v3079
        %v3112 = vmul.f32 %v3080, %v3080
        %v3113 = vmul.f32 %v3081, %v3081
        %v3114 = vmul.f32 %v3082, %v3082
        %v3115 = vmul.f32 %v3083, %v3083
        %v3116 = vmul.f32 %v3084, %v3084
        %v3117 = vmul.f32 %v3085, %v3085
        %v3118 = vmul.f32 %v3086, %v3086
        %v3119 = vmul.f32 %v3087, %v3087
        %v3120 = vmul.f32 %v3088, %v3088
        %v3121 = vmul.f32 %v3089, %v3089
        %v3122 = vmul.f32 %v3090, %v3090
        %v3123 = vmul.f32 %v3091, %v3091
        %v3124 = vmul.f32 %v3092, %v3092
        %v3125 = vmul.f32 %v3093, %v3093
        %v3126 = vmul.f32 %v3094, %v3094
        %v3127 = vmul.f32 %v3095, %v3095
        %v3128 = vmul.f32 %v3096, %v3096
        %v3129 = vmul.f32 %v3097, %v3097
        %v3130 = vmul.f32 %v3098, %v3098
        %v3131 = vmul.f32 %v3099, %v3099
        %v3132 = vmul.f32 %v3100, %v3100
        %v3133 = vmul.f32 %v3101, %v3101
        %v3134 = vmul.f32 %v3102, %v3102
        %v3135 = vmul.f32 %v3103, %v3103
        %v3136 = vmul.f32 %v3104, %v3104
        %v3137 = vmul.f32 %v3105, %v3105
        %v3138 = vmul.f32 %v3106, %v3106
        %v3139 = vmul.f32 %v3107, %v3107
        %v3140 = vmul.f32 %v3108, %v3108
        %3141 = vadd.xlane.f32.xlu0 %v3109
        %v3142 = vpop.xlane.xlu0 %3141
        %3143 = vadd.xlane.f32.xlu0 %v3110
        %v3144 = vpop.xlane.xlu0 %3143
        %3145 = vadd.xlane.f32.xlu0 %v3111
        %v3146 = vpop.xlane.xlu0 %3145
        %3147 = vadd.xlane.f32.xlu0 %v3112
        %v3148 = vpop.xlane.xlu0 %3147
        %3149 = vadd.xlane.f32.xlu0 %v3113
        %v3150 = vpop.xlane.xlu0 %3149
        %3151 = vadd.xlane.f32.xlu0 %v3114
        %v3152 = vpop.xlane.xlu0 %3151
        %3153 = vadd.xlane.f32.xlu0 %v3115
        %v3154 = vpop.xlane.xlu0 %3153
        %3155 = vadd.xlane.f32.xlu0 %v3116
        %v3156 = vpop.xlane.xlu0 %3155
        %3157 = vadd.xlane.f32.xlu0 %v3117
        %v3158 = vpop.xlane.xlu0 %3157
        %3159 = vadd.xlane.f32.xlu0 %v3118
        %v3160 = vpop.xlane.xlu0 %3159
        %3161 = vadd.xlane.f32.xlu0 %v3119
        %v3162 = vpop.xlane.xlu0 %3161
        %3163 = vadd.xlane.f32.xlu0 %v3120
        %v3164 = vpop.xlane.xlu0 %3163
        %3165 = vadd.xlane.f32.xlu0 %v3121
        %v3166 = vpop.xlane.xlu0 %3165
        %3167 = vadd.xlane.f32.xlu0 %v3122
        %v3168 = vpop.xlane.xlu0 %3167
        %3169 = vadd.xlane.f32.xlu0 %v3123
        %v3170 = vpop.xlane.xlu0 %3169
        %3171 = vadd.xlane.f32.xlu0 %v3124
        %v3172 = vpop.xlane.xlu0 %3171
        %3173 = vadd.xlane.f32.xlu0 %v3125
        %v3174 = vpop.xlane.xlu0 %3173
        %3175 = vadd.xlane.f32.xlu0 %v3126
        %v3176 = vpop.xlane.xlu0 %3175
        %3177 = vadd.xlane.f32.xlu0 %v3127
        %v3178 = vpop.xlane.xlu0 %3177
        %3179 = vadd.xlane.f32.xlu0 %v3128
        %v3180 = vpop.xlane.xlu0 %3179
        %3181 = vadd.xlane.f32.xlu0 %v3129
        %v3182 = vpop.xlane.xlu0 %3181
        %3183 = vadd.xlane.f32.xlu0 %v3130
        %v3184 = vpop.xlane.xlu0 %3183
        %3185 = vadd.xlane.f32.xlu0 %v3131
        %v3186 = vpop.xlane.xlu0 %3185
        %3187 = vadd.xlane.f32.xlu0 %v3132
        %v3188 = vpop.xlane.xlu0 %3187
        %3189 = vadd.xlane.f32.xlu0 %v3133
        %v3190 = vpop.xlane.xlu0 %3189
        %3191 = vadd.xlane.f32.xlu0 %v3134
        %v3192 = vpop.xlane.xlu0 %3191
        %3193 = vadd.xlane.f32.xlu0 %v3135
        %v3194 = vpop.xlane.xlu0 %3193
        %3195 = vadd.xlane.f32.xlu0 %v3136
        %v3196 = vpop.xlane.xlu0 %3195
        %3197 = vadd.xlane.f32.xlu0 %v3137
        %v3198 = vpop.xlane.xlu0 %3197
        %3199 = vadd.xlane.f32.xlu0 %v3138
        %v3200 = vpop.xlane.xlu0 %3199
        %3201 = vadd.xlane.f32.xlu0 %v3139
        %v3202 = vpop.xlane.xlu0 %3201
        %3203 = vadd.xlane.f32.xlu0 %v3140
        %v3204 = vpop.xlane.xlu0 %3203
        %v3205 = vmul.f32 %v3142, %v780
        %v3206 = vmul.f32 %v3144, %v780
        %v3207 = vmul.f32 %v3146, %v780
        %v3208 = vmul.f32 %v3148, %v780
        %v3209 = vmul.f32 %v3150, %v780
        %v3210 = vmul.f32 %v3152, %v780
        %v3211 = vmul.f32 %v3154, %v780
        %v3212 = vmul.f32 %v3156, %v780
        %v3213 = vmul.f32 %v3158, %v780
        %v3214 = vmul.f32 %v3160, %v780
        %v3215 = vmul.f32 %v3162, %v780
        %v3216 = vmul.f32 %v3164, %v780
        %v3217 = vmul.f32 %v3166, %v780
        %v3218 = vmul.f32 %v3168, %v780
        %v3219 = vmul.f32 %v3170, %v780
        %v3220 = vmul.f32 %v3172, %v780
        %v3221 = vmul.f32 %v3174, %v780
        %v3222 = vmul.f32 %v3176, %v780
        %v3223 = vmul.f32 %v3178, %v780
        %v3224 = vmul.f32 %v3180, %v780
        %v3225 = vmul.f32 %v3182, %v780
        %v3226 = vmul.f32 %v3184, %v780
        %v3227 = vmul.f32 %v3186, %v780
        %v3228 = vmul.f32 %v3188, %v780
        %v3229 = vmul.f32 %v3190, %v780
        %v3230 = vmul.f32 %v3192, %v780
        %v3231 = vmul.f32 %v3194, %v780
        %v3232 = vmul.f32 %v3196, %v780
        %v3233 = vmul.f32 %v3198, %v780
        %v3234 = vmul.f32 %v3200, %v780
        %v3235 = vmul.f32 %v3202, %v780
        %v3236 = vmul.f32 %v3204, %v780
        %v3237 = vadd.f32 %v3205, 1e-05
        %v3238 = vadd.f32 %v3206, 1e-05
        %v3239 = vadd.f32 %v3207, 1e-05
        %v3240 = vadd.f32 %v3208, 1e-05
        %v3241 = vadd.f32 %v3209, 1e-05
        %v3242 = vadd.f32 %v3210, 1e-05
        %v3243 = vadd.f32 %v3211, 1e-05
        %v3244 = vadd.f32 %v3212, 1e-05
        %v3245 = vadd.f32 %v3213, 1e-05
        %v3246 = vadd.f32 %v3214, 1e-05
        %v3247 = vadd.f32 %v3215, 1e-05
        %v3248 = vadd.f32 %v3216, 1e-05
        %v3249 = vadd.f32 %v3217, 1e-05
        %v3250 = vadd.f32 %v3218, 1e-05
        %v3251 = vadd.f32 %v3219, 1e-05
        %v3252 = vadd.f32 %v3220, 1e-05
        %v3253 = vadd.f32 %v3221, 1e-05
        %v3254 = vadd.f32 %v3222, 1e-05
        %v3255 = vadd.f32 %v3223, 1e-05
        %v3256 = vadd.f32 %v3224, 1e-05
        %v3257 = vadd.f32 %v3225, 1e-05
        %v3258 = vadd.f32 %v3226, 1e-05
        %v3259 = vadd.f32 %v3227, 1e-05
        %v3260 = vadd.f32 %v3228, 1e-05
        %v3261 = vadd.f32 %v3229, 1e-05
        %v3262 = vadd.f32 %v3230, 1e-05
        %v3263 = vadd.f32 %v3231, 1e-05
        %v3264 = vadd.f32 %v3232, 1e-05
        %v3265 = vadd.f32 %v3233, 1e-05
        %v3266 = vadd.f32 %v3234, 1e-05
        %v3267 = vadd.f32 %v3235, 1e-05
        %v3268 = vadd.f32 %v3236, 1e-05
        %v3269 = vrsqrt.pop %v3237
        %v3270 = vrsqrt.pop %v3238
        %v3271 = vrsqrt.pop %v3239
        %v3272 = vrsqrt.pop %v3240
        %v3273 = vrsqrt.pop %v3241
        %v3274 = vrsqrt.pop %v3242
        %v3275 = vrsqrt.pop %v3243
        %v3276 = vrsqrt.pop %v3244
        %v3277 = vrsqrt.pop %v3245
        %v3278 = vrsqrt.pop %v3246
        %v3279 = vrsqrt.pop %v3247
        %v3280 = vrsqrt.pop %v3248
        %v3281 = vrsqrt.pop %v3249
        %v3282 = vrsqrt.pop %v3250
        %v3283 = vrsqrt.pop %v3251
        %v3284 = vrsqrt.pop %v3252
        %v3285 = vrsqrt.pop %v3253
        %v3286 = vrsqrt.pop %v3254
        %v3287 = vrsqrt.pop %v3255
        %v3288 = vrsqrt.pop %v3256
        %v3289 = vrsqrt.pop %v3257
        %v3290 = vrsqrt.pop %v3258
        %v3291 = vrsqrt.pop %v3259
        %v3292 = vrsqrt.pop %v3260
        %v3293 = vrsqrt.pop %v3261
        %v3294 = vrsqrt.pop %v3262
        %v3295 = vrsqrt.pop %v3263
        %v3296 = vrsqrt.pop %v3264
        %v3297 = vrsqrt.pop %v3265
        %v3298 = vrsqrt.pop %v3266
        %v3299 = vrsqrt.pop %v3267
        %v3300 = vrsqrt.pop %v3268
        %v3301 = vmul.f32 %v3077, %v3269
        %v3302 = vmul.f32 %v3078, %v3270
        %v3303 = vmul.f32 %v3079, %v3271
        %v3304 = vmul.f32 %v3080, %v3272
        %v3305 = vmul.f32 %v3081, %v3273
        %v3306 = vmul.f32 %v3082, %v3274
        %v3307 = vmul.f32 %v3083, %v3275
        %v3308 = vmul.f32 %v3084, %v3276
        %v3309 = vmul.f32 %v3085, %v3277
        %v3310 = vmul.f32 %v3086, %v3278
        %v3311 = vmul.f32 %v3087, %v3279
        %v3312 = vmul.f32 %v3088, %v3280
        %v3313 = vmul.f32 %v3089, %v3281
        %v3314 = vmul.f32 %v3090, %v3282
        %v3315 = vmul.f32 %v3091, %v3283
        %v3316 = vmul.f32 %v3092, %v3284
        %v3317 = vmul.f32 %v3093, %v3285
        %v3318 = vmul.f32 %v3094, %v3286
        %v3319 = vmul.f32 %v3095, %v3287
        %v3320 = vmul.f32 %v3096, %v3288
        %v3321 = vmul.f32 %v3097, %v3289
        %v3322 = vmul.f32 %v3098, %v3290
        %v3323 = vmul.f32 %v3099, %v3291
        %v3324 = vmul.f32 %v3100, %v3292
        %v3325 = vmul.f32 %v3101, %v3293
        %v3326 = vmul.f32 %v3102, %v3294
        %v3327 = vmul.f32 %v3103, %v3295
        %v3328 = vmul.f32 %v3104, %v3296
        %v3329 = vmul.f32 %v3105, %v3297
        %v3330 = vmul.f32 %v3106, %v3298
        %v3331 = vmul.f32 %v3107, %v3299
        %v3332 = vmul.f32 %v3108, %v3300
        %v3334 = vlaneseq
        %v3335 = vshrl.u32 %v3334, 7
        %v3336 = vsub.s32 0, %v3335
        %v3337 = vrot.slane %v2979, %v3336
        %v3339 = vmul.f32 %v3301, %v3337
        %v3340 = vmul.f32 %v3302, %v3337
        %v3341 = vmul.f32 %v3303, %v3337
        %v3342 = vmul.f32 %v3304, %v3337
        %v3343 = vmul.f32 %v3305, %v3337
        %v3344 = vmul.f32 %v3306, %v3337
        %v3345 = vmul.f32 %v3307, %v3337
        %v3346 = vmul.f32 %v3308, %v3337
        %v3347 = vmul.f32 %v3309, %v3337
        %v3348 = vmul.f32 %v3310, %v3337
        %v3349 = vmul.f32 %v3311, %v3337
        %v3350 = vmul.f32 %v3312, %v3337
        %v3351 = vmul.f32 %v3313, %v3337
        %v3352 = vmul.f32 %v3314, %v3337
        %v3353 = vmul.f32 %v3315, %v3337
        %v3354 = vmul.f32 %v3316, %v3337
        %v3355 = vmul.f32 %v3317, %v3337
        %v3356 = vmul.f32 %v3318, %v3337
        %v3357 = vmul.f32 %v3319, %v3337
        %v3358 = vmul.f32 %v3320, %v3337
        %v3359 = vmul.f32 %v3321, %v3337
        %v3360 = vmul.f32 %v3322, %v3337
        %v3361 = vmul.f32 %v3323, %v3337
        %v3362 = vmul.f32 %v3324, %v3337
        %v3363 = vmul.f32 %v3325, %v3337
        %v3364 = vmul.f32 %v3326, %v3337
        %v3365 = vmul.f32 %v3327, %v3337
        %v3366 = vmul.f32 %v3328, %v3337
        %v3367 = vmul.f32 %v3329, %v3337
        %v3368 = vmul.f32 %v3330, %v3337
        %v3369 = vmul.f32 %v3331, %v3337
        %v3370 = vmul.f32 %v3332, %v3337
        %v3372 = vlaneseq
        %v3373 = vshrl.u32 %v3372, 7
        %v3374 = vsub.s32 0, %v3373
        %v3375 = vrot.slane %v2980, %v3374
        %v3377 = vadd.f32 %v3339, %v3375
        %v3378 = vadd.f32 %v3340, %v3375
        %v3379 = vadd.f32 %v3341, %v3375
        %v3380 = vadd.f32 %v3342, %v3375
        %v3381 = vadd.f32 %v3343, %v3375
        %v3382 = vadd.f32 %v3344, %v3375
        %v3383 = vadd.f32 %v3345, %v3375
        %v3384 = vadd.f32 %v3346, %v3375
        %v3385 = vadd.f32 %v3347, %v3375
        %v3386 = vadd.f32 %v3348, %v3375
        %v3387 = vadd.f32 %v3349, %v3375
        %v3388 = vadd.f32 %v3350, %v3375
        %v3389 = vadd.f32 %v3351, %v3375
        %v3390 = vadd.f32 %v3352, %v3375
        %v3391 = vadd.f32 %v3353, %v3375
        %v3392 = vadd.f32 %v3354, %v3375
        %v3393 = vadd.f32 %v3355, %v3375
        %v3394 = vadd.f32 %v3356, %v3375
        %v3395 = vadd.f32 %v3357, %v3375
        %v3396 = vadd.f32 %v3358, %v3375
        %v3397 = vadd.f32 %v3359, %v3375
        %v3398 = vadd.f32 %v3360, %v3375
        %v3399 = vadd.f32 %v3361, %v3375
        %v3400 = vadd.f32 %v3362, %v3375
        %v3401 = vadd.f32 %v3363, %v3375
        %v3402 = vadd.f32 %v3364, %v3375
        %v3403 = vadd.f32 %v3365, %v3375
        %v3404 = vadd.f32 %v3366, %v3375
        %v3405 = vadd.f32 %v3367, %v3375
        %v3406 = vadd.f32 %v3368, %v3375
        %v3407 = vadd.f32 %v3369, %v3375
        %v3408 = vadd.f32 %v3370, %v3375
        %v3409 = vpack.c.bf16 %v3378, %v3377
        %v3410 = vpack.c.bf16 %v3380, %v3379
        %v3411 = vpack.c.bf16 %v3382, %v3381
        %v3412 = vpack.c.bf16 %v3384, %v3383
        %v3413 = vpack.c.bf16 %v3386, %v3385
        %v3414 = vpack.c.bf16 %v3388, %v3387
        %v3415 = vpack.c.bf16 %v3390, %v3389
        %v3416 = vpack.c.bf16 %v3392, %v3391
        %v3417 = vpack.c.bf16 %v3394, %v3393
        %v3418 = vpack.c.bf16 %v3396, %v3395
        %v3419 = vpack.c.bf16 %v3398, %v3397
        %v3420 = vpack.c.bf16 %v3400, %v3399
        %v3421 = vpack.c.bf16 %v3402, %v3401
        %v3422 = vpack.c.bf16 %v3404, %v3403
        %v3423 = vpack.c.bf16 %v3406, %v3405
        %v3424 = vpack.c.bf16 %v3408, %v3407
        %v3425 = vld [vmem:[#allocation8] sm:$0xff]
        %v3426 = vld [vmem:[#allocation8 + $0x8] sm:$0xff]
        %v3427 = vld [vmem:[#allocation8 + $0x10] sm:$0xff]
        %v3428 = vld [vmem:[#allocation8 + $0x18] sm:$0xff]
        %v3429 = vld [vmem:[#allocation8 + $0x20] sm:$0xff]
        %v3430 = vld [vmem:[#allocation8 + $0x28] sm:$0xff]
        %v3431 = vld [vmem:[#allocation8 + $0x30] sm:$0xff]
        %v3432 = vld [vmem:[#allocation8 + $0x38] sm:$0xff]
        %v3433 = vld [vmem:[#allocation8 + $0x40] sm:$0xff]
        %v3434 = vld [vmem:[#allocation8 + $0x48] sm:$0xff]
        %v3435 = vld [vmem:[#allocation8 + $0x50] sm:$0xff]
        %v3436 = vld [vmem:[#allocation8 + $0x58] sm:$0xff]
        %v3437 = vld [vmem:[#allocation8 + $0x60] sm:$0xff]
        %v3438 = vld [vmem:[#allocation8 + $0x68] sm:$0xff]
        %v3439 = vld [vmem:[#allocation8 + $0x70] sm:$0xff]
        %v3440 = vld [vmem:[#allocation8 + $0x78] sm:$0xff]
        %v3441 = vld [vmem:[#allocation8 + $0x80] sm:$0xff]
        %v3442 = vld [vmem:[#allocation8 + $0x88] sm:$0xff]
        %v3443 = vld [vmem:[#allocation8 + $0x90] sm:$0xff]
        %v3444 = vld [vmem:[#allocation8 + $0x98] sm:$0xff]
        %v3445 = vld [vmem:[#allocation8 + $0xa0] sm:$0xff]
        %v3446 = vld [vmem:[#allocation8 + $0xa8] sm:$0xff]
        %v3447 = vld [vmem:[#allocation8 + $0xb0] sm:$0xff]
        %v3448 = vld [vmem:[#allocation8 + $0xb8] sm:$0xff]
        %v3449 = vld [vmem:[#allocation8 + $0xc0] sm:$0xff]
        %v3450 = vld [vmem:[#allocation8 + $0xc8] sm:$0xff]
        %v3451 = vld [vmem:[#allocation8 + $0xd0] sm:$0xff]
        %v3452 = vld [vmem:[#allocation8 + $0xd8] sm:$0xff]
        %v3453 = vld [vmem:[#allocation8 + $0xe0] sm:$0xff]
        %v3454 = vld [vmem:[#allocation8 + $0xe8] sm:$0xff]
        %v3455 = vld [vmem:[#allocation8 + $0xf0] sm:$0xff]
        %v3456 = vld [vmem:[#allocation8 + $0xf8] sm:$0xff]
        %v3457 = vld [vmem:[%s12] sm:$0xf]
        %v3459 = vlaneseq
        %v3460 = vshrl.u32 %v3459, 7
        %v3461 = vsub.s32 0, %v3460
        %v3462 = vrot.slane %v3457, %v3461
        %v3463 = vlaneseq
        %v3464 = vshrl.u32 %v3463, 7
        %v3465 = vsub.s32 1, %v3464
        %v3466 = vrot.slane %v3457, %v3465
        %v3467 = vlaneseq
        %v3468 = vshrl.u32 %v3467, 7
        %v3469 = vsub.s32 2, %v3468
        %v3470 = vrot.slane %v3457, %v3469
        %v3471 = vlaneseq
        %v3472 = vshrl.u32 %v3471, 7
        %v3473 = vsub.s32 3, %v3472
        %v3474 = vrot.slane %v3457, %v3473
        %v3511 = vunpack.c.l.b16 %v3425
        %v3512 = vunpack.c.h.b16 %v3425
        %v3513 = vunpack.c.l.b16 %v3426
        %v3514 = vunpack.c.h.b16 %v3426
        %v3515 = vunpack.c.l.b16 %v3427
        %v3516 = vunpack.c.h.b16 %v3427
        %v3517 = vunpack.c.l.b16 %v3428
        %v3518 = vunpack.c.h.b16 %v3428
        %v3519 = vunpack.c.l.b16 %v3429
        %v3520 = vunpack.c.h.b16 %v3429
        %v3521 = vunpack.c.l.b16 %v3430
        %v3522 = vunpack.c.h.b16 %v3430
        %v3523 = vunpack.c.l.b16 %v3431
        %v3524 = vunpack.c.h.b16 %v3431
        %v3525 = vunpack.c.l.b16 %v3432
        %v3526 = vunpack.c.h.b16 %v3432
        %v3527 = vunpack.c.l.b16 %v3433
        %v3528 = vunpack.c.h.b16 %v3433
        %v3529 = vunpack.c.l.b16 %v3434
        %v3530 = vunpack.c.h.b16 %v3434
        %v3531 = vunpack.c.l.b16 %v3435
        %v3532 = vunpack.c.h.b16 %v3435
        %v3533 = vunpack.c.l.b16 %v3436
        %v3534 = vunpack.c.h.b16 %v3436
        %v3535 = vunpack.c.l.b16 %v3437
        %v3536 = vunpack.c.h.b16 %v3437
        %v3537 = vunpack.c.l.b16 %v3438
        %v3538 = vunpack.c.h.b16 %v3438
        %v3539 = vunpack.c.l.b16 %v3439
        %v3540 = vunpack.c.h.b16 %v3439
        %v3541 = vunpack.c.l.b16 %v3440
        %v3542 = vunpack.c.h.b16 %v3440
        %v3543 = vunpack.c.l.b16 %v3441
        %v3544 = vunpack.c.h.b16 %v3441
        %v3545 = vunpack.c.l.b16 %v3442
        %v3546 = vunpack.c.h.b16 %v3442
        %v3547 = vunpack.c.l.b16 %v3443
        %v3548 = vunpack.c.h.b16 %v3443
        %v3549 = vunpack.c.l.b16 %v3444
        %v3550 = vunpack.c.h.b16 %v3444
        %v3551 = vunpack.c.l.b16 %v3445
        %v3552 = vunpack.c.h.b16 %v3445
        %v3553 = vunpack.c.l.b16 %v3446
        %v3554 = vunpack.c.h.b16 %v3446
        %v3555 = vunpack.c.l.b16 %v3447
        %v3556 = vunpack.c.h.b16 %v3447
        %v3557 = vunpack.c.l.b16 %v3448
        %v3558 = vunpack.c.h.b16 %v3448
        %v3559 = vunpack.c.l.b16 %v3449
        %v3560 = vunpack.c.h.b16 %v3449
        %v3561 = vunpack.c.l.b16 %v3450
        %v3562 = vunpack.c.h.b16 %v3450
        %v3563 = vunpack.c.l.b16 %v3451
        %v3564 = vunpack.c.h.b16 %v3451
        %v3565 = vunpack.c.l.b16 %v3452
        %v3566 = vunpack.c.h.b16 %v3452
        %v3567 = vunpack.c.l.b16 %v3453
        %v3568 = vunpack.c.h.b16 %v3453
        %v3569 = vunpack.c.l.b16 %v3454
        %v3570 = vunpack.c.h.b16 %v3454
        %v3571 = vunpack.c.l.b16 %v3455
        %v3572 = vunpack.c.h.b16 %v3455
        %v3573 = vunpack.c.l.b16 %v3456
        %v3574 = vunpack.c.h.b16 %v3456
        %v3575 = vpack.c.b16 %v3515, %v3511
        %v3576 = vpack.c.b16 %v3516, %v3512
        %v3577 = vpack.c.b16 %v3517, %v3513
        %v3578 = vpack.c.b16 %v3518, %v3514
        %v3579 = vpack.c.b16 %v3523, %v3519
        %v3580 = vpack.c.b16 %v3524, %v3520
        %v3581 = vpack.c.b16 %v3525, %v3521
        %v3582 = vpack.c.b16 %v3526, %v3522
        %v3583 = vpack.c.b16 %v3531, %v3527
        %v3584 = vpack.c.b16 %v3532, %v3528
        %v3585 = vpack.c.b16 %v3533, %v3529
        %v3586 = vpack.c.b16 %v3534, %v3530
        %v3587 = vpack.c.b16 %v3539, %v3535
        %v3588 = vpack.c.b16 %v3540, %v3536
        %v3589 = vpack.c.b16 %v3541, %v3537
        %v3590 = vpack.c.b16 %v3542, %v3538
        %v3591 = vpack.c.b16 %v3547, %v3543
        %v3592 = vpack.c.b16 %v3548, %v3544
        %v3593 = vpack.c.b16 %v3549, %v3545
        %v3594 = vpack.c.b16 %v3550, %v3546
        %v3595 = vpack.c.b16 %v3555, %v3551
        %v3596 = vpack.c.b16 %v3556, %v3552
        %v3597 = vpack.c.b16 %v3557, %v3553
        %v3598 = vpack.c.b16 %v3558, %v3554
        %v3599 = vpack.c.b16 %v3563, %v3559
        %v3600 = vpack.c.b16 %v3564, %v3560
        %v3601 = vpack.c.b16 %v3565, %v3561
        %v3602 = vpack.c.b16 %v3566, %v3562
        %v3603 = vpack.c.b16 %v3571, %v3567
        %v3604 = vpack.c.b16 %v3572, %v3568
        %v3605 = vpack.c.b16 %v3573, %v3569
        %v3606 = vpack.c.b16 %v3574, %v3570
        %3639 = vmatprep.subr.bf16.mxu0 %v3576
        %3640 = vmatpush1.bf16.msra.mxu0 %v3575
        %3641 = vmatprep.subr.bf16.mxu0 %v3580
        %3642 = vmatpush1.bf16.msra.mxu0 %v3579
        %3643 = vmatprep.subr.bf16.mxu0 %v3584
        %3644 = vmatpush1.bf16.msra.mxu0 %v3583
        %3645 = vmatprep.subr.bf16.mxu0 %v3588
        %3646 = vmatpush1.bf16.msra.mxu0 %v3587
        %3647 = vmatprep.subr.bf16.mxu0 %v3592
        %3648 = vmatpush1.bf16.msra.mxu0 %v3591
        %3649 = vmatprep.subr.bf16.mxu0 %v3596
        %3650 = vmatpush1.bf16.msra.mxu0 %v3595
        %3651 = vmatprep.subr.bf16.mxu0 %v3600
        %3652 = vmatpush1.bf16.msra.mxu0 %v3599
        %3653 = vmatprep.subr.bf16.mxu0 %v3604
        %3654 = vmatpush1.bf16.msra.mxu0 %v3603
        %3655 = vmatprep.subr.bf16.mxu0 0
        %3656 = vmatpush1.bf16.msra.mxu0 0
        %3657 = vmatprep.subr.bf16.mxu0 0
        %3658 = vmatpush1.bf16.msra.mxu0 0
        %3659 = vmatprep.subr.bf16.mxu0 0
        %3660 = vmatpush1.bf16.msra.mxu0 0
        %3661 = vmatprep.subr.bf16.mxu0 0
        %3662 = vmatpush1.bf16.msra.mxu0 0
        %3663 = vmatprep.subr.bf16.mxu0 0
        %3664 = vmatpush1.bf16.msra.mxu0 0
        %3665 = vmatprep.subr.bf16.mxu0 0
        %3666 = vmatpush1.bf16.msra.mxu0 0
        %3667 = vmatprep.subr.bf16.mxu0 0
        %3668 = vmatpush1.bf16.msra.mxu0 0
        %3669 = vmatprep.subr.bf16.mxu0 0
        %3670 = vmatpush1.bf16.msra.mxu0 0
        %3671 = vmatprep.mubr.bf16.mxu0 0
        %3672 = vmatmul.mubr.bf16.gmra.mrb[0].mxu0 %v3409
        %v3673 = vpop.f32.mrb[0].mxu0
        %v3674 = vadd.f32 %v3462, %v3673
        %v3675 = vpop.f32.mrb[0].mxu0
        %v3676 = vadd.f32 %v3466, %v3675
        %v3677 = vpop.f32.mrb[0].mxu0
        %v3678 = vadd.f32 %v3462, %v3677
        %v3679 = vpop.f32.mrb[0].mxu0
        %v3680 = vadd.f32 %v3466, %v3679
        %3681 = vmatprep.mubr.bf16.mxu0 0
        %3682 = vmatmul.mubr.bf16.gmra.mrb[0].mxu0 %v3410
        %v3683 = vpop.f32.mrb[0].mxu0
        %v3684 = vadd.f32 %v3462, %v3683
        %v3685 = vpop.f32.mrb[0].mxu0
        %v3686 = vadd.f32 %v3466, %v3685
        %v3687 = vpop.f32.mrb[0].mxu0
        %v3688 = vadd.f32 %v3462, %v3687
        %v3689 = vpop.f32.mrb[0].mxu0
        %v3690 = vadd.f32 %v3466, %v3689
        %3691 = vmatprep.mubr.bf16.mxu0 0
        %3692 = vmatmul.mubr.bf16.gmra.mrb[0].mxu0 %v3411
        %v3693 = vpop.f32.mrb[0].mxu0
        %v3694 = vadd.f32 %v3462, %v3693
        %v3695 = vpop.f32.mrb[0].mxu0
        %v3696 = vadd.f32 %v3466, %v3695
        %v3697 = vpop.f32.mrb[0].mxu0
        %v3698 = vadd.f32 %v3462, %v3697
        %v3699 = vpop.f32.mrb[0].mxu0
        %v3700 = vadd.f32 %v3466, %v3699
        %3701 = vmatprep.mubr.bf16.mxu0 0
        %3702 = vmatmul.mubr.bf16.gmra.mrb[0].mxu0 %v3412
        %v3703 = vpop.f32.mrb[0].mxu0
        %v3704 = vadd.f32 %v3462, %v3703
        %v3705 = vpop.f32.mrb[0].mxu0
        %v3706 = vadd.f32 %v3466, %v3705
        %v3707 = vpop.f32.mrb[0].mxu0
        %v3708 = vadd.f32 %v3462, %v3707
        %v3709 = vpop.f32.mrb[0].mxu0
        %v3710 = vadd.f32 %v3466, %v3709
        %3711 = vmatprep.mubr.bf16.mxu0 0
        %3712 = vmatmul.mubr.bf16.gmra.mrb[0].mxu0 %v3413
        %v3713 = vpop.f32.mrb[0].mxu0
        %v3714 = vadd.f32 %v3462, %v3713
        %v3715 = vpop.f32.mrb[0].mxu0
        %v3716 = vadd.f32 %v3466, %v3715
        %v3717 = vpop.f32.mrb[0].mxu0
        %v3718 = vadd.f32 %v3462, %v3717
        %v3719 = vpop.f32.mrb[0].mxu0
        %v3720 = vadd.f32 %v3466, %v3719
        %3721 = vmatprep.mubr.bf16.mxu0 0
        %3722 = vmatmul.mubr.bf16.gmra.mrb[0].mxu0 %v3414
        %v3723 = vpop.f32.mrb[0].mxu0
        %v3724 = vadd.f32 %v3462, %v3723
        %v3725 = vpop.f32.mrb[0].mxu0
        %v3726 = vadd.f32 %v3466, %v3725
        %v3727 = vpop.f32.mrb[0].mxu0
        %v3728 = vadd.f32 %v3462, %v3727
        %v3729 = vpop.f32.mrb[0].mxu0
        %v3730 = vadd.f32 %v3466, %v3729
        %3731 = vmatprep.mubr.bf16.mxu0 0
        %3732 = vmatmul.mubr.bf16.gmra.mrb[0].mxu0 %v3415
        %v3733 = vpop.f32.mrb[0].mxu0
        %v3734 = vadd.f32 %v3462, %v3733
        %v3735 = vpop.f32.mrb[0].mxu0
        %v3736 = vadd.f32 %v3466, %v3735
        %v3737 = vpop.f32.mrb[0].mxu0
        %v3738 = vadd.f32 %v3462, %v3737
        %v3739 = vpop.f32.mrb[0].mxu0
        %v3740 = vadd.f32 %v3466, %v3739
        %3741 = vmatprep.mubr.bf16.mxu0 0
        %3742 = vmatmul.mubr.bf16.gmra.mrb[0].mxu0 %v3416
        %v3743 = vpop.f32.mrb[0].mxu0
        %v3744 = vadd.f32 %v3462, %v3743
        %v3745 = vpop.f32.mrb[0].mxu0
        %v3746 = vadd.f32 %v3466, %v3745
        %v3747 = vpop.f32.mrb[0].mxu0
        %v3748 = vadd.f32 %v3462, %v3747
        %v3749 = vpop.f32.mrb[0].mxu0
        %v3750 = vadd.f32 %v3466, %v3749
        %3751 = vmatprep.mubr.bf16.mxu0 0
        %3752 = vmatmul.mubr.bf16.gmra.mrb[0].mxu0 %v3417
        %v3753 = vpop.f32.mrb[0].mxu0
        %v3754 = vadd.f32 %v3462, %v3753
        %v3755 = vpop.f32.mrb[0].mxu0
        %v3756 = vadd.f32 %v3466, %v3755
        %v3757 = vpop.f32.mrb[0].mxu0
        %v3758 = vadd.f32 %v3462, %v3757
        %v3759 = vpop.f32.mrb[0].mxu0
        %v3760 = vadd.f32 %v3466, %v3759
        %3761 = vmatprep.mubr.bf16.mxu0 0
        %3762 = vmatmul.mubr.bf16.gmra.mrb[0].mxu0 %v3418
        %v3763 = vpop.f32.mrb[0].mxu0
        %v3764 = vadd.f32 %v3462, %v3763
        %v3765 = vpop.f32.mrb[0].mxu0
        %v3766 = vadd.f32 %v3466, %v3765
        %v3767 = vpop.f32.mrb[0].mxu0
        %v3768 = vadd.f32 %v3462, %v3767
        %v3769 = vpop.f32.mrb[0].mxu0
        %v3770 = vadd.f32 %v3466, %v3769
        %3771 = vmatprep.mubr.bf16.mxu0 0
        %3772 = vmatmul.mubr.bf16.gmra.mrb[0].mxu0 %v3419
        %v3773 = vpop.f32.mrb[0].mxu0
        %v3774 = vadd.f32 %v3462, %v3773
        %v3775 = vpop.f32.mrb[0].mxu0
        %v3776 = vadd.f32 %v3466, %v3775
        %v3777 = vpop.f32.mrb[0].mxu0
        %v3778 = vadd.f32 %v3462, %v3777
        %v3779 = vpop.f32.mrb[0].mxu0
        %v3780 = vadd.f32 %v3466, %v3779
        %3781 = vmatprep.mubr.bf16.mxu0 0
        %3782 = vmatmul.mubr.bf16.gmra.mrb[0].mxu0 %v3420
        %v3783 = vpop.f32.mrb[0].mxu0
        %v3784 = vadd.f32 %v3462, %v3783
        %v3785 = vpop.f32.mrb[0].mxu0
        %v3786 = vadd.f32 %v3466, %v3785
        %v3787 = vpop.f32.mrb[0].mxu0
        %v3788 = vadd.f32 %v3462, %v3787
        %v3789 = vpop.f32.mrb[0].mxu0
        %v3790 = vadd.f32 %v3466, %v3789
        %3791 = vmatprep.mubr.bf16.mxu0 0
        %3792 = vmatmul.mubr.bf16.gmra.mrb[0].mxu0 %v3421
        %v3793 = vpop.f32.mrb[0].mxu0
        %v3794 = vadd.f32 %v3462, %v3793
        %v3795 = vpop.f32.mrb[0].mxu0
        %v3796 = vadd.f32 %v3466, %v3795
        %v3797 = vpop.f32.mrb[0].mxu0
        %v3798 = vadd.f32 %v3462, %v3797
        %v3799 = vpop.f32.mrb[0].mxu0
        %v3800 = vadd.f32 %v3466, %v3799
        %3801 = vmatprep.mubr.bf16.mxu0 0
        %3802 = vmatmul.mubr.bf16.gmra.mrb[0].mxu0 %v3422
        %v3803 = vpop.f32.mrb[0].mxu0
        %v3804 = vadd.f32 %v3462, %v3803
        %v3805 = vpop.f32.mrb[0].mxu0
        %v3806 = vadd.f32 %v3466, %v3805
        %v3807 = vpop.f32.mrb[0].mxu0
        %v3808 = vadd.f32 %v3462, %v3807
        %v3809 = vpop.f32.mrb[0].mxu0
        %v3810 = vadd.f32 %v3466, %v3809
        %3811 = vmatprep.mubr.bf16.mxu0 0
        %3812 = vmatmul.mubr.bf16.gmra.mrb[0].mxu0 %v3423
        %v3813 = vpop.f32.mrb[0].mxu0
        %v3814 = vadd.f32 %v3462, %v3813
        %v3815 = vpop.f32.mrb[0].mxu0
        %v3816 = vadd.f32 %v3466, %v3815
        %v3817 = vpop.f32.mrb[0].mxu0
        %v3818 = vadd.f32 %v3462, %v3817
        %v3819 = vpop.f32.mrb[0].mxu0
        %v3820 = vadd.f32 %v3466, %v3819
        %3821 = vmatprep.mubr.bf16.mxu0 0
        %3822 = vmatmul.mubr.bf16.gmra.mrb[0].mxu0 %v3424
        %v3823 = vpop.f32.mrb[0].mxu0
        %v3824 = vadd.f32 %v3462, %v3823
        %v3825 = vpop.f32.mrb[0].mxu0
        %v3826 = vadd.f32 %v3466, %v3825
        %v3827 = vpop.f32.mrb[0].mxu0
        %v3828 = vadd.f32 %v3462, %v3827
        %v3829 = vpop.f32.mrb[0].mxu0
        %v3830 = vadd.f32 %v3466, %v3829
        %3831 = vdwg.mxu0
        %3832 = vmatprep.subr.bf16.mxu0 %v3578
        %3833 = vmatpush1.bf16.msra.mxu0 %v3577
        %3834 = vmatprep.subr.bf16.mxu0 %v3582
        %3835 = vmatpush1.bf16.msra.mxu0 %v3581
        %3836 = vmatprep.subr.bf16.mxu0 %v3586
        %3837 = vmatpush1.bf16.msra.mxu0 %v3585
        %3838 = vmatprep.subr.bf16.mxu0 %v3590
        %3839 = vmatpush1.bf16.msra.mxu0 %v3589
        %3840 = vmatprep.subr.bf16.mxu0 %v3594
        %3841 = vmatpush1.bf16.msra.mxu0 %v3593
        %3842 = vmatprep.subr.bf16.mxu0 %v3598
        %3843 = vmatpush1.bf16.msra.mxu0 %v3597
        %3844 = vmatprep.subr.bf16.mxu0 %v3602
        %3845 = vmatpush1.bf16.msra.mxu0 %v3601
        %3846 = vmatprep.subr.bf16.mxu0 %v3606
        %3847 = vmatpush1.bf16.msra.mxu0 %v3605
        %3848 = vmatprep.subr.bf16.mxu0 0
        %3849 = vmatpush1.bf16.msra.mxu0 0
        %3850 = vmatprep.subr.bf16.mxu0 0
        %3851 = vmatpush1.bf16.msra.mxu0 0
        %3852 = vmatprep.subr.bf16.mxu0 0
        %3853 = vmatpush1.bf16.msra.mxu0 0
        %3854 = vmatprep.subr.bf16.mxu0 0
        %3855 = vmatpush1.bf16.msra.mxu0 0
        %3856 = vmatprep.subr.bf16.mxu0 0
        %3857 = vmatpush1.bf16.msra.mxu0 0
        %3858 = vmatprep.subr.bf16.mxu0 0
        %3859 = vmatpush1.bf16.msra.mxu0 0
        %3860 = vmatprep.subr.bf16.mxu0 0
        %3861 = vmatpush1.bf16.msra.mxu0 0
        %3862 = vmatprep.subr.bf16.mxu0 0
        %3863 = vmatpush1.bf16.msra.mxu0 0
        %3864 = vmatprep.mubr.bf16.mxu0 0
        %3865 = vmatmul.mubr.bf16.gmra.mrb[0].mxu0 %v3409
        %v3866 = vpop.f32.mrb[0].mxu0
        %v3867 = vadd.f32 %v3470, %v3866
        %v3868 = vpop.f32.mrb[0].mxu0
        %v3869 = vadd.f32 %v3474, %v3868
        %v3870 = vpop.f32.mrb[0].mxu0
        %v3871 = vadd.f32 %v3470, %v3870
        %v3872 = vpop.f32.mrb[0].mxu0
        %v3873 = vadd.f32 %v3474, %v3872
        %3874 = vmatprep.mubr.bf16.mxu0 0
        %3875 = vmatmul.mubr.bf16.gmra.mrb[0].mxu0 %v3410
        %v3876 = vpop.f32.mrb[0].mxu0
        %v3877 = vadd.f32 %v3470, %v3876
        %v3878 = vpop.f32.mrb[0].mxu0
        %v3879 = vadd.f32 %v3474, %v3878
        %v3880 = vpop.f32.mrb[0].mxu0
        %v3881 = vadd.f32 %v3470, %v3880
        %v3882 = vpop.f32.mrb[0].mxu0
        %v3883 = vadd.f32 %v3474, %v3882
        %3884 = vmatprep.mubr.bf16.mxu0 0
        %3885 = vmatmul.mubr.bf16.gmra.mrb[0].mxu0 %v3411
        %v3886 = vpop.f32.mrb[0].mxu0
        %v3887 = vadd.f32 %v3470, %v3886
        %v3888 = vpop.f32.mrb[0].mxu0
        %v3889 = vadd.f32 %v3474, %v3888
        %v3890 = vpop.f32.mrb[0].mxu0
        %v3891 = vadd.f32 %v3470, %v3890
        %v3892 = vpop.f32.mrb[0].mxu0
        %v3893 = vadd.f32 %v3474, %v3892
        %3894 = vmatprep.mubr.bf16.mxu0 0
        %3895 = vmatmul.mubr.bf16.gmra.mrb[0].mxu0 %v3412
        %v3896 = vpop.f32.mrb[0].mxu0
        %v3897 = vadd.f32 %v3470, %v3896
        %v3898 = vpop.f32.mrb[0].mxu0
        %v3899 = vadd.f32 %v3474, %v3898
        %v3900 = vpop.f32.mrb[0].mxu0
        %v3901 = vadd.f32 %v3470, %v3900
        %v3902 = vpop.f32.mrb[0].mxu0
        %v3903 = vadd.f32 %v3474, %v3902
        %3904 = vmatprep.mubr.bf16.mxu0 0
        %3905 = vmatmul.mubr.bf16.gmra.mrb[0].mxu0 %v3413
        %v3906 = vpop.f32.mrb[0].mxu0
        %v3907 = vadd.f32 %v3470, %v3906
        %v3908 = vpop.f32.mrb[0].mxu0
        %v3909 = vadd.f32 %v3474, %v3908
        %v3910 = vpop.f32.mrb[0].mxu0
        %v3911 = vadd.f32 %v3470, %v3910
        %v3912 = vpop.f32.mrb[0].mxu0
        %v3913 = vadd.f32 %v3474, %v3912
        %3914 = vmatprep.mubr.bf16.mxu0 0
        %3915 = vmatmul.mubr.bf16.gmra.mrb[0].mxu0 %v3414
        %v3916 = vpop.f32.mrb[0].mxu0
        %v3917 = vadd.f32 %v3470, %v3916
        %v3918 = vpop.f32.mrb[0].mxu0
        %v3919 = vadd.f32 %v3474, %v3918
        %v3920 = vpop.f32.mrb[0].mxu0
        %v3921 = vadd.f32 %v3470, %v3920
        %v3922 = vpop.f32.mrb[0].mxu0
        %v3923 = vadd.f32 %v3474, %v3922
        %3924 = vmatprep.mubr.bf16.mxu0 0
        %3925 = vmatmul.mubr.bf16.gmra.mrb[0].mxu0 %v3415
        %v3926 = vpop.f32.mrb[0].mxu0
        %v3927 = vadd.f32 %v3470, %v3926
        %v3928 = vpop.f32.mrb[0].mxu0
        %v3929 = vadd.f32 %v3474, %v3928
        %v3930 = vpop.f32.mrb[0].mxu0
        %v3931 = vadd.f32 %v3470, %v3930
        %v3932 = vpop.f32.mrb[0].mxu0
        %v3933 = vadd.f32 %v3474, %v3932
        %3934 = vmatprep.mubr.bf16.mxu0 0
        %3935 = vmatmul.mubr.bf16.gmra.mrb[0].mxu0 %v3416
        %v3936 = vpop.f32.mrb[0].mxu0
        %v3937 = vadd.f32 %v3470, %v3936
        %v3938 = vpop.f32.mrb[0].mxu0
        %v3939 = vadd.f32 %v3474, %v3938
        %v3940 = vpop.f32.mrb[0].mxu0
        %v3941 = vadd.f32 %v3470, %v3940
        %v3942 = vpop.f32.mrb[0].mxu0
        %v3943 = vadd.f32 %v3474, %v3942
        %3944 = vmatprep.mubr.bf16.mxu0 0
        %3945 = vmatmul.mubr.bf16.gmra.mrb[0].mxu0 %v3417
        %v3946 = vpop.f32.mrb[0].mxu0
        %v3947 = vadd.f32 %v3470, %v3946
        %v3948 = vpop.f32.mrb[0].mxu0
        %v3949 = vadd.f32 %v3474, %v3948
        %v3950 = vpop.f32.mrb[0].mxu0
        %v3951 = vadd.f32 %v3470, %v3950
        %v3952 = vpop.f32.mrb[0].mxu0
        %v3953 = vadd.f32 %v3474, %v3952
        %3954 = vmatprep.mubr.bf16.mxu0 0
        %3955 = vmatmul.mubr.bf16.gmra.mrb[0].mxu0 %v3418
        %v3956 = vpop.f32.mrb[0].mxu0
        %v3957 = vadd.f32 %v3470, %v3956
        %v3958 = vpop.f32.mrb[0].mxu0
        %v3959 = vadd.f32 %v3474, %v3958
        %v3960 = vpop.f32.mrb[0].mxu0
        %v3961 = vadd.f32 %v3470, %v3960
        %v3962 = vpop.f32.mrb[0].mxu0
        %v3963 = vadd.f32 %v3474, %v3962
        %3964 = vmatprep.mubr.bf16.mxu0 0
        %3965 = vmatmul.mubr.bf16.gmra.mrb[0].mxu0 %v3419
        %v3966 = vpop.f32.mrb[0].mxu0
        %v3967 = vadd.f32 %v3470, %v3966
        %v3968 = vpop.f32.mrb[0].mxu0
        %v3969 = vadd.f32 %v3474, %v3968
        %v3970 = vpop.f32.mrb[0].mxu0
        %v3971 = vadd.f32 %v3470, %v3970
        %v3972 = vpop.f32.mrb[0].mxu0
        %v3973 = vadd.f32 %v3474, %v3972
        %3974 = vmatprep.mubr.bf16.mxu0 0
        %3975 = vmatmul.mubr.bf16.gmra.mrb[0].mxu0 %v3420
        %v3976 = vpop.f32.mrb[0].mxu0
        %v3977 = vadd.f32 %v3470, %v3976
        %v3978 = vpop.f32.mrb[0].mxu0
        %v3979 = vadd.f32 %v3474, %v3978
        %v3980 = vpop.f32.mrb[0].mxu0
        %v3981 = vadd.f32 %v3470, %v3980
        %v3982 = vpop.f32.mrb[0].mxu0
        %v3983 = vadd.f32 %v3474, %v3982
        %3984 = vmatprep.mubr.bf16.mxu0 0
        %3985 = vmatmul.mubr.bf16.gmra.mrb[0].mxu0 %v3421
        %v3986 = vpop.f32.mrb[0].mxu0
        %v3987 = vadd.f32 %v3470, %v3986
        %v3988 = vpop.f32.mrb[0].mxu0
        %v3989 = vadd.f32 %v3474, %v3988
        %v3990 = vpop.f32.mrb[0].mxu0
        %v3991 = vadd.f32 %v3470, %v3990
        %v3992 = vpop.f32.mrb[0].mxu0
        %v3993 = vadd.f32 %v3474, %v3992
        %3994 = vmatprep.mubr.bf16.mxu0 0
        %3995 = vmatmul.mubr.bf16.gmra.mrb[0].mxu0 %v3422
        %v3996 = vpop.f32.mrb[0].mxu0
        %v3997 = vadd.f32 %v3470, %v3996
        %v3998 = vpop.f32.mrb[0].mxu0
        %v3999 = vadd.f32 %v3474, %v3998
        %v4000 = vpop.f32.mrb[0].mxu0
        %v4001 = vadd.f32 %v3470, %v4000
        %v4002 = vpop.f32.mrb[0].mxu0
        %v4003 = vadd.f32 %v3474, %v4002
        %4004 = vmatprep.mubr.bf16.mxu0 0
        %4005 = vmatmul.mubr.bf16.gmra.mrb[0].mxu0 %v3423
        %v4006 = vpop.f32.mrb[0].mxu0
        %v4007 = vadd.f32 %v3470, %v4006
        %v4008 = vpop.f32.mrb[0].mxu0
        %v4009 = vadd.f32 %v3474, %v4008
        %v4010 = vpop.f32.mrb[0].mxu0
        %v4011 = vadd.f32 %v3470, %v4010
        %v4012 = vpop.f32.mrb[0].mxu0
        %v4013 = vadd.f32 %v3474, %v4012
        %4014 = vmatprep.mubr.bf16.mxu0 0
        %4015 = vmatmul.mubr.bf16.gmra.mrb[0].mxu0 %v3424
        %v4016 = vpop.f32.mrb[0].mxu0
        %v4017 = vadd.f32 %v3470, %v4016
        %v4018 = vpop.f32.mrb[0].mxu0
        %v4019 = vadd.f32 %v3474, %v4018
        %v4020 = vpop.f32.mrb[0].mxu0
        %v4021 = vadd.f32 %v3470, %v4020
        %v4022 = vpop.f32.mrb[0].mxu0
        %v4023 = vadd.f32 %v3474, %v4022
        %4024 = vdwg.mxu0
        %v4025 = vmul.f32 %v3674, 0.5
        %v4026 = vmul.f32 %v3676, 0.5
        %v4027 = vmul.f32 %v3867, 0.5
        %v4028 = vmul.f32 %v3869, 0.5
        %v4029 = vmul.f32 %v3678, 0.5
        %v4030 = vmul.f32 %v3680, 0.5
        %v4031 = vmul.f32 %v3871, 0.5
        %v4032 = vmul.f32 %v3873, 0.5
        %v4033 = vmul.f32 %v3684, 0.5
        %v4034 = vmul.f32 %v3686, 0.5
        %v4035 = vmul.f32 %v3877, 0.5
        %v4036 = vmul.f32 %v3879, 0.5
        %v4037 = vmul.f32 %v3688, 0.5
        %v4038 = vmul.f32 %v3690, 0.5
        %v4039 = vmul.f32 %v3881, 0.5
        %v4040 = vmul.f32 %v3883, 0.5
        %v4041 = vmul.f32 %v3694, 0.5
        %v4042 = vmul.f32 %v3696, 0.5
        %v4043 = vmul.f32 %v3887, 0.5
        %v4044 = vmul.f32 %v3889, 0.5
        %v4045 = vmul.f32 %v3698, 0.5
        %v4046 = vmul.f32 %v3700, 0.5
        %v4047 = vmul.f32 %v3891, 0.5
        %v4048 = vmul.f32 %v3893, 0.5
        %v4049 = vmul.f32 %v3704, 0.5
        %v4050 = vmul.f32 %v3706, 0.5
        %v4051 = vmul.f32 %v3897, 0.5
        %v4052 = vmul.f32 %v3899, 0.5
        %v4053 = vmul.f32 %v3708, 0.5
        %v4054 = vmul.f32 %v3710, 0.5
        %v4055 = vmul.f32 %v3901, 0.5
        %v4056 = vmul.f32 %v3903, 0.5
        %v4057 = vmul.f32 %v3714, 0.5
        %v4058 = vmul.f32 %v3716, 0.5
        %v4059 = vmul.f32 %v3907, 0.5
        %v4060 = vmul.f32 %v3909, 0.5
        %v4061 = vmul.f32 %v3718, 0.5
        %v4062 = vmul.f32 %v3720, 0.5
        %v4063 = vmul.f32 %v3911, 0.5
        %v4064 = vmul.f32 %v3913, 0.5
        %v4065 = vmul.f32 %v3724, 0.5
        %v4066 = vmul.f32 %v3726, 0.5
        %v4067 = vmul.f32 %v3917, 0.5
        %v4068 = vmul.f32 %v3919, 0.5
        %v4069 = vmul.f32 %v3728, 0.5
        %v4070 = vmul.f32 %v3730, 0.5
        %v4071 = vmul.f32 %v3921, 0.5
        %v4072 = vmul.f32 %v3923, 0.5
        %v4073 = vmul.f32 %v3734, 0.5
        %v4074 = vmul.f32 %v3736, 0.5
        %v4075 = vmul.f32 %v3927, 0.5
        %v4076 = vmul.f32 %v3929, 0.5
        %v4077 = vmul.f32 %v3738, 0.5
        %v4078 = vmul.f32 %v3740, 0.5
        %v4079 = vmul.f32 %v3931, 0.5
        %v4080 = vmul.f32 %v3933, 0.5
        %v4081 = vmul.f32 %v3744, 0.5
        %v4082 = vmul.f32 %v3746, 0.5
        %v4083 = vmul.f32 %v3937, 0.5
        %v4084 = vmul.f32 %v3939, 0.5
        %v4085 = vmul.f32 %v3748, 0.5
        %v4086 = vmul.f32 %v3750, 0.5
        %v4087 = vmul.f32 %v3941, 0.5
        %v4088 = vmul.f32 %v3943, 0.5
        %v4089 = vmul.f32 %v3754, 0.5
        %v4090 = vmul.f32 %v3756, 0.5
        %v4091 = vmul.f32 %v3947, 0.5
        %v4092 = vmul.f32 %v3949, 0.5
        %v4093 = vmul.f32 %v3758, 0.5
        %v4094 = vmul.f32 %v3760, 0.5
        %v4095 = vmul.f32 %v3951, 0.5
        %v4096 = vmul.f32 %v3953, 0.5
        %v4097 = vmul.f32 %v3764, 0.5
        %v4098 = vmul.f32 %v3766, 0.5
        %v4099 = vmul.f32 %v3957, 0.5
        %v4100 = vmul.f32 %v3959, 0.5
        %v4101 = vmul.f32 %v3768, 0.5
        %v4102 = vmul.f32 %v3770, 0.5
        %v4103 = vmul.f32 %v3961, 0.5
        %v4104 = vmul.f32 %v3963, 0.5
        %v4105 = vmul.f32 %v3774, 0.5
        %v4106 = vmul.f32 %v3776, 0.5
        %v4107 = vmul.f32 %v3967, 0.5
        %v4108 = vmul.f32 %v3969, 0.5
        %v4109 = vmul.f32 %v3778, 0.5
        %v4110 = vmul.f32 %v3780, 0.5
        %v4111 = vmul.f32 %v3971, 0.5
        %v4112 = vmul.f32 %v3973, 0.5
        %v4113 = vmul.f32 %v3784, 0.5
        %v4114 = vmul.f32 %v3786, 0.5
        %v4115 = vmul.f32 %v3977, 0.5
        %v4116 = vmul.f32 %v3979, 0.5
        %v4117 = vmul.f32 %v3788, 0.5
        %v4118 = vmul.f32 %v3790, 0.5
        %v4119 = vmul.f32 %v3981, 0.5
        %v4120 = vmul.f32 %v3983, 0.5
        %v4121 = vmul.f32 %v3794, 0.5
        %v4122 = vmul.f32 %v3796, 0.5
        %v4123 = vmul.f32 %v3987, 0.5
        %v4124 = vmul.f32 %v3989, 0.5
        %v4125 = vmul.f32 %v3798, 0.5
        %v4126 = vmul.f32 %v3800, 0.5
        %v4127 = vmul.f32 %v3991, 0.5
        %v4128 = vmul.f32 %v3993, 0.5
        %v4129 = vmul.f32 %v3804, 0.5
        %v4130 = vmul.f32 %v3806, 0.5
        %v4131 = vmul.f32 %v3997, 0.5
        %v4132 = vmul.f32 %v3999, 0.5
        %v4133 = vmul.f32 %v3808, 0.5
        %v4134 = vmul.f32 %v3810, 0.5
        %v4135 = vmul.f32 %v4001, 0.5
        %v4136 = vmul.f32 %v4003, 0.5
        %v4137 = vmul.f32 %v3814, 0.5
        %v4138 = vmul.f32 %v3816, 0.5
        %v4139 = vmul.f32 %v4007, 0.5
        %v4140 = vmul.f32 %v4009, 0.5
        %v4141 = vmul.f32 %v3818, 0.5
        %v4142 = vmul.f32 %v3820, 0.5
        %v4143 = vmul.f32 %v4011, 0.5
        %v4144 = vmul.f32 %v4013, 0.5
        %v4145 = vmul.f32 %v3824, 0.5
        %v4146 = vmul.f32 %v3826, 0.5
        %v4147 = vmul.f32 %v4017, 0.5
        %v4148 = vmul.f32 %v4019, 0.5
        %v4149 = vmul.f32 %v3828, 0.5
        %v4150 = vmul.f32 %v3830, 0.5
        %v4151 = vmul.f32 %v4021, 0.5
        %v4152 = vmul.f32 %v4023, 0.5
        %v4153 = vmul.f32 %v3674, %v3674
        %v4154 = vmul.f32 %v3676, %v3676
        %v4155 = vmul.f32 %v3867, %v3867
        %v4156 = vmul.f32 %v3869, %v3869
        %v4157 = vmul.f32 %v3678, %v3678
        %v4158 = vmul.f32 %v3680, %v3680
        %v4159 = vmul.f32 %v3871, %v3871
        %v4160 = vmul.f32 %v3873, %v3873
        %v4161 = vmul.f32 %v3684, %v3684
        %v4162 = vmul.f32 %v3686, %v3686
        %v4163 = vmul.f32 %v3877, %v3877
        %v4164 = vmul.f32 %v3879, %v3879
        %v4165 = vmul.f32 %v3688, %v3688
        %v4166 = vmul.f32 %v3690, %v3690
        %v4167 = vmul.f32 %v3881, %v3881
        %v4168 = vmul.f32 %v3883, %v3883
        %v4169 = vmul.f32 %v3694, %v3694
        %v4170 = vmul.f32 %v3696, %v3696
        %v4171 = vmul.f32 %v3887, %v3887
        %v4172 = vmul.f32 %v3889, %v3889
        %v4173 = vmul.f32 %v3698, %v3698
        %v4174 = vmul.f32 %v3700, %v3700
        %v4175 = vmul.f32 %v3891, %v3891
        %v4176 = vmul.f32 %v3893, %v3893
        %v4177 = vmul.f32 %v3704, %v3704
        %v4178 = vmul.f32 %v3706, %v3706
        %v4179 = vmul.f32 %v3897, %v3897
        %v4180 = vmul.f32 %v3899, %v3899
        %v4181 = vmul.f32 %v3708, %v3708
        %v4182 = vmul.f32 %v3710, %v3710
        %v4183 = vmul.f32 %v3901, %v3901
        %v4184 = vmul.f32 %v3903, %v3903
        %v4185 = vmul.f32 %v3714, %v3714
        %v4186 = vmul.f32 %v3716, %v3716
        %v4187 = vmul.f32 %v3907, %v3907
        %v4188 = vmul.f32 %v3909, %v3909
        %v4189 = vmul.f32 %v3718, %v3718
        %v4190 = vmul.f32 %v3720, %v3720
        %v4191 = vmul.f32 %v3911, %v3911
        %v4192 = vmul.f32 %v3913, %v3913
        %v4193 = vmul.f32 %v3724, %v3724
        %v4194 = vmul.f32 %v3726, %v3726
        %v4195 = vmul.f32 %v3917, %v3917
        %v4196 = vmul.f32 %v3919, %v3919
        %v4197 = vmul.f32 %v3728, %v3728
        %v4198 = vmul.f32 %v3730, %v3730
        %v4199 = vmul.f32 %v3921, %v3921
        %v4200 = vmul.f32 %v3923, %v3923
        %v4201 = vmul.f32 %v3734, %v3734
        %v4202 = vmul.f32 %v3736, %v3736
        %v4203 = vmul.f32 %v3927, %v3927
        %v4204 = vmul.f32 %v3929, %v3929
        %v4205 = vmul.f32 %v3738, %v3738
        %v4206 = vmul.f32 %v3740, %v3740
        %v4207 = vmul.f32 %v3931, %v3931
        %v4208 = vmul.f32 %v3933, %v3933
        %v4209 = vmul.f32 %v3744, %v3744
        %v4210 = vmul.f32 %v3746, %v3746
        %v4211 = vmul.f32 %v3937, %v3937
        %v4212 = vmul.f32 %v3939, %v3939
        %v4213 = vmul.f32 %v3748, %v3748
        %v4214 = vmul.f32 %v3750, %v3750
        %v4215 = vmul.f32 %v3941, %v3941
        %v4216 = vmul.f32 %v3943, %v3943
        %v4217 = vmul.f32 %v3754, %v3754
        %v4218 = vmul.f32 %v3756, %v3756
        %v4219 = vmul.f32 %v3947, %v3947
        %v4220 = vmul.f32 %v3949, %v3949
        %v4221 = vmul.f32 %v3758, %v3758
        %v4222 = vmul.f32 %v3760, %v3760
        %v4223 = vmul.f32 %v3951, %v3951
        %v4224 = vmul.f32 %v3953, %v3953
        %v4225 = vmul.f32 %v3764, %v3764
        %v4226 = vmul.f32 %v3766, %v3766
        %v4227 = vmul.f32 %v3957, %v3957
        %v4228 = vmul.f32 %v3959, %v3959
        %v4229 = vmul.f32 %v3768, %v3768
        %v4230 = vmul.f32 %v3770, %v3770
        %v4231 = vmul.f32 %v3961, %v3961
        %v4232 = vmul.f32 %v3963, %v3963
        %v4233 = vmul.f32 %v3774, %v3774
        %v4234 = vmul.f32 %v3776, %v3776
        %v4235 = vmul.f32 %v3967, %v3967
        %v4236 = vmul.f32 %v3969, %v3969
        %v4237 = vmul.f32 %v3778, %v3778
        %v4238 = vmul.f32 %v3780, %v3780
        %v4239 = vmul.f32 %v3971, %v3971
        %v4240 = vmul.f32 %v3973, %v3973
        %v4241 = vmul.f32 %v3784, %v3784
        %v4242 = vmul.f32 %v3786, %v3786
        %v4243 = vmul.f32 %v3977, %v3977
        %v4244 = vmul.f32 %v3979, %v3979
        %v4245 = vmul.f32 %v3788, %v3788
        %v4246 = vmul.f32 %v3790, %v3790
        %v4247 = vmul.f32 %v3981, %v3981
        %v4248 = vmul.f32 %v3983, %v3983
        %v4249 = vmul.f32 %v3794, %v3794
        %v4250 = vmul.f32 %v3796, %v3796
        %v4251 = vmul.f32 %v3987, %v3987
        %v4252 = vmul.f32 %v3989, %v3989
        %v4253 = vmul.f32 %v3798, %v3798
        %v4254 = vmul.f32 %v3800, %v3800
        %v4255 = vmul.f32 %v3991, %v3991
        %v4256 = vmul.f32 %v3993, %v3993
        %v4257 = vmul.f32 %v3804, %v3804
        %v4258 = vmul.f32 %v3806, %v3806
        %v4259 = vmul.f32 %v3997, %v3997
        %v4260 = vmul.f32 %v3999, %v3999
        %v4261 = vmul.f32 %v3808, %v3808
        %v4262 = vmul.f32 %v3810, %v3810
        %v4263 = vmul.f32 %v4001, %v4001
        %v4264 = vmul.f32 %v4003, %v4003
        %v4265 = vmul.f32 %v3814, %v3814
        %v4266 = vmul.f32 %v3816, %v3816
        %v4267 = vmul.f32 %v4007, %v4007
        %v4268 = vmul.f32 %v4009, %v4009
        %v4269 = vmul.f32 %v3818, %v3818
        %v4270 = vmul.f32 %v3820, %v3820
        %v4271 = vmul.f32 %v4011, %v4011
        %v4272 = vmul.f32 %v4013, %v4013
        %v4273 = vmul.f32 %v3824, %v3824
        %v4274 = vmul.f32 %v3826, %v3826
        %v4275 = vmul.f32 %v4017, %v4017
        %v4276 = vmul.f32 %v4019, %v4019
        %v4277 = vmul.f32 %v3828, %v3828
        %v4278 = vmul.f32 %v3830, %v3830
        %v4279 = vmul.f32 %v4021, %v4021
        %v4280 = vmul.f32 %v4023, %v4023
        %v4281 = vmul.f32 %v4153, %v3674
        %v4282 = vmul.f32 %v4154, %v3676
        %v4283 = vmul.f32 %v4155, %v3867
        %v4284 = vmul.f32 %v4156, %v3869
        %v4285 = vmul.f32 %v4157, %v3678
        %v4286 = vmul.f32 %v4158, %v3680
        %v4287 = vmul.f32 %v4159, %v3871
        %v4288 = vmul.f32 %v4160, %v3873
        %v4289 = vmul.f32 %v4161, %v3684
        %v4290 = vmul.f32 %v4162, %v3686
        %v4291 = vmul.f32 %v4163, %v3877
        %v4292 = vmul.f32 %v4164, %v3879
        %v4293 = vmul.f32 %v4165, %v3688
        %v4294 = vmul.f32 %v4166, %v3690
        %v4295 = vmul.f32 %v4167, %v3881
        %v4296 = vmul.f32 %v4168, %v3883
        %v4297 = vmul.f32 %v4169, %v3694
        %v4298 = vmul.f32 %v4170, %v3696
        %v4299 = vmul.f32 %v4171, %v3887
        %v4300 = vmul.f32 %v4172, %v3889
        %v4301 = vmul.f32 %v4173, %v3698
        %v4302 = vmul.f32 %v4174, %v3700
        %v4303 = vmul.f32 %v4175, %v3891
        %v4304 = vmul.f32 %v4176, %v3893
        %v4305 = vmul.f32 %v4177, %v3704
        %v4306 = vmul.f32 %v4178, %v3706
        %v4307 = vmul.f32 %v4179, %v3897
        %v4308 = vmul.f32 %v4180, %v3899
        %v4309 = vmul.f32 %v4181, %v3708
        %v4310 = vmul.f32 %v4182, %v3710
        %v4311 = vmul.f32 %v4183, %v3901
        %v4312 = vmul.f32 %v4184, %v3903
        %v4313 = vmul.f32 %v4185, %v3714
        %v4314 = vmul.f32 %v4186, %v3716
        %v4315 = vmul.f32 %v4187, %v3907
        %v4316 = vmul.f32 %v4188, %v3909
        %v4317 = vmul.f32 %v4189, %v3718
        %v4318 = vmul.f32 %v4190, %v3720
        %v4319 = vmul.f32 %v4191, %v3911
        %v4320 = vmul.f32 %v4192, %v3913
        %v4321 = vmul.f32 %v4193, %v3724
        %v4322 = vmul.f32 %v4194, %v3726
        %v4323 = vmul.f32 %v4195, %v3917
        %v4324 = vmul.f32 %v4196, %v3919
        %v4325 = vmul.f32 %v4197, %v3728
        %v4326 = vmul.f32 %v4198, %v3730
        %v4327 = vmul.f32 %v4199, %v3921
        %v4328 = vmul.f32 %v4200, %v3923
        %v4329 = vmul.f32 %v4201, %v3734
        %v4330 = vmul.f32 %v4202, %v3736
        %v4331 = vmul.f32 %v4203, %v3927
        %v4332 = vmul.f32 %v4204, %v3929
        %v4333 = vmul.f32 %v4205, %v3738
        %v4334 = vmul.f32 %v4206, %v3740
        %v4335 = vmul.f32 %v4207, %v3931
        %v4336 = vmul.f32 %v4208, %v3933
        %v4337 = vmul.f32 %v4209, %v3744
        %v4338 = vmul.f32 %v4210, %v3746
        %v4339 = vmul.f32 %v4211, %v3937
        %v4340 = vmul.f32 %v4212, %v3939
        %v4341 = vmul.f32 %v4213, %v3748
        %v4342 = vmul.f32 %v4214, %v3750
        %v4343 = vmul.f32 %v4215, %v3941
        %v4344 = vmul.f32 %v4216, %v3943
        %v4345 = vmul.f32 %v4217, %v3754
        %v4346 = vmul.f32 %v4218, %v3756
        %v4347 = vmul.f32 %v4219, %v3947
        %v4348 = vmul.f32 %v4220, %v3949
        %v4349 = vmul.f32 %v4221, %v3758
        %v4350 = vmul.f32 %v4222, %v3760
        %v4351 = vmul.f32 %v4223, %v3951
        %v4352 = vmul.f32 %v4224, %v3953
        %v4353 = vmul.f32 %v4225, %v3764
        %v4354 = vmul.f32 %v4226, %v3766
        %v4355 = vmul.f32 %v4227, %v3957
        %v4356 = vmul.f32 %v4228, %v3959
        %v4357 = vmul.f32 %v4229, %v3768
        %v4358 = vmul.f32 %v4230, %v3770
        %v4359 = vmul.f32 %v4231, %v3961
        %v4360 = vmul.f32 %v4232, %v3963
        %v4361 = vmul.f32 %v4233, %v3774
        %v4362 = vmul.f32 %v4234, %v3776
        %v4363 = vmul.f32 %v4235, %v3967
        %v4364 = vmul.f32 %v4236, %v3969
        %v4365 = vmul.f32 %v4237, %v3778
        %v4366 = vmul.f32 %v4238, %v3780
        %v4367 = vmul.f32 %v4239, %v3971
        %v4368 = vmul.f32 %v4240, %v3973
        %v4369 = vmul.f32 %v4241, %v3784
        %v4370 = vmul.f32 %v4242, %v3786
        %v4371 = vmul.f32 %v4243, %v3977
        %v4372 = vmul.f32 %v4244, %v3979
        %v4373 = vmul.f32 %v4245, %v3788
        %v4374 = vmul.f32 %v4246, %v3790
        %v4375 = vmul.f32 %v4247, %v3981
        %v4376 = vmul.f32 %v4248, %v3983
        %v4377 = vmul.f32 %v4249, %v3794
        %v4378 = vmul.f32 %v4250, %v3796
        %v4379 = vmul.f32 %v4251, %v3987
        %v4380 = vmul.f32 %v4252, %v3989
        %v4381 = vmul.f32 %v4253, %v3798
        %v4382 = vmul.f32 %v4254, %v3800
        %v4383 = vmul.f32 %v4255, %v3991
        %v4384 = vmul.f32 %v4256, %v3993
        %v4385 = vmul.f32 %v4257, %v3804
        %v4386 = vmul.f32 %v4258, %v3806
        %v4387 = vmul.f32 %v4259, %v3997
        %v4388 = vmul.f32 %v4260, %v3999
        %v4389 = vmul.f32 %v4261, %v3808
        %v4390 = vmul.f32 %v4262, %v3810
        %v4391 = vmul.f32 %v4263, %v4001
        %v4392 = vmul.f32 %v4264, %v4003
        %v4393 = vmul.f32 %v4265, %v3814
        %v4394 = vmul.f32 %v4266, %v3816
        %v4395 = vmul.f32 %v4267, %v4007
        %v4396 = vmul.f32 %v4268, %v4009
        %v4397 = vmul.f32 %v4269, %v3818
        %v4398 = vmul.f32 %v4270, %v3820
        %v4399 = vmul.f32 %v4271, %v4011
        %v4400 = vmul.f32 %v4272, %v4013
        %v4401 = vmul.f32 %v4273, %v3824
        %v4402 = vmul.f32 %v4274, %v3826
        %v4403 = vmul.f32 %v4275, %v4017
        %v4404 = vmul.f32 %v4276, %v4019
        %v4405 = vmul.f32 %v4277, %v3828
        %v4406 = vmul.f32 %v4278, %v3830
        %v4407 = vmul.f32 %v4279, %v4021
        %v4408 = vmul.f32 %v4280, %v4023
        %v4409 = vmul.f32 %v4281, 0.044715
        %v4410 = vmul.f32 %v4282, 0.044715
        %v4411 = vmul.f32 %v4283, 0.044715
        %v4412 = vmul.f32 %v4284, 0.044715
        %v4413 = vmul.f32 %v4285, 0.044715
        %v4414 = vmul.f32 %v4286, 0.044715
        %v4415 = vmul.f32 %v4287, 0.044715
        %v4416 = vmul.f32 %v4288, 0.044715
        %v4417 = vmul.f32 %v4289, 0.044715
        %v4418 = vmul.f32 %v4290, 0.044715
        %v4419 = vmul.f32 %v4291, 0.044715
        %v4420 = vmul.f32 %v4292, 0.044715
        %v4421 = vmul.f32 %v4293, 0.044715
        %v4422 = vmul.f32 %v4294, 0.044715
        %v4423 = vmul.f32 %v4295, 0.044715
        %v4424 = vmul.f32 %v4296, 0.044715
        %v4425 = vmul.f32 %v4297, 0.044715
        %v4426 = vmul.f32 %v4298, 0.044715
        %v4427 = vmul.f32 %v4299, 0.044715
        %v4428 = vmul.f32 %v4300, 0.044715
        %v4429 = vmul.f32 %v4301, 0.044715
        %v4430 = vmul.f32 %v4302, 0.044715
        %v4431 = vmul.f32 %v4303, 0.044715
        %v4432 = vmul.f32 %v4304, 0.044715
        %v4433 = vmul.f32 %v4305, 0.044715
        %v4434 = vmul.f32 %v4306, 0.044715
        %v4435 = vmul.f32 %v4307, 0.044715
        %v4436 = vmul.f32 %v4308, 0.044715
        %v4437 = vmul.f32 %v4309, 0.044715
        %v4438 = vmul.f32 %v4310, 0.044715
        %v4439 = vmul.f32 %v4311, 0.044715
        %v4440 = vmul.f32 %v4312, 0.044715
        %v4441 = vmul.f32 %v4313, 0.044715
        %v4442 = vmul.f32 %v4314, 0.044715
        %v4443 = vmul.f32 %v4315, 0.044715
        %v4444 = vmul.f32 %v4316, 0.044715
        %v4445 = vmul.f32 %v4317, 0.044715
        %v4446 = vmul.f32 %v4318, 0.044715
        %v4447 = vmul.f32 %v4319, 0.044715
        %v4448 = vmul.f32 %v4320, 0.044715
        %v4449 = vmul.f32 %v4321, 0.044715
        %v4450 = vmul.f32 %v4322, 0.044715
        %v4451 = vmul.f32 %v4323, 0.044715
        %v4452 = vmul.f32 %v4324, 0.044715
        %v4453 = vmul.f32 %v4325, 0.044715
        %v4454 = vmul.f32 %v4326, 0.044715
        %v4455 = vmul.f32 %v4327, 0.044715
        %v4456 = vmul.f32 %v4328, 0.044715
        %v4457 = vmul.f32 %v4329, 0.044715
        %v4458 = vmul.f32 %v4330, 0.044715
        %v4459 = vmul.f32 %v4331, 0.044715
        %v4460 = vmul.f32 %v4332, 0.044715
        %v4461 = vmul.f32 %v4333, 0.044715
        %v4462 = vmul.f32 %v4334, 0.044715
        %v4463 = vmul.f32 %v4335, 0.044715
        %v4464 = vmul.f32 %v4336, 0.044715
        %v4465 = vmul.f32 %v4337, 0.044715
        %v4466 = vmul.f32 %v4338, 0.044715
        %v4467 = vmul.f32 %v4339, 0.044715
        %v4468 = vmul.f32 %v4340, 0.044715
        %v4469 = vmul.f32 %v4341, 0.044715
        %v4470 = vmul.f32 %v4342, 0.044715
        %v4471 = vmul.f32 %v4343, 0.044715
        %v4472 = vmul.f32 %v4344, 0.044715
        %v4473 = vmul.f32 %v4345, 0.044715
        %v4474 = vmul.f32 %v4346, 0.044715
        %v4475 = vmul.f32 %v4347, 0.044715
        %v4476 = vmul.f32 %v4348, 0.044715
        %v4477 = vmul.f32 %v4349, 0.044715
        %v4478 = vmul.f32 %v4350, 0.044715
        %v4479 = vmul.f32 %v4351, 0.044715
        %v4480 = vmul.f32 %v4352, 0.044715
        %v4481 = vmul.f32 %v4353, 0.044715
        %v4482 = vmul.f32 %v4354, 0.044715
        %v4483 = vmul.f32 %v4355, 0.044715
        %v4484 = vmul.f32 %v4356, 0.044715
        %v4485 = vmul.f32 %v4357, 0.044715
        %v4486 = vmul.f32 %v4358, 0.044715
        %v4487 = vmul.f32 %v4359, 0.044715
        %v4488 = vmul.f32 %v4360, 0.044715
        %v4489 = vmul.f32 %v4361, 0.044715
        %v4490 = vmul.f32 %v4362, 0.044715
        %v4491 = vmul.f32 %v4363, 0.044715
        %v4492 = vmul.f32 %v4364, 0.044715
        %v4493 = vmul.f32 %v4365, 0.044715
        %v4494 = vmul.f32 %v4366, 0.044715
        %v4495 = vmul.f32 %v4367, 0.044715
        %v4496 = vmul.f32 %v4368, 0.044715
        %v4497 = vmul.f32 %v4369, 0.044715
        %v4498 = vmul.f32 %v4370, 0.044715
        %v4499 = vmul.f32 %v4371, 0.044715
        %v4500 = vmul.f32 %v4372, 0.044715
        %v4501 = vmul.f32 %v4373, 0.044715
        %v4502 = vmul.f32 %v4374, 0.044715
        %v4503 = vmul.f32 %v4375, 0.044715
        %v4504 = vmul.f32 %v4376, 0.044715
        %v4505 = vmul.f32 %v4377, 0.044715
        %v4506 = vmul.f32 %v4378, 0.044715
        %v4507 = vmul.f32 %v4379, 0.044715
        %v4508 = vmul.f32 %v4380, 0.044715
        %v4509 = vmul.f32 %v4381, 0.044715
        %v4510 = vmul.f32 %v4382, 0.044715
        %v4511 = vmul.f32 %v4383, 0.044715
        %v4512 = vmul.f32 %v4384, 0.044715
        %v4513 = vmul.f32 %v4385, 0.044715
        %v4514 = vmul.f32 %v4386, 0.044715
        %v4515 = vmul.f32 %v4387, 0.044715
        %v4516 = vmul.f32 %v4388, 0.044715
        %v4517 = vmul.f32 %v4389, 0.044715
        %v4518 = vmul.f32 %v4390, 0.044715
        %v4519 = vmul.f32 %v4391, 0.044715
        %v4520 = vmul.f32 %v4392, 0.044715
        %v4521 = vmul.f32 %v4393, 0.044715
        %v4522 = vmul.f32 %v4394, 0.044715
        %v4523 = vmul.f32 %v4395, 0.044715
        %v4524 = vmul.f32 %v4396, 0.044715
        %v4525 = vmul.f32 %v4397, 0.044715
        %v4526 = vmul.f32 %v4398, 0.044715
        %v4527 = vmul.f32 %v4399, 0.044715
        %v4528 = vmul.f32 %v4400, 0.044715
        %v4529 = vmul.f32 %v4401, 0.044715
        %v4530 = vmul.f32 %v4402, 0.044715
        %v4531 = vmul.f32 %v4403, 0.044715
        %v4532 = vmul.f32 %v4404, 0.044715
        %v4533 = vmul.f32 %v4405, 0.044715
        %v4534 = vmul.f32 %v4406, 0.044715
        %v4535 = vmul.f32 %v4407, 0.044715
        %v4536 = vmul.f32 %v4408, 0.044715
        %v4537 = vadd.f32 %v3674, %v4409
        %v4538 = vadd.f32 %v3676, %v4410
        %v4539 = vadd.f32 %v3867, %v4411
        %v4540 = vadd.f32 %v3869, %v4412
        %v4541 = vadd.f32 %v3678, %v4413
        %v4542 = vadd.f32 %v3680, %v4414
        %v4543 = vadd.f32 %v3871, %v4415
        %v4544 = vadd.f32 %v3873, %v4416
        %v4545 = vadd.f32 %v3684, %v4417
        %v4546 = vadd.f32 %v3686, %v4418
        %v4547 = vadd.f32 %v3877, %v4419
        %v4548 = vadd.f32 %v3879, %v4420
        %v4549 = vadd.f32 %v3688, %v4421
        %v4550 = vadd.f32 %v3690, %v4422
        %v4551 = vadd.f32 %v3881, %v4423
        %v4552 = vadd.f32 %v3883, %v4424
        %v4553 = vadd.f32 %v3694, %v4425
        %v4554 = vadd.f32 %v3696, %v4426
        %v4555 = vadd.f32 %v3887, %v4427
        %v4556 = vadd.f32 %v3889, %v4428
        %v4557 = vadd.f32 %v3698, %v4429
        %v4558 = vadd.f32 %v3700, %v4430
        %v4559 = vadd.f32 %v3891, %v4431
        %v4560 = vadd.f32 %v3893, %v4432
        %v4561 = vadd.f32 %v3704, %v4433
        %v4562 = vadd.f32 %v3706, %v4434
        %v4563 = vadd.f32 %v3897, %v4435
        %v4564 = vadd.f32 %v3899, %v4436
        %v4565 = vadd.f32 %v3708, %v4437
        %v4566 = vadd.f32 %v3710, %v4438
        %v4567 = vadd.f32 %v3901, %v4439
        %v4568 = vadd.f32 %v3903, %v4440
        %v4569 = vadd.f32 %v3714, %v4441
        %v4570 = vadd.f32 %v3716, %v4442
        %v4571 = vadd.f32 %v3907, %v4443
        %v4572 = vadd.f32 %v3909, %v4444
        %v4573 = vadd.f32 %v3718, %v4445
        %v4574 = vadd.f32 %v3720, %v4446
        %v4575 = vadd.f32 %v3911, %v4447
        %v4576 = vadd.f32 %v3913, %v4448
        %v4577 = vadd.f32 %v3724, %v4449
        %v4578 = vadd.f32 %v3726, %v4450
        %v4579 = vadd.f32 %v3917, %v4451
        %v4580 = vadd.f32 %v3919, %v4452
        %v4581 = vadd.f32 %v3728, %v4453
        %v4582 = vadd.f32 %v3730, %v4454
        %v4583 = vadd.f32 %v3921, %v4455
        %v4584 = vadd.f32 %v3923, %v4456
        %v4585 = vadd.f32 %v3734, %v4457
        %v4586 = vadd.f32 %v3736, %v4458
        %v4587 = vadd.f32 %v3927, %v4459
        %v4588 = vadd.f32 %v3929, %v4460
        %v4589 = vadd.f32 %v3738, %v4461
        %v4590 = vadd.f32 %v3740, %v4462
        %v4591 = vadd.f32 %v3931, %v4463
        %v4592 = vadd.f32 %v3933, %v4464
        %v4593 = vadd.f32 %v3744, %v4465
        %v4594 = vadd.f32 %v3746, %v4466
        %v4595 = vadd.f32 %v3937, %v4467
        %v4596 = vadd.f32 %v3939, %v4468
        %v4597 = vadd.f32 %v3748, %v4469
        %v4598 = vadd.f32 %v3750, %v4470
        %v4599 = vadd.f32 %v3941, %v4471
        %v4600 = vadd.f32 %v3943, %v4472
        %v4601 = vadd.f32 %v3754, %v4473
        %v4602 = vadd.f32 %v3756, %v4474
        %v4603 = vadd.f32 %v3947, %v4475
        %v4604 = vadd.f32 %v3949, %v4476
        %v4605 = vadd.f32 %v3758, %v4477
        %v4606 = vadd.f32 %v3760, %v4478
        %v4607 = vadd.f32 %v3951, %v4479
        %v4608 = vadd.f32 %v3953, %v4480
        %v4609 = vadd.f32 %v3764, %v4481
        %v4610 = vadd.f32 %v3766, %v4482
        %v4611 = vadd.f32 %v3957, %v4483
        %v4612 = vadd.f32 %v3959, %v4484
        %v4613 = vadd.f32 %v3768, %v4485
        %v4614 = vadd.f32 %v3770, %v4486
        %v4615 = vadd.f32 %v3961, %v4487
        %v4616 = vadd.f32 %v3963, %v4488
        %v4617 = vadd.f32 %v3774, %v4489
        %v4618 = vadd.f32 %v3776, %v4490
        %v4619 = vadd.f32 %v3967, %v4491
        %v4620 = vadd.f32 %v3969, %v4492
        %v4621 = vadd.f32 %v3778, %v4493
        %v4622 = vadd.f32 %v3780, %v4494
        %v4623 = vadd.f32 %v3971, %v4495
        %v4624 = vadd.f32 %v3973, %v4496
        %v4625 = vadd.f32 %v3784, %v4497
        %v4626 = vadd.f32 %v3786, %v4498
        %v4627 = vadd.f32 %v3977, %v4499
        %v4628 = vadd.f32 %v3979, %v4500
        %v4629 = vadd.f32 %v3788, %v4501
        %v4630 = vadd.f32 %v3790, %v4502
        %v4631 = vadd.f32 %v3981, %v4503
        %v4632 = vadd.f32 %v3983, %v4504
        %v4633 = vadd.f32 %v3794, %v4505
        %v4634 = vadd.f32 %v3796, %v4506
        %v4635 = vadd.f32 %v3987, %v4507
        %v4636 = vadd.f32 %v3989, %v4508
        %v4637 = vadd.f32 %v3798, %v4509
        %v4638 = vadd.f32 %v3800, %v4510
        %v4639 = vadd.f32 %v3991, %v4511
        %v4640 = vadd.f32 %v3993, %v4512
        %v4641 = vadd.f32 %v3804, %v4513
        %v4642 = vadd.f32 %v3806, %v4514
        %v4643 = vadd.f32 %v3997, %v4515
        %v4644 = vadd.f32 %v3999, %v4516
        %v4645 = vadd.f32 %v3808, %v4517
        %v4646 = vadd.f32 %v3810, %v4518
        %v4647 = vadd.f32 %v4001, %v4519
        %v4648 = vadd.f32 %v4003, %v4520
        %v4649 = vadd.f32 %v3814, %v4521
        %v4650 = vadd.f32 %v3816, %v4522
        %v4651 = vadd.f32 %v4007, %v4523
        %v4652 = vadd.f32 %v4009, %v4524
        %v4653 = vadd.f32 %v3818, %v4525
        %v4654 = vadd.f32 %v3820, %v4526
        %v4655 = vadd.f32 %v4011, %v4527
        %v4656 = vadd.f32 %v4013, %v4528
        %v4657 = vadd.f32 %v3824, %v4529
        %v4658 = vadd.f32 %v3826, %v4530
        %v4659 = vadd.f32 %v4017, %v4531
        %v4660 = vadd.f32 %v4019, %v4532
        %v4661 = vadd.f32 %v3828, %v4533
        %v4662 = vadd.f32 %v3830, %v4534
        %v4663 = vadd.f32 %v4021, %v4535
        %v4664 = vadd.f32 %v4023, %v4536
        %v4665 = vmul.f32 %v4537, 0.7978846
        %v4666 = vmul.f32 %v4538, 0.7978846
        %v4667 = vmul.f32 %v4539, 0.7978846
        %v4668 = vmul.f32 %v4540, 0.7978846
        %v4669 = vmul.f32 %v4541, 0.7978846
        %v4670 = vmul.f32 %v4542, 0.7978846
        %v4671 = vmul.f32 %v4543, 0.7978846
        %v4672 = vmul.f32 %v4544, 0.7978846
        %v4673 = vmul.f32 %v4545, 0.7978846
        %v4674 = vmul.f32 %v4546, 0.7978846
        %v4675 = vmul.f32 %v4547, 0.7978846
        %v4676 = vmul.f32 %v4548, 0.7978846
        %v4677 = vmul.f32 %v4549, 0.7978846
        %v4678 = vmul.f32 %v4550, 0.7978846
        %v4679 = vmul.f32 %v4551, 0.7978846
        %v4680 = vmul.f32 %v4552, 0.7978846
        %v4681 = vmul.f32 %v4553, 0.7978846
        %v4682 = vmul.f32 %v4554, 0.7978846
        %v4683 = vmul.f32 %v4555, 0.7978846
        %v4684 = vmul.f32 %v4556, 0.7978846
        %v4685 = vmul.f32 %v4557, 0.7978846
        %v4686 = vmul.f32 %v4558, 0.7978846
        %v4687 = vmul.f32 %v4559, 0.7978846
        %v4688 = vmul.f32 %v4560, 0.7978846
        %v4689 = vmul.f32 %v4561, 0.7978846
        %v4690 = vmul.f32 %v4562, 0.7978846
        %v4691 = vmul.f32 %v4563, 0.7978846
        %v4692 = vmul.f32 %v4564, 0.7978846
        %v4693 = vmul.f32 %v4565, 0.7978846
        %v4694 = vmul.f32 %v4566, 0.7978846
        %v4695 = vmul.f32 %v4567, 0.7978846
        %v4696 = vmul.f32 %v4568, 0.7978846
        %v4697 = vmul.f32 %v4569, 0.7978846
        %v4698 = vmul.f32 %v4570, 0.7978846
        %v4699 = vmul.f32 %v4571, 0.7978846
        %v4700 = vmul.f32 %v4572, 0.7978846
        %v4701 = vmul.f32 %v4573, 0.7978846
        %v4702 = vmul.f32 %v4574, 0.7978846
        %v4703 = vmul.f32 %v4575, 0.7978846
        %v4704 = vmul.f32 %v4576, 0.7978846
        %v4705 = vmul.f32 %v4577, 0.7978846
        %v4706 = vmul.f32 %v4578, 0.7978846
        %v4707 = vmul.f32 %v4579, 0.7978846
        %v4708 = vmul.f32 %v4580, 0.7978846
        %v4709 = vmul.f32 %v4581, 0.7978846
        %v4710 = vmul.f32 %v4582, 0.7978846
        %v4711 = vmul.f32 %v4583, 0.7978846
        %v4712 = vmul.f32 %v4584, 0.7978846
        %v4713 = vmul.f32 %v4585, 0.7978846
        %v4714 = vmul.f32 %v4586, 0.7978846
        %v4715 = vmul.f32 %v4587, 0.7978846
        %v4716 = vmul.f32 %v4588, 0.7978846
        %v4717 = vmul.f32 %v4589, 0.7978846
        %v4718 = vmul.f32 %v4590, 0.7978846
        %v4719 = vmul.f32 %v4591, 0.7978846
        %v4720 = vmul.f32 %v4592, 0.7978846
        %v4721 = vmul.f32 %v4593, 0.7978846
        %v4722 = vmul.f32 %v4594, 0.7978846
        %v4723 = vmul.f32 %v4595, 0.7978846
        %v4724 = vmul.f32 %v4596, 0.7978846
        %v4725 = vmul.f32 %v4597, 0.7978846
        %v4726 = vmul.f32 %v4598, 0.7978846
        %v4727 = vmul.f32 %v4599, 0.7978846
        %v4728 = vmul.f32 %v4600, 0.7978846
        %v4729 = vmul.f32 %v4601, 0.7978846
        %v4730 = vmul.f32 %v4602, 0.7978846
        %v4731 = vmul.f32 %v4603, 0.7978846
        %v4732 = vmul.f32 %v4604, 0.7978846
        %v4733 = vmul.f32 %v4605, 0.7978846
        %v4734 = vmul.f32 %v4606, 0.7978846
        %v4735 = vmul.f32 %v4607, 0.7978846
        %v4736 = vmul.f32 %v4608, 0.7978846
        %v4737 = vmul.f32 %v4609, 0.7978846
        %v4738 = vmul.f32 %v4610, 0.7978846
        %v4739 = vmul.f32 %v4611, 0.7978846
        %v4740 = vmul.f32 %v4612, 0.7978846
        %v4741 = vmul.f32 %v4613, 0.7978846
        %v4742 = vmul.f32 %v4614, 0.7978846
        %v4743 = vmul.f32 %v4615, 0.7978846
        %v4744 = vmul.f32 %v4616, 0.7978846
        %v4745 = vmul.f32 %v4617, 0.7978846
        %v4746 = vmul.f32 %v4618, 0.7978846
        %v4747 = vmul.f32 %v4619, 0.7978846
        %v4748 = vmul.f32 %v4620, 0.7978846
        %v4749 = vmul.f32 %v4621, 0.7978846
        %v4750 = vmul.f32 %v4622, 0.7978846
        %v4751 = vmul.f32 %v4623, 0.7978846
        %v4752 = vmul.f32 %v4624, 0.7978846
        %v4753 = vmul.f32 %v4625, 0.7978846
        %v4754 = vmul.f32 %v4626, 0.7978846
        %v4755 = vmul.f32 %v4627, 0.7978846
        %v4756 = vmul.f32 %v4628, 0.7978846
        %v4757 = vmul.f32 %v4629, 0.7978846
        %v4758 = vmul.f32 %v4630, 0.7978846
        %v4759 = vmul.f32 %v4631, 0.7978846
        %v4760 = vmul.f32 %v4632, 0.7978846
        %v4761 = vmul.f32 %v4633, 0.7978846
        %v4762 = vmul.f32 %v4634, 0.7978846
        %v4763 = vmul.f32 %v4635, 0.7978846
        %v4764 = vmul.f32 %v4636, 0.7978846
        %v4765 = vmul.f32 %v4637, 0.7978846
        %v4766 = vmul.f32 %v4638, 0.7978846
        %v4767 = vmul.f32 %v4639, 0.7978846
        %v4768 = vmul.f32 %v4640, 0.7978846
        %v4769 = vmul.f32 %v4641, 0.7978846
        %v4770 = vmul.f32 %v4642, 0.7978846
        %v4771 = vmul.f32 %v4643, 0.7978846
        %v4772 = vmul.f32 %v4644, 0.7978846
        %v4773 = vmul.f32 %v4645, 0.7978846
        %v4774 = vmul.f32 %v4646, 0.7978846
        %v4775 = vmul.f32 %v4647, 0.7978846
        %v4776 = vmul.f32 %v4648, 0.7978846
        %v4777 = vmul.f32 %v4649, 0.7978846
        %v4778 = vmul.f32 %v4650, 0.7978846
        %v4779 = vmul.f32 %v4651, 0.7978846
        %v4780 = vmul.f32 %v4652, 0.7978846
        %v4781 = vmul.f32 %v4653, 0.7978846
        %v4782 = vmul.f32 %v4654, 0.7978846
        %v4783 = vmul.f32 %v4655, 0.7978846
        %v4784 = vmul.f32 %v4656, 0.7978846
        %v4785 = vmul.f32 %v4657, 0.7978846
        %v4786 = vmul.f32 %v4658, 0.7978846
        %v4787 = vmul.f32 %v4659, 0.7978846
        %v4788 = vmul.f32 %v4660, 0.7978846
        %v4789 = vmul.f32 %v4661, 0.7978846
        %v4790 = vmul.f32 %v4662, 0.7978846
        %v4791 = vmul.f32 %v4663, 0.7978846
        %v4792 = vmul.f32 %v4664, 0.7978846
        %v4793 = vtanh.pop %v4665
        %v4794 = vtanh.pop %v4666
        %v4795 = vtanh.pop %v4667
        %v4796 = vtanh.pop %v4668
        %v4797 = vtanh.pop %v4669
        %v4798 = vtanh.pop %v4670
        %v4799 = vtanh.pop %v4671
        %v4800 = vtanh.pop %v4672
        %v4801 = vtanh.pop %v4673
        %v4802 = vtanh.pop %v4674
        %v4803 = vtanh.pop %v4675
        %v4804 = vtanh.pop %v4676
        %v4805 = vtanh.pop %v4677
        %v4806 = vtanh.pop %v4678
        %v4807 = vtanh.pop %v4679
        %v4808 = vtanh.pop %v4680
        %v4809 = vtanh.pop %v4681
        %v4810 = vtanh.pop %v4682
        %v4811 = vtanh.pop %v4683
        %v4812 = vtanh.pop %v4684
        %v4813 = vtanh.pop %v4685
        %v4814 = vtanh.pop %v4686
        %v4815 = vtanh.pop %v4687
        %v4816 = vtanh.pop %v4688
        %v4817 = vtanh.pop %v4689
        %v4818 = vtanh.pop %v4690
        %v4819 = vtanh.pop %v4691
        %v4820 = vtanh.pop %v4692
        %v4821 = vtanh.pop %v4693
        %v4822 = vtanh.pop %v4694
        %v4823 = vtanh.pop %v4695
        %v4824 = vtanh.pop %v4696
        %v4825 = vtanh.pop %v4697
        %v4826 = vtanh.pop %v4698
        %v4827 = vtanh.pop %v4699
        %v4828 = vtanh.pop %v4700
        %v4829 = vtanh.pop %v4701
        %v4830 = vtanh.pop %v4702
        %v4831 = vtanh.pop %v4703
        %v4832 = vtanh.pop %v4704
        %v4833 = vtanh.pop %v4705
        %v4834 = vtanh.pop %v4706
        %v4835 = vtanh.pop %v4707
        %v4836 = vtanh.pop %v4708
        %v4837 = vtanh.pop %v4709
        %v4838 = vtanh.pop %v4710
        %v4839 = vtanh.pop %v4711
        %v4840 = vtanh.pop %v4712
        %v4841 = vtanh.pop %v4713
        %v4842 = vtanh.pop %v4714
        %v4843 = vtanh.pop %v4715
        %v4844 = vtanh.pop %v4716
        %v4845 = vtanh.pop %v4717
        %v4846 = vtanh.pop %v4718
        %v4847 = vtanh.pop %v4719
        %v4848 = vtanh.pop %v4720
        %v4849 = vtanh.pop %v4721
        %v4850 = vtanh.pop %v4722
        %v4851 = vtanh.pop %v4723
        %v4852 = vtanh.pop %v4724
        %v4853 = vtanh.pop %v4725
        %v4854 = vtanh.pop %v4726
        %v4855 = vtanh.pop %v4727
        %v4856 = vtanh.pop %v4728
        %v4857 = vtanh.pop %v4729
        %v4858 = vtanh.pop %v4730
        %v4859 = vtanh.pop %v4731
        %v4860 = vtanh.pop %v4732
        %v4861 = vtanh.pop %v4733
        %v4862 = vtanh.pop %v4734
        %v4863 = vtanh.pop %v4735
        %v4864 = vtanh.pop %v4736
        %v4865 = vtanh.pop %v4737
        %v4866 = vtanh.pop %v4738
        %v4867 = vtanh.pop %v4739
        %v4868 = vtanh.pop %v4740
        %v4869 = vtanh.pop %v4741
        %v4870 = vtanh.pop %v4742
        %v4871 = vtanh.pop %v4743
        %v4872 = vtanh.pop %v4744
        %v4873 = vtanh.pop %v4745
        %v4874 = vtanh.pop %v4746
        %v4875 = vtanh.pop %v4747
        %v4876 = vtanh.pop %v4748
        %v4877 = vtanh.pop %v4749
        %v4878 = vtanh.pop %v4750
        %v4879 = vtanh.pop %v4751
        %v4880 = vtanh.pop %v4752
        %v4881 = vtanh.pop %v4753
        %v4882 = vtanh.pop %v4754
        %v4883 = vtanh.pop %v4755
        %v4884 = vtanh.pop %v4756
        %v4885 = vtanh.pop %v4757
        %v4886 = vtanh.pop %v4758
        %v4887 = vtanh.pop %v4759
        %v4888 = vtanh.pop %v4760
        %v4889 = vtanh.pop %v4761
        %v4890 = vtanh.pop %v4762
        %v4891 = vtanh.pop %v4763
        %v4892 = vtanh.pop %v4764
        %v4893 = vtanh.pop %v4765
        %v4894 = vtanh.pop %v4766
        %v4895 = vtanh.pop %v4767
        %v4896 = vtanh.pop %v4768
        %v4897 = vtanh.pop %v4769
        %v4898 = vtanh.pop %v4770
        %v4899 = vtanh.pop %v4771
        %v4900 = vtanh.pop %v4772
        %v4901 = vtanh.pop %v4773
        %v4902 = vtanh.pop %v4774
        %v4903 = vtanh.pop %v4775
        %v4904 = vtanh.pop %v4776
        %v4905 = vtanh.pop %v4777
        %v4906 = vtanh.pop %v4778
        %v4907 = vtanh.pop %v4779
        %v4908 = vtanh.pop %v4780
        %v4909 = vtanh.pop %v4781
        %v4910 = vtanh.pop %v4782
        %v4911 = vtanh.pop %v4783
        %v4912 = vtanh.pop %v4784
        %v4913 = vtanh.pop %v4785
        %v4914 = vtanh.pop %v4786
        %v4915 = vtanh.pop %v4787
        %v4916 = vtanh.pop %v4788
        %v4917 = vtanh.pop %v4789
        %v4918 = vtanh.pop %v4790
        %v4919 = vtanh.pop %v4791
        %v4920 = vtanh.pop %v4792
        %v4921 = vadd.f32 %v4793, 1.0
        %v4922 = vadd.f32 %v4794, 1.0
        %v4923 = vadd.f32 %v4795, 1.0
        %v4924 = vadd.f32 %v4796, 1.0
        %v4925 = vadd.f32 %v4797, 1.0
        %v4926 = vadd.f32 %v4798, 1.0
        %v4927 = vadd.f32 %v4799, 1.0
        %v4928 = vadd.f32 %v4800, 1.0
        %v4929 = vadd.f32 %v4801, 1.0
        %v4930 = vadd.f32 %v4802, 1.0
        %v4931 = vadd.f32 %v4803, 1.0
        %v4932 = vadd.f32 %v4804, 1.0
        %v4933 = vadd.f32 %v4805, 1.0
        %v4934 = vadd.f32 %v4806, 1.0
        %v4935 = vadd.f32 %v4807, 1.0
        %v4936 = vadd.f32 %v4808, 1.0
        %v4937 = vadd.f32 %v4809, 1.0
        %v4938 = vadd.f32 %v4810, 1.0
        %v4939 = vadd.f32 %v4811, 1.0
        %v4940 = vadd.f32 %v4812, 1.0
        %v4941 = vadd.f32 %v4813, 1.0
        %v4942 = vadd.f32 %v4814, 1.0
        %v4943 = vadd.f32 %v4815, 1.0
        %v4944 = vadd.f32 %v4816, 1.0
        %v4945 = vadd.f32 %v4817, 1.0
        %v4946 = vadd.f32 %v4818, 1.0
        %v4947 = vadd.f32 %v4819, 1.0
        %v4948 = vadd.f32 %v4820, 1.0
        %v4949 = vadd.f32 %v4821, 1.0
        %v4950 = vadd.f32 %v4822, 1.0
        %v4951 = vadd.f32 %v4823, 1.0
        %v4952 = vadd.f32 %v4824, 1.0
        %v4953 = vadd.f32 %v4825, 1.0
        %v4954 = vadd.f32 %v4826, 1.0
        %v4955 = vadd.f32 %v4827, 1.0
        %v4956 = vadd.f32 %v4828, 1.0
        %v4957 = vadd.f32 %v4829, 1.0
        %v4958 = vadd.f32 %v4830, 1.0
        %v4959 = vadd.f32 %v4831, 1.0
        %v4960 = vadd.f32 %v4832, 1.0
        %v4961 = vadd.f32 %v4833, 1.0
        %v4962 = vadd.f32 %v4834, 1.0
        %v4963 = vadd.f32 %v4835, 1.0
        %v4964 = vadd.f32 %v4836, 1.0
        %v4965 = vadd.f32 %v4837, 1.0
        %v4966 = vadd.f32 %v4838, 1.0
        %v4967 = vadd.f32 %v4839, 1.0
        %v4968 = vadd.f32 %v4840, 1.0
        %v4969 = vadd.f32 %v4841, 1.0
        %v4970 = vadd.f32 %v4842, 1.0
        %v4971 = vadd.f32 %v4843, 1.0
        %v4972 = vadd.f32 %v4844, 1.0
        %v4973 = vadd.f32 %v4845, 1.0
        %v4974 = vadd.f32 %v4846, 1.0
        %v4975 = vadd.f32 %v4847, 1.0
        %v4976 = vadd.f32 %v4848, 1.0
        %v4977 = vadd.f32 %v4849, 1.0
        %v4978 = vadd.f32 %v4850, 1.0
        %v4979 = vadd.f32 %v4851, 1.0
        %v4980 = vadd.f32 %v4852, 1.0
        %v4981 = vadd.f32 %v4853, 1.0
        %v4982 = vadd.f32 %v4854, 1.0
        %v4983 = vadd.f32 %v4855, 1.0
        %v4984 = vadd.f32 %v4856, 1.0
        %v4985 = vadd.f32 %v4857, 1.0
        %v4986 = vadd.f32 %v4858, 1.0
        %v4987 = vadd.f32 %v4859, 1.0
        %v4988 = vadd.f32 %v4860, 1.0
        %v4989 = vadd.f32 %v4861, 1.0
        %v4990 = vadd.f32 %v4862, 1.0
        %v4991 = vadd.f32 %v4863, 1.0
        %v4992 = vadd.f32 %v4864, 1.0
        %v4993 = vadd.f32 %v4865, 1.0
        %v4994 = vadd.f32 %v4866, 1.0
        %v4995 = vadd.f32 %v4867, 1.0
        %v4996 = vadd.f32 %v4868, 1.0
        %v4997 = vadd.f32 %v4869, 1.0
        %v4998 = vadd.f32 %v4870, 1.0
        %v4999 = vadd.f32 %v4871, 1.0
        %v5000 = vadd.f32 %v4872, 1.0
        %v5001 = vadd.f32 %v4873, 1.0
        %v5002 = vadd.f32 %v4874, 1.0
        %v5003 = vadd.f32 %v4875, 1.0
        %v5004 = vadd.f32 %v4876, 1.0
        %v5005 = vadd.f32 %v4877, 1.0
        %v5006 = vadd.f32 %v4878, 1.0
        %v5007 = vadd.f32 %v4879, 1.0
        %v5008 = vadd.f32 %v4880, 1.0
        %v5009 = vadd.f32 %v4881, 1.0
        %v5010 = vadd.f32 %v4882, 1.0
        %v5011 = vadd.f32 %v4883, 1.0
        %v5012 = vadd.f32 %v4884, 1.0
        %v5013 = vadd.f32 %v4885, 1.0
        %v5014 = vadd.f32 %v4886, 1.0
        %v5015 = vadd.f32 %v4887, 1.0
        %v5016 = vadd.f32 %v4888, 1.0
        %v5017 = vadd.f32 %v4889, 1.0
        %v5018 = vadd.f32 %v4890, 1.0
        %v5019 = vadd.f32 %v4891, 1.0
        %v5020 = vadd.f32 %v4892, 1.0
        %v5021 = vadd.f32 %v4893, 1.0
        %v5022 = vadd.f32 %v4894, 1.0
        %v5023 = vadd.f32 %v4895, 1.0
        %v5024 = vadd.f32 %v4896, 1.0
        %v5025 = vadd.f32 %v4897, 1.0
        %v5026 = vadd.f32 %v4898, 1.0
        %v5027 = vadd.f32 %v4899, 1.0
        %v5028 = vadd.f32 %v4900, 1.0
        %v5029 = vadd.f32 %v4901, 1.0
        %v5030 = vadd.f32 %v4902, 1.0
        %v5031 = vadd.f32 %v4903, 1.0
        %v5032 = vadd.f32 %v4904, 1.0
        %v5033 = vadd.f32 %v4905, 1.0
        %v5034 = vadd.f32 %v4906, 1.0
        %v5035 = vadd.f32 %v4907, 1.0
        %v5036 = vadd.f32 %v4908, 1.0
        %v5037 = vadd.f32 %v4909, 1.0
        %v5038 = vadd.f32 %v4910, 1.0
        %v5039 = vadd.f32 %v4911, 1.0
        %v5040 = vadd.f32 %v4912, 1.0
        %v5041 = vadd.f32 %v4913, 1.0
        %v5042 = vadd.f32 %v4914, 1.0
        %v5043 = vadd.f32 %v4915, 1.0
        %v5044 = vadd.f32 %v4916, 1.0
        %v5045 = vadd.f32 %v4917, 1.0
        %v5046 = vadd.f32 %v4918, 1.0
        %v5047 = vadd.f32 %v4919, 1.0
        %v5048 = vadd.f32 %v4920, 1.0
        %v5049 = vmul.f32 %v4025, %v4921
        %v5050 = vmul.f32 %v4026, %v4922
        %v5051 = vmul.f32 %v4027, %v4923
        %v5052 = vmul.f32 %v4028, %v4924
        %v5053 = vmul.f32 %v4029, %v4925
        %v5054 = vmul.f32 %v4030, %v4926
        %v5055 = vmul.f32 %v4031, %v4927
        %v5056 = vmul.f32 %v4032, %v4928
        %v5057 = vmul.f32 %v4033, %v4929
        %v5058 = vmul.f32 %v4034, %v4930
        %v5059 = vmul.f32 %v4035, %v4931
        %v5060 = vmul.f32 %v4036, %v4932
        %v5061 = vmul.f32 %v4037, %v4933
        %v5062 = vmul.f32 %v4038, %v4934
        %v5063 = vmul.f32 %v4039, %v4935
        %v5064 = vmul.f32 %v4040, %v4936
        %v5065 = vmul.f32 %v4041, %v4937
        %v5066 = vmul.f32 %v4042, %v4938
        %v5067 = vmul.f32 %v4043, %v4939
        %v5068 = vmul.f32 %v4044, %v4940
        %v5069 = vmul.f32 %v4045, %v4941
        %v5070 = vmul.f32 %v4046, %v4942
        %v5071 = vmul.f32 %v4047, %v4943
        %v5072 = vmul.f32 %v4048, %v4944
        %v5073 = vmul.f32 %v4049, %v4945
        %v5074 = vmul.f32 %v4050, %v4946
        %v5075 = vmul.f32 %v4051, %v4947
        %v5076 = vmul.f32 %v4052, %v4948
        %v5077 = vmul.f32 %v4053, %v4949
        %v5078 = vmul.f32 %v4054, %v4950
        %v5079 = vmul.f32 %v4055, %v4951
        %v5080 = vmul.f32 %v4056, %v4952
        %v5081 = vmul.f32 %v4057, %v4953
        %v5082 = vmul.f32 %v4058, %v4954
        %v5083 = vmul.f32 %v4059, %v4955
        %v5084 = vmul.f32 %v4060, %v4956
        %v5085 = vmul.f32 %v4061, %v4957
        %v5086 = vmul.f32 %v4062, %v4958
        %v5087 = vmul.f32 %v4063, %v4959
        %v5088 = vmul.f32 %v4064, %v4960
        %v5089 = vmul.f32 %v4065, %v4961
        %v5090 = vmul.f32 %v4066, %v4962
        %v5091 = vmul.f32 %v4067, %v4963
        %v5092 = vmul.f32 %v4068, %v4964
        %v5093 = vmul.f32 %v4069, %v4965
        %v5094 = vmul.f32 %v4070, %v4966
        %v5095 = vmul.f32 %v4071, %v4967
        %v5096 = vmul.f32 %v4072, %v4968
        %v5097 = vmul.f32 %v4073, %v4969
        %v5098 = vmul.f32 %v4074, %v4970
        %v5099 = vmul.f32 %v4075, %v4971
        %v5100 = vmul.f32 %v4076, %v4972
        %v5101 = vmul.f32 %v4077, %v4973
        %v5102 = vmul.f32 %v4078, %v4974
        %v5103 = vmul.f32 %v4079, %v4975
        %v5104 = vmul.f32 %v4080, %v4976
        %v5105 = vmul.f32 %v4081, %v4977
        %v5106 = vmul.f32 %v4082, %v4978
        %v5107 = vmul.f32 %v4083, %v4979
        %v5108 = vmul.f32 %v4084, %v4980
        %v5109 = vmul.f32 %v4085, %v4981
        %v5110 = vmul.f32 %v4086, %v4982
        %v5111 = vmul.f32 %v4087, %v4983
        %v5112 = vmul.f32 %v4088, %v4984
        %v5113 = vmul.f32 %v4089, %v4985
        %v5114 = vmul.f32 %v4090, %v4986
        %v5115 = vmul.f32 %v4091, %v4987
        %v5116 = vmul.f32 %v4092, %v4988
        %v5117 = vmul.f32 %v4093, %v4989
        %v5118 = vmul.f32 %v4094, %v4990
        %v5119 = vmul.f32 %v4095, %v4991
        %v5120 = vmul.f32 %v4096, %v4992
        %v5121 = vmul.f32 %v4097, %v4993
        %v5122 = vmul.f32 %v4098, %v4994
        %v5123 = vmul.f32 %v4099, %v4995
        %v5124 = vmul.f32 %v4100, %v4996
        %v5125 = vmul.f32 %v4101, %v4997
        %v5126 = vmul.f32 %v4102, %v4998
        %v5127 = vmul.f32 %v4103, %v4999
        %v5128 = vmul.f32 %v4104, %v5000
        %v5129 = vmul.f32 %v4105, %v5001
        %v5130 = vmul.f32 %v4106, %v5002
        %v5131 = vmul.f32 %v4107, %v5003
        %v5132 = vmul.f32 %v4108, %v5004
        %v5133 = vmul.f32 %v4109, %v5005
        %v5134 = vmul.f32 %v4110, %v5006
        %v5135 = vmul.f32 %v4111, %v5007
        %v5136 = vmul.f32 %v4112, %v5008
        %v5137 = vmul.f32 %v4113, %v5009
        %v5138 = vmul.f32 %v4114, %v5010
        %v5139 = vmul.f32 %v4115, %v5011
        %v5140 = vmul.f32 %v4116, %v5012
        %v5141 = vmul.f32 %v4117, %v5013
        %v5142 = vmul.f32 %v4118, %v5014
        %v5143 = vmul.f32 %v4119, %v5015
        %v5144 = vmul.f32 %v4120, %v5016
        %v5145 = vmul.f32 %v4121, %v5017
        %v5146 = vmul.f32 %v4122, %v5018
        %v5147 = vmul.f32 %v4123, %v5019
        %v5148 = vmul.f32 %v4124, %v5020
        %v5149 = vmul.f32 %v4125, %v5021
        %v5150 = vmul.f32 %v4126, %v5022
        %v5151 = vmul.f32 %v4127, %v5023
        %v5152 = vmul.f32 %v4128, %v5024
        %v5153 = vmul.f32 %v4129, %v5025
        %v5154 = vmul.f32 %v4130, %v5026
        %v5155 = vmul.f32 %v4131, %v5027
        %v5156 = vmul.f32 %v4132, %v5028
        %v5157 = vmul.f32 %v4133, %v5029
        %v5158 = vmul.f32 %v4134, %v5030
        %v5159 = vmul.f32 %v4135, %v5031
        %v5160 = vmul.f32 %v4136, %v5032
        %v5161 = vmul.f32 %v4137, %v5033
        %v5162 = vmul.f32 %v4138, %v5034
        %v5163 = vmul.f32 %v4139, %v5035
        %v5164 = vmul.f32 %v4140, %v5036
        %v5165 = vmul.f32 %v4141, %v5037
        %v5166 = vmul.f32 %v4142, %v5038
        %v5167 = vmul.f32 %v4143, %v5039
        %v5168 = vmul.f32 %v4144, %v5040
        %v5169 = vmul.f32 %v4145, %v5041
        %v5170 = vmul.f32 %v4146, %v5042
        %v5171 = vmul.f32 %v4147, %v5043
        %v5172 = vmul.f32 %v4148, %v5044
        %v5173 = vmul.f32 %v4149, %v5045
        %v5174 = vmul.f32 %v4150, %v5046
        %v5175 = vmul.f32 %v4151, %v5047
        %v5176 = vmul.f32 %v4152, %v5048
        %v5177 = vpack.c.bf16 %v5053, %v5049
        %v5178 = vpack.c.bf16 %v5054, %v5050
        %v5179 = vpack.c.bf16 %v5055, %v5051
        %v5180 = vpack.c.bf16 %v5056, %v5052
        %v5181 = vpack.c.bf16 %v5061, %v5057
        %v5182 = vpack.c.bf16 %v5062, %v5058
        %v5183 = vpack.c.bf16 %v5063, %v5059
        %v5184 = vpack.c.bf16 %v5064, %v5060
        %v5185 = vpack.c.bf16 %v5069, %v5065
        %v5186 = vpack.c.bf16 %v5070, %v5066
        %v5187 = vpack.c.bf16 %v5071, %v5067
        %v5188 = vpack.c.bf16 %v5072, %v5068
        %v5189 = vpack.c.bf16 %v5077, %v5073
        %v5190 = vpack.c.bf16 %v5078, %v5074
        %v5191 = vpack.c.bf16 %v5079, %v5075
        %v5192 = vpack.c.bf16 %v5080, %v5076
        %v5193 = vpack.c.bf16 %v5085, %v5081
        %v5194 = vpack.c.bf16 %v5086, %v5082
        %v5195 = vpack.c.bf16 %v5087, %v5083
        %v5196 = vpack.c.bf16 %v5088, %v5084
        %v5197 = vpack.c.bf16 %v5093, %v5089
        %v5198 = vpack.c.bf16 %v5094, %v5090
        %v5199 = vpack.c.bf16 %v5095, %v5091
        %v5200 = vpack.c.bf16 %v5096, %v5092
        %v5201 = vpack.c.bf16 %v5101, %v5097
        %v5202 = vpack.c.bf16 %v5102, %v5098
        %v5203 = vpack.c.bf16 %v5103, %v5099
        %v5204 = vpack.c.bf16 %v5104, %v5100
        %v5205 = vpack.c.bf16 %v5109, %v5105
        %v5206 = vpack.c.bf16 %v5110, %v5106
        %v5207 = vpack.c.bf16 %v5111, %v5107
        %v5208 = vpack.c.bf16 %v5112, %v5108
        %v5209 = vpack.c.bf16 %v5117, %v5113
        %v5210 = vpack.c.bf16 %v5118, %v5114
        %v5211 = vpack.c.bf16 %v5119, %v5115
        %v5212 = vpack.c.bf16 %v5120, %v5116
        %v5213 = vpack.c.bf16 %v5125, %v5121
        %v5214 = vpack.c.bf16 %v5126, %v5122
        %v5215 = vpack.c.bf16 %v5127, %v5123
        %v5216 = vpack.c.bf16 %v5128, %v5124
        %v5217 = vpack.c.bf16 %v5133, %v5129
        %v5218 = vpack.c.bf16 %v5134, %v5130
        %v5219 = vpack.c.bf16 %v5135, %v5131
        %v5220 = vpack.c.bf16 %v5136, %v5132
        %v5221 = vpack.c.bf16 %v5141, %v5137
        %v5222 = vpack.c.bf16 %v5142, %v5138
        %v5223 = vpack.c.bf16 %v5143, %v5139
        %v5224 = vpack.c.bf16 %v5144, %v5140
        %v5225 = vpack.c.bf16 %v5149, %v5145
        %v5226 = vpack.c.bf16 %v5150, %v5146
        %v5227 = vpack.c.bf16 %v5151, %v5147
        %v5228 = vpack.c.bf16 %v5152, %v5148
        %v5229 = vpack.c.bf16 %v5157, %v5153
        %v5230 = vpack.c.bf16 %v5158, %v5154
        %v5231 = vpack.c.bf16 %v5159, %v5155
        %v5232 = vpack.c.bf16 %v5160, %v5156
        %v5233 = vpack.c.bf16 %v5165, %v5161
        %v5234 = vpack.c.bf16 %v5166, %v5162
        %v5235 = vpack.c.bf16 %v5167, %v5163
        %v5236 = vpack.c.bf16 %v5168, %v5164
        %v5237 = vpack.c.bf16 %v5173, %v5169
        %v5238 = vpack.c.bf16 %v5174, %v5170
        %v5239 = vpack.c.bf16 %v5175, %v5171
        %v5240 = vpack.c.bf16 %v5176, %v5172
        %v5241 = vld [vmem:[#allocation10] sm:$0xf]
        %v5242 = vld [vmem:[#allocation10 + $0x4] sm:$0xf]
        %v5243 = vld [vmem:[#allocation10 + $0x8] sm:$0xf]
        %v5244 = vld [vmem:[#allocation10 + $0xc] sm:$0xf]
        %v5245 = vld [vmem:[#allocation10 + $0x10] sm:$0xf]
        %v5246 = vld [vmem:[#allocation10 + $0x14] sm:$0xf]
        %v5247 = vld [vmem:[#allocation10 + $0x18] sm:$0xf]
        %v5248 = vld [vmem:[#allocation10 + $0x1c] sm:$0xf]
        %v5249 = vld [vmem:[#allocation10 + $0x20] sm:$0xf]
        %v5250 = vld [vmem:[#allocation10 + $0x24] sm:$0xf]
        %v5251 = vld [vmem:[#allocation10 + $0x28] sm:$0xf]
        %v5252 = vld [vmem:[#allocation10 + $0x2c] sm:$0xf]
        %v5253 = vld [vmem:[#allocation10 + $0x30] sm:$0xf]
        %v5254 = vld [vmem:[#allocation10 + $0x34] sm:$0xf]
        %v5255 = vld [vmem:[#allocation10 + $0x38] sm:$0xf]
        %v5256 = vld [vmem:[#allocation10 + $0x3c] sm:$0xf]
        %v5257 = vld [vmem:[#allocation10 + $0x40] sm:$0xf]
        %v5258 = vld [vmem:[#allocation10 + $0x44] sm:$0xf]
        %v5259 = vld [vmem:[#allocation10 + $0x48] sm:$0xf]
        %v5260 = vld [vmem:[#allocation10 + $0x4c] sm:$0xf]
        %v5261 = vld [vmem:[#allocation10 + $0x50] sm:$0xf]
        %v5262 = vld [vmem:[#allocation10 + $0x54] sm:$0xf]
        %v5263 = vld [vmem:[#allocation10 + $0x58] sm:$0xf]
        %v5264 = vld [vmem:[#allocation10 + $0x5c] sm:$0xf]
        %v5265 = vld [vmem:[#allocation10 + $0x60] sm:$0xf]
        %v5266 = vld [vmem:[#allocation10 + $0x64] sm:$0xf]
        %v5267 = vld [vmem:[#allocation10 + $0x68] sm:$0xf]
        %v5268 = vld [vmem:[#allocation10 + $0x6c] sm:$0xf]
        %v5269 = vld [vmem:[#allocation10 + $0x70] sm:$0xf]
        %v5270 = vld [vmem:[#allocation10 + $0x74] sm:$0xf]
        %v5271 = vld [vmem:[#allocation10 + $0x78] sm:$0xf]
        %v5272 = vld [vmem:[#allocation10 + $0x7c] sm:$0xf]
        %v5273 = vld [vmem:[#allocation10 + $0x80] sm:$0xf]
        %v5274 = vld [vmem:[#allocation10 + $0x84] sm:$0xf]
        %v5275 = vld [vmem:[#allocation10 + $0x88] sm:$0xf]
        %v5276 = vld [vmem:[#allocation10 + $0x8c] sm:$0xf]
        %v5277 = vld [vmem:[#allocation10 + $0x90] sm:$0xf]
        %v5278 = vld [vmem:[#allocation10 + $0x94] sm:$0xf]
        %v5279 = vld [vmem:[#allocation10 + $0x98] sm:$0xf]
        %v5280 = vld [vmem:[#allocation10 + $0x9c] sm:$0xf]
        %v5281 = vld [vmem:[#allocation10 + $0xa0] sm:$0xf]
        %v5282 = vld [vmem:[#allocation10 + $0xa4] sm:$0xf]
        %v5283 = vld [vmem:[#allocation10 + $0xa8] sm:$0xf]
        %v5284 = vld [vmem:[#allocation10 + $0xac] sm:$0xf]
        %v5285 = vld [vmem:[#allocation10 + $0xb0] sm:$0xf]
        %v5286 = vld [vmem:[#allocation10 + $0xb4] sm:$0xf]
        %v5287 = vld [vmem:[#allocation10 + $0xb8] sm:$0xf]
        %v5288 = vld [vmem:[#allocation10 + $0xbc] sm:$0xf]
        %v5289 = vld [vmem:[#allocation10 + $0xc0] sm:$0xf]
        %v5290 = vld [vmem:[#allocation10 + $0xc4] sm:$0xf]
        %v5291 = vld [vmem:[#allocation10 + $0xc8] sm:$0xf]
        %v5292 = vld [vmem:[#allocation10 + $0xcc] sm:$0xf]
        %v5293 = vld [vmem:[#allocation10 + $0xd0] sm:$0xf]
        %v5294 = vld [vmem:[#allocation10 + $0xd4] sm:$0xf]
        %v5295 = vld [vmem:[#allocation10 + $0xd8] sm:$0xf]
        %v5296 = vld [vmem:[#allocation10 + $0xdc] sm:$0xf]
        %v5297 = vld [vmem:[#allocation10 + $0xe0] sm:$0xf]
        %v5298 = vld [vmem:[#allocation10 + $0xe4] sm:$0xf]
        %v5299 = vld [vmem:[#allocation10 + $0xe8] sm:$0xf]
        %v5300 = vld [vmem:[#allocation10 + $0xec] sm:$0xf]
        %v5301 = vld [vmem:[#allocation10 + $0xf0] sm:$0xf]
        %v5302 = vld [vmem:[#allocation10 + $0xf4] sm:$0xf]
        %v5303 = vld [vmem:[#allocation10 + $0xf8] sm:$0xf]
        %v5304 = vld [vmem:[#allocation10 + $0xfc] sm:$0xf]
        %v5305 = vld [vmem:[%s14] sm:$0x1]
        %v5307 = vlaneseq
        %v5308 = vshrl.u32 %v5307, 7
        %v5309 = vsub.s32 0, %v5308
        %v5310 = vrot.slane %v5305, %v5309
        %v5376 = vunpack.c.l.b16 %v5241
        %v5377 = vunpack.c.l.b16 %v5242
        %v5378 = vunpack.c.l.b16 %v5243
        %v5379 = vunpack.c.l.b16 %v5244
        %v5380 = vunpack.c.l.b16 %v5245
        %v5381 = vunpack.c.l.b16 %v5246
        %v5382 = vunpack.c.l.b16 %v5247
        %v5383 = vunpack.c.l.b16 %v5248
        %v5384 = vunpack.c.l.b16 %v5249
        %v5385 = vunpack.c.l.b16 %v5250
        %v5386 = vunpack.c.l.b16 %v5251
        %v5387 = vunpack.c.l.b16 %v5252
        %v5388 = vunpack.c.l.b16 %v5253
        %v5389 = vunpack.c.l.b16 %v5254
        %v5390 = vunpack.c.l.b16 %v5255
        %v5391 = vunpack.c.l.b16 %v5256
        %v5392 = vunpack.c.l.b16 %v5257
        %v5393 = vunpack.c.l.b16 %v5258
        %v5394 = vunpack.c.l.b16 %v5259
        %v5395 = vunpack.c.l.b16 %v5260
        %v5396 = vunpack.c.l.b16 %v5261
        %v5397 = vunpack.c.l.b16 %v5262
        %v5398 = vunpack.c.l.b16 %v5263
        %v5399 = vunpack.c.l.b16 %v5264
        %v5400 = vunpack.c.l.b16 %v5265
        %v5401 = vunpack.c.l.b16 %v5266
        %v5402 = vunpack.c.l.b16 %v5267
        %v5403 = vunpack.c.l.b16 %v5268
        %v5404 = vunpack.c.l.b16 %v5269
        %v5405 = vunpack.c.l.b16 %v5270
        %v5406 = vunpack.c.l.b16 %v5271
        %v5407 = vunpack.c.l.b16 %v5272
        %v5408 = vunpack.c.l.b16 %v5273
        %v5409 = vunpack.c.l.b16 %v5274
        %v5410 = vunpack.c.l.b16 %v5275
        %v5411 = vunpack.c.l.b16 %v5276
        %v5412 = vunpack.c.l.b16 %v5277
        %v5413 = vunpack.c.l.b16 %v5278
        %v5414 = vunpack.c.l.b16 %v5279
        %v5415 = vunpack.c.l.b16 %v5280
        %v5416 = vunpack.c.l.b16 %v5281
        %v5417 = vunpack.c.l.b16 %v5282
        %v5418 = vunpack.c.l.b16 %v5283
        %v5419 = vunpack.c.l.b16 %v5284
        %v5420 = vunpack.c.l.b16 %v5285
        %v5421 = vunpack.c.l.b16 %v5286
        %v5422 = vunpack.c.l.b16 %v5287
        %v5423 = vunpack.c.l.b16 %v5288
        %v5424 = vunpack.c.l.b16 %v5289
        %v5425 = vunpack.c.l.b16 %v5290
        %v5426 = vunpack.c.l.b16 %v5291
        %v5427 = vunpack.c.l.b16 %v5292
        %v5428 = vunpack.c.l.b16 %v5293
        %v5429 = vunpack.c.l.b16 %v5294
        %v5430 = vunpack.c.l.b16 %v5295
        %v5431 = vunpack.c.l.b16 %v5296
        %v5432 = vunpack.c.l.b16 %v5297
        %v5433 = vunpack.c.l.b16 %v5298
        %v5434 = vunpack.c.l.b16 %v5299
        %v5435 = vunpack.c.l.b16 %v5300
        %v5436 = vunpack.c.l.b16 %v5301
        %v5437 = vunpack.c.l.b16 %v5302
        %v5438 = vunpack.c.l.b16 %v5303
        %v5439 = vunpack.c.l.b16 %v5304
        %v5440 = vpack.c.b16 %v5377, %v5376
        %v5441 = vpack.c.b16 %v5379, %v5378
        %v5442 = vpack.c.b16 %v5381, %v5380
        %v5443 = vpack.c.b16 %v5383, %v5382
        %v5444 = vpack.c.b16 %v5385, %v5384
        %v5445 = vpack.c.b16 %v5387, %v5386
        %v5446 = vpack.c.b16 %v5389, %v5388
        %v5447 = vpack.c.b16 %v5391, %v5390
        %v5448 = vpack.c.b16 %v5393, %v5392
        %v5449 = vpack.c.b16 %v5395, %v5394
        %v5450 = vpack.c.b16 %v5397, %v5396
        %v5451 = vpack.c.b16 %v5399, %v5398
        %v5452 = vpack.c.b16 %v5401, %v5400
        %v5453 = vpack.c.b16 %v5403, %v5402
        %v5454 = vpack.c.b16 %v5405, %v5404
        %v5455 = vpack.c.b16 %v5407, %v5406
        %v5456 = vpack.c.b16 %v5409, %v5408
        %v5457 = vpack.c.b16 %v5411, %v5410
        %v5458 = vpack.c.b16 %v5413, %v5412
        %v5459 = vpack.c.b16 %v5415, %v5414
        %v5460 = vpack.c.b16 %v5417, %v5416
        %v5461 = vpack.c.b16 %v5419, %v5418
        %v5462 = vpack.c.b16 %v5421, %v5420
        %v5463 = vpack.c.b16 %v5423, %v5422
        %v5464 = vpack.c.b16 %v5425, %v5424
        %v5465 = vpack.c.b16 %v5427, %v5426
        %v5466 = vpack.c.b16 %v5429, %v5428
        %v5467 = vpack.c.b16 %v5431, %v5430
        %v5468 = vpack.c.b16 %v5433, %v5432
        %v5469 = vpack.c.b16 %v5435, %v5434
        %v5470 = vpack.c.b16 %v5437, %v5436
        %v5471 = vpack.c.b16 %v5439, %v5438
        %5504 = vmatprep.subr.bf16.mxu0 0
        %5505 = vmatpush1.bf16.msra.mxu0 %v5440
        %5506 = vmatprep.subr.bf16.mxu0 0
        %5507 = vmatpush1.bf16.msra.mxu0 %v5441
        %5508 = vmatprep.subr.bf16.mxu0 0
        %5509 = vmatpush1.bf16.msra.mxu0 %v5442
        %5510 = vmatprep.subr.bf16.mxu0 0
        %5511 = vmatpush1.bf16.msra.mxu0 %v5443
        %5512 = vmatprep.subr.bf16.mxu0 0
        %5513 = vmatpush1.bf16.msra.mxu0 %v5444
        %5514 = vmatprep.subr.bf16.mxu0 0
        %5515 = vmatpush1.bf16.msra.mxu0 %v5445
        %5516 = vmatprep.subr.bf16.mxu0 0
        %5517 = vmatpush1.bf16.msra.mxu0 %v5446
        %5518 = vmatprep.subr.bf16.mxu0 0
        %5519 = vmatpush1.bf16.msra.mxu0 %v5447
        %5520 = vmatprep.subr.bf16.mxu0 0
        %5521 = vmatpush1.bf16.msra.mxu0 %v5448
        %5522 = vmatprep.subr.bf16.mxu0 0
        %5523 = vmatpush1.bf16.msra.mxu0 %v5449
        %5524 = vmatprep.subr.bf16.mxu0 0
        %5525 = vmatpush1.bf16.msra.mxu0 %v5450
        %5526 = vmatprep.subr.bf16.mxu0 0
        %5527 = vmatpush1.bf16.msra.mxu0 %v5451
        %5528 = vmatprep.subr.bf16.mxu0 0
        %5529 = vmatpush1.bf16.msra.mxu0 %v5452
        %5530 = vmatprep.subr.bf16.mxu0 0
        %5531 = vmatpush1.bf16.msra.mxu0 %v5453
        %5532 = vmatprep.subr.bf16.mxu0 0
        %5533 = vmatpush1.bf16.msra.mxu0 %v5454
        %5534 = vmatprep.subr.bf16.mxu0 0
        %5535 = vmatpush1.bf16.msra.mxu0 %v5455
        %5536 = vmatprep.mubr.bf16.mxu0 %v5178
        %5537 = vmatmul.mubr.bf16.gmra.mrb[0].mxu0 %v5177
        %v5538 = vpop.f32.mrb[0].mxu0
        %v5539 = vadd.f32 %v5310, %v5538
        %v5540 = vpop.f32.mrb[0].mxu0
        %v5541 = vpop.f32.mrb[0].mxu0
        %v5542 = vadd.f32 %v5310, %v5541
        %v5543 = vpop.f32.mrb[0].mxu0
        %5544 = vmatprep.mubr.bf16.mxu0 %v5182
        %5545 = vmatmul.mubr.bf16.gmra.mrb[0].mxu0 %v5181
        %v5546 = vpop.f32.mrb[0].mxu0
        %v5547 = vadd.f32 %v5310, %v5546
        %v5548 = vpop.f32.mrb[0].mxu0
        %v5549 = vpop.f32.mrb[0].mxu0
        %v5550 = vadd.f32 %v5310, %v5549
        %v5551 = vpop.f32.mrb[0].mxu0
        %5552 = vmatprep.mubr.bf16.mxu0 %v5186
        %5553 = vmatmul.mubr.bf16.gmra.mrb[0].mxu0 %v5185
        %v5554 = vpop.f32.mrb[0].mxu0
        %v5555 = vadd.f32 %v5310, %v5554
        %v5556 = vpop.f32.mrb[0].mxu0
        %v5557 = vpop.f32.mrb[0].mxu0
        %v5558 = vadd.f32 %v5310, %v5557
        %v5559 = vpop.f32.mrb[0].mxu0
        %5560 = vmatprep.mubr.bf16.mxu0 %v5190
        %5561 = vmatmul.mubr.bf16.gmra.mrb[0].mxu0 %v5189
        %v5562 = vpop.f32.mrb[0].mxu0
        %v5563 = vadd.f32 %v5310, %v5562
        %v5564 = vpop.f32.mrb[0].mxu0
        %v5565 = vpop.f32.mrb[0].mxu0
        %v5566 = vadd.f32 %v5310, %v5565
        %v5567 = vpop.f32.mrb[0].mxu0
        %5568 = vmatprep.mubr.bf16.mxu0 %v5194
        %5569 = vmatmul.mubr.bf16.gmra.mrb[0].mxu0 %v5193
        %v5570 = vpop.f32.mrb[0].mxu0
        %v5571 = vadd.f32 %v5310, %v5570
        %v5572 = vpop.f32.mrb[0].mxu0
        %v5573 = vpop.f32.mrb[0].mxu0
        %v5574 = vadd.f32 %v5310, %v5573
        %v5575 = vpop.f32.mrb[0].mxu0
        %5576 = vmatprep.mubr.bf16.mxu0 %v5198
        %5577 = vmatmul.mubr.bf16.gmra.mrb[0].mxu0 %v5197
        %v5578 = vpop.f32.mrb[0].mxu0
        %v5579 = vadd.f32 %v5310, %v5578
        %v5580 = vpop.f32.mrb[0].mxu0
        %v5581 = vpop.f32.mrb[0].mxu0
        %v5582 = vadd.f32 %v5310, %v5581
        %v5583 = vpop.f32.mrb[0].mxu0
        %5584 = vmatprep.mubr.bf16.mxu0 %v5202
        %5585 = vmatmul.mubr.bf16.gmra.mrb[0].mxu0 %v5201
        %v5586 = vpop.f32.mrb[0].mxu0
        %v5587 = vadd.f32 %v5310, %v5586
        %v5588 = vpop.f32.mrb[0].mxu0
        %v5589 = vpop.f32.mrb[0].mxu0
        %v5590 = vadd.f32 %v5310, %v5589
        %v5591 = vpop.f32.mrb[0].mxu0
        %5592 = vmatprep.mubr.bf16.mxu0 %v5206
        %5593 = vmatmul.mubr.bf16.gmra.mrb[0].mxu0 %v5205
        %v5594 = vpop.f32.mrb[0].mxu0
        %v5595 = vadd.f32 %v5310, %v5594
        %v5596 = vpop.f32.mrb[0].mxu0
        %v5597 = vpop.f32.mrb[0].mxu0
        %v5598 = vadd.f32 %v5310, %v5597
        %v5599 = vpop.f32.mrb[0].mxu0
        %5600 = vmatprep.mubr.bf16.mxu0 %v5210
        %5601 = vmatmul.mubr.bf16.gmra.mrb[0].mxu0 %v5209
        %v5602 = vpop.f32.mrb[0].mxu0
        %v5603 = vadd.f32 %v5310, %v5602
        %v5604 = vpop.f32.mrb[0].mxu0
        %v5605 = vpop.f32.mrb[0].mxu0
        %v5606 = vadd.f32 %v5310, %v5605
        %v5607 = vpop.f32.mrb[0].mxu0
        %5608 = vmatprep.mubr.bf16.mxu0 %v5214
        %5609 = vmatmul.mubr.bf16.gmra.mrb[0].mxu0 %v5213
        %v5610 = vpop.f32.mrb[0].mxu0
        %v5611 = vadd.f32 %v5310, %v5610
        %v5612 = vpop.f32.mrb[0].mxu0
        %v5613 = vpop.f32.mrb[0].mxu0
        %v5614 = vadd.f32 %v5310, %v5613
        %v5615 = vpop.f32.mrb[0].mxu0
        %5616 = vmatprep.mubr.bf16.mxu0 %v5218
        %5617 = vmatmul.mubr.bf16.gmra.mrb[0].mxu0 %v5217
        %v5618 = vpop.f32.mrb[0].mxu0
        %v5619 = vadd.f32 %v5310, %v5618
        %v5620 = vpop.f32.mrb[0].mxu0
        %v5621 = vpop.f32.mrb[0].mxu0
        %v5622 = vadd.f32 %v5310, %v5621
        %v5623 = vpop.f32.mrb[0].mxu0
        %5624 = vmatprep.mubr.bf16.mxu0 %v5222
        %5625 = vmatmul.mubr.bf16.gmra.mrb[0].mxu0 %v5221
        %v5626 = vpop.f32.mrb[0].mxu0
        %v5627 = vadd.f32 %v5310, %v5626
        %v5628 = vpop.f32.mrb[0].mxu0
        %v5629 = vpop.f32.mrb[0].mxu0
        %v5630 = vadd.f32 %v5310, %v5629
        %v5631 = vpop.f32.mrb[0].mxu0
        %5632 = vmatprep.mubr.bf16.mxu0 %v5226
        %5633 = vmatmul.mubr.bf16.gmra.mrb[0].mxu0 %v5225
        %v5634 = vpop.f32.mrb[0].mxu0
        %v5635 = vadd.f32 %v5310, %v5634
        %v5636 = vpop.f32.mrb[0].mxu0
        %v5637 = vpop.f32.mrb[0].mxu0
        %v5638 = vadd.f32 %v5310, %v5637
        %v5639 = vpop.f32.mrb[0].mxu0
        %5640 = vmatprep.mubr.bf16.mxu0 %v5230
        %5641 = vmatmul.mubr.bf16.gmra.mrb[0].mxu0 %v5229
        %v5642 = vpop.f32.mrb[0].mxu0
        %v5643 = vadd.f32 %v5310, %v5642
        %v5644 = vpop.f32.mrb[0].mxu0
        %v5645 = vpop.f32.mrb[0].mxu0
        %v5646 = vadd.f32 %v5310, %v5645
        %v5647 = vpop.f32.mrb[0].mxu0
        %5648 = vmatprep.mubr.bf16.mxu0 %v5234
        %5649 = vmatmul.mubr.bf16.gmra.mrb[0].mxu0 %v5233
        %v5650 = vpop.f32.mrb[0].mxu0
        %v5651 = vadd.f32 %v5310, %v5650
        %v5652 = vpop.f32.mrb[0].mxu0
        %v5653 = vpop.f32.mrb[0].mxu0
        %v5654 = vadd.f32 %v5310, %v5653
        %v5655 = vpop.f32.mrb[0].mxu0
        %5656 = vmatprep.mubr.bf16.mxu0 %v5238
        %5657 = vmatmul.mubr.bf16.gmra.mrb[0].mxu0 %v5237
        %v5658 = vpop.f32.mrb[0].mxu0
        %v5659 = vadd.f32 %v5310, %v5658
        %v5660 = vpop.f32.mrb[0].mxu0
        %v5661 = vpop.f32.mrb[0].mxu0
        %v5662 = vadd.f32 %v5310, %v5661
        %v5663 = vpop.f32.mrb[0].mxu0
        %5664 = vdwg.mxu0
        %5665 = vmatprep.subr.bf16.mxu0 0
        %5666 = vmatpush1.bf16.msra.mxu0 %v5456
        %5667 = vmatprep.subr.bf16.mxu0 0
        %5668 = vmatpush1.bf16.msra.mxu0 %v5457
        %5669 = vmatprep.subr.bf16.mxu0 0
        %5670 = vmatpush1.bf16.msra.mxu0 %v5458
        %5671 = vmatprep.subr.bf16.mxu0 0
        %5672 = vmatpush1.bf16.msra.mxu0 %v5459
        %5673 = vmatprep.subr.bf16.mxu0 0
        %5674 = vmatpush1.bf16.msra.mxu0 %v5460
        %5675 = vmatprep.subr.bf16.mxu0 0
        %5676 = vmatpush1.bf16.msra.mxu0 %v5461
        %5677 = vmatprep.subr.bf16.mxu0 0
        %5678 = vmatpush1.bf16.msra.mxu0 %v5462
        %5679 = vmatprep.subr.bf16.mxu0 0
        %5680 = vmatpush1.bf16.msra.mxu0 %v5463
        %5681 = vmatprep.subr.bf16.mxu0 0
        %5682 = vmatpush1.bf16.msra.mxu0 %v5464
        %5683 = vmatprep.subr.bf16.mxu0 0
        %5684 = vmatpush1.bf16.msra.mxu0 %v5465
        %5685 = vmatprep.subr.bf16.mxu0 0
        %5686 = vmatpush1.bf16.msra.mxu0 %v5466
        %5687 = vmatprep.subr.bf16.mxu0 0
        %5688 = vmatpush1.bf16.msra.mxu0 %v5467
        %5689 = vmatprep.subr.bf16.mxu0 0
        %5690 = vmatpush1.bf16.msra.mxu0 %v5468
        %5691 = vmatprep.subr.bf16.mxu0 0
        %5692 = vmatpush1.bf16.msra.mxu0 %v5469
        %5693 = vmatprep.subr.bf16.mxu0 0
        %5694 = vmatpush1.bf16.msra.mxu0 %v5470
        %5695 = vmatprep.subr.bf16.mxu0 0
        %5696 = vmatpush1.bf16.msra.mxu0 %v5471
        %5697 = vmatprep.mubr.bf16.mxu0 %v5180
        %5698 = vmatmul.mubr.bf16.gmra.mrb[0].mxu0 %v5179
        %v5699 = vpop.f32.mrb[0].mxu0
        %v5700 = vadd.f32 %v5539, %v5699
        %v5701 = vpop.f32.mrb[0].mxu0
        %v5702 = vpop.f32.mrb[0].mxu0
        %v5703 = vadd.f32 %v5542, %v5702
        %v5704 = vpop.f32.mrb[0].mxu0
        %5705 = vmatprep.mubr.bf16.mxu0 %v5184
        %5706 = vmatmul.mubr.bf16.gmra.mrb[0].mxu0 %v5183
        %v5707 = vpop.f32.mrb[0].mxu0
        %v5708 = vadd.f32 %v5547, %v5707
        %v5709 = vpop.f32.mrb[0].mxu0
        %v5710 = vpop.f32.mrb[0].mxu0
        %v5711 = vadd.f32 %v5550, %v5710
        %v5712 = vpop.f32.mrb[0].mxu0
        %5713 = vmatprep.mubr.bf16.mxu0 %v5188
        %5714 = vmatmul.mubr.bf16.gmra.mrb[0].mxu0 %v5187
        %v5715 = vpop.f32.mrb[0].mxu0
        %v5716 = vadd.f32 %v5555, %v5715
        %v5717 = vpop.f32.mrb[0].mxu0
        %v5718 = vpop.f32.mrb[0].mxu0
        %v5719 = vadd.f32 %v5558, %v5718
        %v5720 = vpop.f32.mrb[0].mxu0
        %5721 = vmatprep.mubr.bf16.mxu0 %v5192
        %5722 = vmatmul.mubr.bf16.gmra.mrb[0].mxu0 %v5191
        %v5723 = vpop.f32.mrb[0].mxu0
        %v5724 = vadd.f32 %v5563, %v5723
        %v5725 = vpop.f32.mrb[0].mxu0
        %v5726 = vpop.f32.mrb[0].mxu0
        %v5727 = vadd.f32 %v5566, %v5726
        %v5728 = vpop.f32.mrb[0].mxu0
        %5729 = vmatprep.mubr.bf16.mxu0 %v5196
        %5730 = vmatmul.mubr.bf16.gmra.mrb[0].mxu0 %v5195
        %v5731 = vpop.f32.mrb[0].mxu0
        %v5732 = vadd.f32 %v5571, %v5731
        %v5733 = vpop.f32.mrb[0].mxu0
        %v5734 = vpop.f32.mrb[0].mxu0
        %v5735 = vadd.f32 %v5574, %v5734
        %v5736 = vpop.f32.mrb[0].mxu0
        %5737 = vmatprep.mubr.bf16.mxu0 %v5200
        %5738 = vmatmul.mubr.bf16.gmra.mrb[0].mxu0 %v5199
        %v5739 = vpop.f32.mrb[0].mxu0
        %v5740 = vadd.f32 %v5579, %v5739
        %v5741 = vpop.f32.mrb[0].mxu0
        %v5742 = vpop.f32.mrb[0].mxu0
        %v5743 = vadd.f32 %v5582, %v5742
        %v5744 = vpop.f32.mrb[0].mxu0
        %5745 = vmatprep.mubr.bf16.mxu0 %v5204
        %5746 = vmatmul.mubr.bf16.gmra.mrb[0].mxu0 %v5203
        %v5747 = vpop.f32.mrb[0].mxu0
        %v5748 = vadd.f32 %v5587, %v5747
        %v5749 = vpop.f32.mrb[0].mxu0
        %v5750 = vpop.f32.mrb[0].mxu0
        %v5751 = vadd.f32 %v5590, %v5750
        %v5752 = vpop.f32.mrb[0].mxu0
        %5753 = vmatprep.mubr.bf16.mxu0 %v5208
        %5754 = vmatmul.mubr.bf16.gmra.mrb[0].mxu0 %v5207
        %v5755 = vpop.f32.mrb[0].mxu0
        %v5756 = vadd.f32 %v5595, %v5755
        %v5757 = vpop.f32.mrb[0].mxu0
        %v5758 = vpop.f32.mrb[0].mxu0
        %v5759 = vadd.f32 %v5598, %v5758
        %v5760 = vpop.f32.mrb[0].mxu0
        %5761 = vmatprep.mubr.bf16.mxu0 %v5212
        %5762 = vmatmul.mubr.bf16.gmra.mrb[0].mxu0 %v5211
        %v5763 = vpop.f32.mrb[0].mxu0
        %v5764 = vadd.f32 %v5603, %v5763
        %v5765 = vpop.f32.mrb[0].mxu0
        %v5766 = vpop.f32.mrb[0].mxu0
        %v5767 = vadd.f32 %v5606, %v5766
        %v5768 = vpop.f32.mrb[0].mxu0
        %5769 = vmatprep.mubr.bf16.mxu0 %v5216
        %5770 = vmatmul.mubr.bf16.gmra.mrb[0].mxu0 %v5215
        %v5771 = vpop.f32.mrb[0].mxu0
        %v5772 = vadd.f32 %v5611, %v5771
        %v5773 = vpop.f32.mrb[0].mxu0
        %v5774 = vpop.f32.mrb[0].mxu0
        %v5775 = vadd.f32 %v5614, %v5774
        %v5776 = vpop.f32.mrb[0].mxu0
        %5777 = vmatprep.mubr.bf16.mxu0 %v5220
        %5778 = vmatmul.mubr.bf16.gmra.mrb[0].mxu0 %v5219
        %v5779 = vpop.f32.mrb[0].mxu0
        %v5780 = vadd.f32 %v5619, %v5779
        %v5781 = vpop.f32.mrb[0].mxu0
        %v5782 = vpop.f32.mrb[0].mxu0
        %v5783 = vadd.f32 %v5622, %v5782
        %v5784 = vpop.f32.mrb[0].mxu0
        %5785 = vmatprep.mubr.bf16.mxu0 %v5224
        %5786 = vmatmul.mubr.bf16.gmra.mrb[0].mxu0 %v5223
        %v5787 = vpop.f32.mrb[0].mxu0
        %v5788 = vadd.f32 %v5627, %v5787
        %v5789 = vpop.f32.mrb[0].mxu0
        %v5790 = vpop.f32.mrb[0].mxu0
        %v5791 = vadd.f32 %v5630, %v5790
        %v5792 = vpop.f32.mrb[0].mxu0
        %5793 = vmatprep.mubr.bf16.mxu0 %v5228
        %5794 = vmatmul.mubr.bf16.gmra.mrb[0].mxu0 %v5227
        %v5795 = vpop.f32.mrb[0].mxu0
        %v5796 = vadd.f32 %v5635, %v5795
        %v5797 = vpop.f32.mrb[0].mxu0
        %v5798 = vpop.f32.mrb[0].mxu0
        %v5799 = vadd.f32 %v5638, %v5798
        %v5800 = vpop.f32.mrb[0].mxu0
        %5801 = vmatprep.mubr.bf16.mxu0 %v5232
        %5802 = vmatmul.mubr.bf16.gmra.mrb[0].mxu0 %v5231
        %v5803 = vpop.f32.mrb[0].mxu0
        %v5804 = vadd.f32 %v5643, %v5803
        %v5805 = vpop.f32.mrb[0].mxu0
        %v5806 = vpop.f32.mrb[0].mxu0
        %v5807 = vadd.f32 %v5646, %v5806
        %v5808 = vpop.f32.mrb[0].mxu0
        %5809 = vmatprep.mubr.bf16.mxu0 %v5236
        %5810 = vmatmul.mubr.bf16.gmra.mrb[0].mxu0 %v5235
        %v5811 = vpop.f32.mrb[0].mxu0
        %v5812 = vadd.f32 %v5651, %v5811
        %v5813 = vpop.f32.mrb[0].mxu0
        %v5814 = vpop.f32.mrb[0].mxu0
        %v5815 = vadd.f32 %v5654, %v5814
        %v5816 = vpop.f32.mrb[0].mxu0
        %5817 = vmatprep.mubr.bf16.mxu0 %v5240
        %5818 = vmatmul.mubr.bf16.gmra.mrb[0].mxu0 %v5239
        %v5819 = vpop.f32.mrb[0].mxu0
        %v5820 = vadd.f32 %v5659, %v5819
        %v5821 = vpop.f32.mrb[0].mxu0
        %v5822 = vpop.f32.mrb[0].mxu0
        %v5823 = vadd.f32 %v5662, %v5822
        %v5824 = vpop.f32.mrb[0].mxu0
        %5825 = vdwg.mxu0
        %v5826 = vld [vmem:[%s15] sm:$0x1]
        %v5828 = vlaneseq
        %v5829 = vshrl.u32 %v5828, 7
        %v5830 = vsub.s32 0, %v5829
        %v5831 = vrot.slane %v5826, %v5830
        %v5833 = vmul.f32 %v5831, %v5700
        %v5834 = vmul.f32 %v5831, %v5703
        %v5835 = vmul.f32 %v5831, %v5708
        %v5836 = vmul.f32 %v5831, %v5711
        %v5837 = vmul.f32 %v5831, %v5716
        %v5838 = vmul.f32 %v5831, %v5719
        %v5839 = vmul.f32 %v5831, %v5724
        %v5840 = vmul.f32 %v5831, %v5727
        %v5841 = vmul.f32 %v5831, %v5732
        %v5842 = vmul.f32 %v5831, %v5735
        %v5843 = vmul.f32 %v5831, %v5740
        %v5844 = vmul.f32 %v5831, %v5743
        %v5845 = vmul.f32 %v5831, %v5748
        %v5846 = vmul.f32 %v5831, %v5751
        %v5847 = vmul.f32 %v5831, %v5756
        %v5848 = vmul.f32 %v5831, %v5759
        %v5849 = vmul.f32 %v5831, %v5764
        %v5850 = vmul.f32 %v5831, %v5767
        %v5851 = vmul.f32 %v5831, %v5772
        %v5852 = vmul.f32 %v5831, %v5775
        %v5853 = vmul.f32 %v5831, %v5780
        %v5854 = vmul.f32 %v5831, %v5783
        %v5855 = vmul.f32 %v5831, %v5788
        %v5856 = vmul.f32 %v5831, %v5791
        %v5857 = vmul.f32 %v5831, %v5796
        %v5858 = vmul.f32 %v5831, %v5799
        %v5859 = vmul.f32 %v5831, %v5804
        %v5860 = vmul.f32 %v5831, %v5807
        %v5861 = vmul.f32 %v5831, %v5812
        %v5862 = vmul.f32 %v5831, %v5815
        %v5863 = vmul.f32 %v5831, %v5820
        %v5864 = vmul.f32 %v5831, %v5823
        %v5865 = vadd.f32 %v2947, %v5833
        %v5866 = vadd.f32 %v2948, %v5834
        %v5867 = vadd.f32 %v2949, %v5835
        %v5868 = vadd.f32 %v2950, %v5836
        %v5869 = vadd.f32 %v2951, %v5837
        %v5870 = vadd.f32 %v2952, %v5838
        %v5871 = vadd.f32 %v2953, %v5839
        %v5872 = vadd.f32 %v2954, %v5840
        %v5873 = vadd.f32 %v2955, %v5841
        %v5874 = vadd.f32 %v2956, %v5842
        %v5875 = vadd.f32 %v2957, %v5843
        %v5876 = vadd.f32 %v2958, %v5844
        %v5877 = vadd.f32 %v2959, %v5845
        %v5878 = vadd.f32 %v2960, %v5846
        %v5879 = vadd.f32 %v2961, %v5847
        %v5880 = vadd.f32 %v2962, %v5848
        %v5881 = vadd.f32 %v2963, %v5849
        %v5882 = vadd.f32 %v2964, %v5850
        %v5883 = vadd.f32 %v2965, %v5851
        %v5884 = vadd.f32 %v2966, %v5852
        %v5885 = vadd.f32 %v2967, %v5853
        %v5886 = vadd.f32 %v2968, %v5854
        %v5887 = vadd.f32 %v2969, %v5855
        %v5888 = vadd.f32 %v2970, %v5856
        %v5889 = vadd.f32 %v2971, %v5857
        %v5890 = vadd.f32 %v2972, %v5858
        %v5891 = vadd.f32 %v2973, %v5859
        %v5892 = vadd.f32 %v2974, %v5860
        %v5893 = vadd.f32 %v2975, %v5861
        %v5894 = vadd.f32 %v2976, %v5862
        %v5895 = vadd.f32 %v2977, %v5863
        %v5896 = vadd.f32 %v2978, %v5864
        %v5897 = vpack.c.bf16 %v5866, %v5865
        %v5898 = vpack.c.bf16 %v5868, %v5867
        %v5899 = vpack.c.bf16 %v5870, %v5869
        %v5900 = vpack.c.bf16 %v5872, %v5871
        %v5901 = vpack.c.bf16 %v5874, %v5873
        %v5902 = vpack.c.bf16 %v5876, %v5875
        %v5903 = vpack.c.bf16 %v5878, %v5877
        %v5904 = vpack.c.bf16 %v5880, %v5879
        %v5905 = vpack.c.bf16 %v5882, %v5881
        %v5906 = vpack.c.bf16 %v5884, %v5883
        %v5907 = vpack.c.bf16 %v5886, %v5885
        %v5908 = vpack.c.bf16 %v5888, %v5887
        %v5909 = vpack.c.bf16 %v5890, %v5889
        %v5910 = vpack.c.bf16 %v5892, %v5891
        %v5911 = vpack.c.bf16 %v5894, %v5893
        %v5912 = vpack.c.bf16 %v5896, %v5895
        %v5929 = vunpack.c.l.b16 %v5897
        %v5930 = vunpack.c.h.b16 %v5897
        %v5931 = vunpack.c.l.b16 %v5898
        %v5932 = vunpack.c.h.b16 %v5898
        %v5933 = vunpack.c.l.b16 %v5899
        %v5934 = vunpack.c.h.b16 %v5899
        %v5935 = vunpack.c.l.b16 %v5900
        %v5936 = vunpack.c.h.b16 %v5900
        %v5937 = vunpack.c.l.b16 %v5901
        %v5938 = vunpack.c.h.b16 %v5901
        %v5939 = vunpack.c.l.b16 %v5902
        %v5940 = vunpack.c.h.b16 %v5902
        %v5941 = vunpack.c.l.b16 %v5903
        %v5942 = vunpack.c.h.b16 %v5903
        %v5943 = vunpack.c.l.b16 %v5904
        %v5944 = vunpack.c.h.b16 %v5904
        %v5945 = vunpack.c.l.b16 %v5905
        %v5946 = vunpack.c.h.b16 %v5905
        %v5947 = vunpack.c.l.b16 %v5906
        %v5948 = vunpack.c.h.b16 %v5906
        %v5949 = vunpack.c.l.b16 %v5907
        %v5950 = vunpack.c.h.b16 %v5907
        %v5951 = vunpack.c.l.b16 %v5908
        %v5952 = vunpack.c.h.b16 %v5908
        %v5953 = vunpack.c.l.b16 %v5909
        %v5954 = vunpack.c.h.b16 %v5909
        %v5955 = vunpack.c.l.b16 %v5910
        %v5956 = vunpack.c.h.b16 %v5910
        %v5957 = vunpack.c.l.b16 %v5911
        %v5958 = vunpack.c.h.b16 %v5911
        %v5959 = vunpack.c.l.b16 %v5912
        %v5960 = vunpack.c.h.b16 %v5912
        %v5961 = vpack.c.b16 %v5929, %v5929
        %v5962 = vpack.c.b16 %v5930, %v5930
        %v5963 = vpack.c.b16 %v5931, %v5931
        %v5964 = vpack.c.b16 %v5932, %v5932
        %v5965 = vpack.c.b16 %v5933, %v5933
        %v5966 = vpack.c.b16 %v5934, %v5934
        %v5967 = vpack.c.b16 %v5935, %v5935
        %v5968 = vpack.c.b16 %v5936, %v5936
        %v5969 = vpack.c.b16 %v5937, %v5937
        %v5970 = vpack.c.b16 %v5938, %v5938
        %v5971 = vpack.c.b16 %v5939, %v5939
        %v5972 = vpack.c.b16 %v5940, %v5940
        %v5973 = vpack.c.b16 %v5941, %v5941
        %v5974 = vpack.c.b16 %v5942, %v5942
        %v5975 = vpack.c.b16 %v5943, %v5943
        %v5976 = vpack.c.b16 %v5944, %v5944
        %v5977 = vpack.c.b16 %v5945, %v5945
        %v5978 = vpack.c.b16 %v5946, %v5946
        %v5979 = vpack.c.b16 %v5947, %v5947
        %v5980 = vpack.c.b16 %v5948, %v5948
        %v5981 = vpack.c.b16 %v5949, %v5949
        %v5982 = vpack.c.b16 %v5950, %v5950
        %v5983 = vpack.c.b16 %v5951, %v5951
        %v5984 = vpack.c.b16 %v5952, %v5952
        %v5985 = vpack.c.b16 %v5953, %v5953
        %v5986 = vpack.c.b16 %v5954, %v5954
        %v5987 = vpack.c.b16 %v5955, %v5955
        %v5988 = vpack.c.b16 %v5956, %v5956
        %v5989 = vpack.c.b16 %v5957, %v5957
        %v5990 = vpack.c.b16 %v5958, %v5958
        %v5991 = vpack.c.b16 %v5959, %v5959
        %v5992 = vpack.c.b16 %v5960, %v5960
        %6025 = vst [vmem:[%s666] sm:$0xf] %v5961
        %6026 = vst [vmem:[%s666 + $0x4] sm:$0xf] %v5962
        %6027 = vst [vmem:[%s666 + $0x8] sm:$0xf] %v5963
        %6028 = vst [vmem:[%s666 + $0xc] sm:$0xf] %v5964
        %6029 = vst [vmem:[%s666 + $0x10] sm:$0xf] %v5965
        %6030 = vst [vmem:[%s666 + $0x14] sm:$0xf] %v5966
        %6031 = vst [vmem:[%s666 + $0x18] sm:$0xf] %v5967
        %6032 = vst [vmem:[%s666 + $0x1c] sm:$0xf] %v5968
        %6033 = vst [vmem:[%s666 + $0x20] sm:$0xf] %v5969
        %6034 = vst [vmem:[%s666 + $0x24] sm:$0xf] %v5970
        %6035 = vst [vmem:[%s666 + $0x28] sm:$0xf] %v5971
        %6036 = vst [vmem:[%s666 + $0x2c] sm:$0xf] %v5972
        %6037 = vst [vmem:[%s666 + $0x30] sm:$0xf] %v5973
        %6038 = vst [vmem:[%s666 + $0x34] sm:$0xf] %v5974
        %6039 = vst [vmem:[%s666 + $0x38] sm:$0xf] %v5975
        %6040 = vst [vmem:[%s666 + $0x3c] sm:$0xf] %v5976
        %6041 = vst [vmem:[%s666 + $0x40] sm:$0xf] %v5977
        %6042 = vst [vmem:[%s666 + $0x44] sm:$0xf] %v5978
        %6043 = vst [vmem:[%s666 + $0x48] sm:$0xf] %v5979
        %6044 = vst [vmem:[%s666 + $0x4c] sm:$0xf] %v5980
        %6045 = vst [vmem:[%s666 + $0x50] sm:$0xf] %v5981
        %6046 = vst [vmem:[%s666 + $0x54] sm:$0xf] %v5982
        %6047 = vst [vmem:[%s666 + $0x58] sm:$0xf] %v5983
        %6048 = vst [vmem:[%s666 + $0x5c] sm:$0xf] %v5984
        %6049 = vst [vmem:[%s666 + $0x60] sm:$0xf] %v5985
        %6050 = vst [vmem:[%s666 + $0x64] sm:$0xf] %v5986
        %6051 = vst [vmem:[%s666 + $0x68] sm:$0xf] %v5987
        %6052 = vst [vmem:[%s666 + $0x6c] sm:$0xf] %v5988
        %6053 = vst [vmem:[%s666 + $0x70] sm:$0xf] %v5989
        %6054 = vst [vmem:[%s666 + $0x74] sm:$0xf] %v5990
        %6055 = vst [vmem:[%s666 + $0x78] sm:$0xf] %v5991
        %6056 = vst [vmem:[%s666 + $0x7c] sm:$0xf] %v5992
        %s6057 = sand.u32 %s433, 1
        %s6058 = scalar_lea.sflag [#allocation4], %s6057
        %s6059 = sand.u32 %s433, 1
        %s6060 = smul.addr %s6059, 128
        %s6061 = scalar_lea.vmem [#allocation11], %s6060
        // Predicated region
        $region113: #{tpu_custom_call.1} parent=91 // pred_check
          %p6062 = pneg %p443
        $region114: #{tpu_custom_call.1} parent=91 // pred_check_branch
          %6064 = sbr.rel (%p6062) target = $region116
        $region115: #{tpu_custom_call.1} parent=91 // pred_region
          %s6065 = smul.u32 4, %s37
          %s6067 = ssub.s32 2048, 2048
          %6068 = vsyncadd %s6058, %s6067
          %s6069 = smul.addr %s6065, 8
          %s6070 = smul.addr %s6069, 64
          %s6071 = scalar_lea.hbm %s18, %s6070
          %s6072 = sshll.u32 %s6061, 4
          %s6073 = int_to_ptr.vmem [resolvable:$true] %s6072
          %6078 = dma.vmem_to_hbm [thread:$0]  %s6073, 2048, %s6071, %s6058, 64, 64, 4
        $region116: #{tpu_custom_call.1} parent=91 // pred_fallthru
          _
      $region92: #{tpu_custom_call.1} parent=5 // pred_fallthru
        _
      %p6079 = scmp.le.s32.totalorder 2, %s32
      // Predicated region
      $region117: #{tpu_custom_call.1} parent=5 // pred_check
        %p6080 = pneg %p6079
      $region118: #{tpu_custom_call.1} parent=5 // pred_check_branch
        %6082 = sbr.rel (%p6080) target = $region120
      $region119: #{tpu_custom_call.1} parent=5 // pred_region
        %s6083 = ssub.s32 %s32, 2
        // Predicated region
        $region121: #{tpu_custom_call.1} parent=119 // pred_check
          %p6084 = pneg %p449
        $region122: #{tpu_custom_call.1} parent=119 // pred_check_branch
          %6086 = sbr.rel (%p6084) target = $region124
        $region123: #{tpu_custom_call.1} parent=119 // pred_region
          %s6087 = sand.u32 %s434, 1
          %s6088 = scalar_lea.sflag [#allocation4], %s6087
          %s6089 = sand.u32 %s434, 1
          %s6090 = smul.addr %s6089, 128
          %s6091 = scalar_lea.vmem [#allocation11], %s6090
          %6092 = dma.done %s6088, 2048
        $region124: #{tpu_custom_call.1} parent=119 // pred_fallthru
          _
      $region120: #{tpu_custom_call.1} parent=5 // pred_fallthru
        _
    $region6: #{tpu_custom_call.1} parent=1 // loop_footer
      %s36 = sadd.s32 1, %s32
    $region7: #{tpu_custom_call.1} parent=1 // loop_footer_branch
      %31 = sbr.rel target = $region3
    $region8: #{tpu_custom_call.1} parent=1 // loop_exit
      _
    %6093 = vsyncpa [#allocation3], 1
    %s6094 = scalar_lea.sflag [#allocation3], 1
    %6095 = vsyncpa %s6094, 1
    %6096 = vsyncpa [#allocation6], 1
    %6097 = vsyncpa [#allocation9], 1
    %6098 = vsyncpa [#allocation4], 1
    %s6099 = scalar_lea.sflag [#allocation4], 1
    %6100 = vsyncpa %s6099, 1

</llo_original>
